<compile_context>
chip_gen: v6e
topology: v6e:2x2x1
jax: 0.10.0
libtpu: 0.0.40
codegen_flags: <defaults>
</compile_context>

<pallas_src>
import jax
import jax.numpy as jnp
from jax.experimental import pallas as pl
from jax.experimental.pallas import tpu as pltpu


def basic_block_kernel(xa_ref, xb_ref, w1_ref, w2_ref, wd_ref,
                       sh1_ref, sh2d_ref, o_ref, h1pad_ref):
    i = pl.program_id(1)
    n_strips = pl.num_programs(1)
    TH = o_ref.shape[1]            # strip height
    W = o_ref.shape[2]
    Cout = o_ref.shape[3]          # lane-padded output channels
    Wp = W + 2

    # (TH+4)-row bf16 input window (2-row halo each side so conv2's conv1
    # inputs are available without cross-strip communication).  Stays bf16.
    xv = jnp.concatenate([xa_ref[0], xb_ref[0]], axis=0)

    def conv3x3(src, rows, w_ref):
        """3x3 'valid' conv over `rows` output rows of src (rows+2, W+2, C):
        3 kh-grouped matmuls with K = 3*C (im2col over kw only), f32 accum."""
        c = src.shape[-1]
        acc = None
        for kh in range(3):                                   # static unroll
            patch = jnp.concatenate(
                [src[kh:kh + rows, kw:kw + W, :] for kw in range(3)],
                axis=-1).reshape(rows * W, 3 * c)
            d = jnp.dot(patch, w_ref[kh], preferred_element_type=jnp.float32)
            acc = d if acc is None else acc + d
        return acc                                            # f32 (rows*W, Cout)

    # ---- conv1 + BN1 + ReLU over TH+2 rows (incl. 1-row halo each side) ----
    h1 = jnp.maximum(conv3x3(xv, TH + 2, w1_ref) + sh1_ref[...], 0.0)

    # Stage h1 into a W-zero-padded f32 scratch.  Every element is rewritten on
    # every grid step, so this is safe with both grid axes marked "parallel".
    h1pad_ref[:, 0:1, :] = jnp.zeros((TH + 2, 1, Cout), jnp.float32)
    h1pad_ref[:, Wp - 1:Wp, :] = jnp.zeros((TH + 2, 1, Cout), jnp.float32)
    h1pad_ref[:, 1:W + 1, :] = h1.reshape(TH + 2, W, Cout)

    # At the image top/bottom the conv2 halo rows must be zero padding, not
    # conv1 evaluated outside the image.  (Kept AFTER the interior store.)
    @pl.when(i == 0)
    def _():
        h1pad_ref[0:1] = jnp.zeros((1, Wp, Cout), jnp.float32)

    @pl.when(i == n_strips - 1)
    def _():
        h1pad_ref[TH + 1:TH + 2] = jnp.zeros((1, Wp, Cout), jnp.float32)

    # Single 1x-volume cast; conv2's im2col stays bf16 from here on.
    hv = h1pad_ref[...].astype(jnp.bfloat16)

    # ---- conv2 (3x3) over the TH output rows ----
    out2 = conv3x3(hv, TH, w2_ref)

    # ---- downsample path: 1x1 conv (no bias) on the strip centre ----
    xc = xv[2:TH + 2, 1:W + 1, :].reshape(TH * W, xv.shape[-1])
    idn = jnp.dot(xc, wd_ref[...], preferred_element_type=jnp.float32)

    # ---- residual add + folded BN shifts + final ReLU (f32, lane-dense) ----
    o_ref[0] = jnp.maximum(out2 + idn + sh2d_ref[...], 0.0).reshape(TH, W, Cout)


def _round_up(v, m):
    return (v + m - 1) // m * m


def _pick_strip_height(H, W, cin_p, cout_p, budget_bytes):
    """Largest multiple-of-4 divisor of H whose working set fits budget_bytes."""
    cands = [th for th in range(4, H + 1, 4) if H % th == 0]
    best = cands[0]
    c = max(cin_p, cout_p)
    for th in cands:
        win = 2 * (th + 4) * (W + 2) * cin_p * 2           # dbl-buffered bf16 input window
        outb = 2 * th * W * cout_p * 4                     # dbl-buffered f32 output
        scr = (th + 2) * (W + 2) * cout_p * 4              # f32 h1 scratch
        wgt = 2 * (9 * cin_p + 9 * cout_p + cin_p + 2) * cout_p * 2
        tmp = ((th + 2) * W * 3 * c * 2                    # one kh-group im2col patch (bf16)
               + (th + 2) * W * cout_p * 4                 # conv1 f32 accumulator
               + 2 * th * W * cout_p * 4                   # conv2 acc + identity (f32)
               + (th + 2) * (W + 2) * cout_p * 2           # bf16 copy of staged h1
               + (th + 4) * (W + 2) * cin_p * 2)           # bf16 window value
        if win + outb + scr + wgt + int(1.25 * tmp) <= budget_bytes:
            best = th
    return best


@jax.jit
def basic_block_pallas(x_nchw, params):
    eps = 1e-5
    x = jnp.transpose(x_nchw, (0, 2, 3, 1)).astype(jnp.float32)   # NCHW -> NHWC
    N, H, W, Cin = x.shape
    Cout = params['w1'].shape[-1]

    LANE = 128
    Cin_p, Cout_p = _round_up(Cin, LANE), _round_up(Cout, LANE)

    assert H % 4 == 0, "H must be a multiple of 4"
    assert W % 16 == 0, "W must be a multiple of 16 (bf16 sublane tile)"

    VMEM_BUDGET = 40 * 1024 * 1024     # conservative; safe on v7x / v6e / v5e
    TH = _pick_strip_height(H, W, Cin_p, Cout_p, VMEM_BUDGET)
    n_strips = H // TH
    thb = TH // 4

    # Fold conv bias + inference BN into per-output-channel scale and shift.
    s1 = params['g1'] / jnp.sqrt(params['v1'] + eps)
    sh1 = params['be1'] + (params['b1'] - params['m1']) * s1
    s2 = params['g2'] / jnp.sqrt(params['v2'] + eps)
    sh2 = params['be2'] + (params['b2'] - params['m2']) * s2
    sd = params['gd'] / jnp.sqrt(params['vd'] + eps)
    shd = params['bed'] - params['md'] * sd
    sh2d = sh2 + shd                   # single folded epilogue shift

    def prep_w3(w, scale, ci, co):     # (3,3,ci,co) -> (3, 3*ci_p, co_p) bf16
        w = w * scale
        ci_p, co_p = _round_up(ci, LANE), _round_up(co, LANE)
        w = jnp.pad(w, ((0, 0), (0, 0), (0, ci_p - ci), (0, co_p - co)))
        return w.reshape(3, 3 * ci_p, co_p).astype(jnp.bfloat16)

    w1f = prep_w3(params['w1'], s1, Cin, Cout)
    w2f = prep_w3(params['w2'], s2, Cout, Cout)
    wdf = jnp.pad(params['wd'] * sd,
                  ((0, Cin_p - Cin), (0, Cout_p - Cout))).astype(jnp.bfloat16)

    prep_sh = lambda v: jnp.pad(v, (0, Cout_p - Cout)).reshape(1, Cout_p).astype(jnp.float32)
    sh1p, sh2dp = prep_sh(sh1), prep_sh(sh2d)

    # One pad covers channels -> Cin_p, the 2-row H halo and the 1-col W halo.
    # TODO(synk): when chaining blocks, keep activations NHWC / channel-padded /
    # bf16 between kernels to skip this extra HBM pass and the output epilogue.
    xpad = jnp.pad(x, ((0, 0), (2, 2), (1, 1), (0, Cin_p - Cin))).astype(jnp.bfloat16)

    vec_spec = lambda: pl.BlockSpec((1, Cout_p), lambda n, i: (0, 0))

    out = pl.pallas_call(
        basic_block_kernel,
        out_shape=jax.ShapeDtypeStruct((N, H, W, Cout_p), jnp.float32),
        grid_spec=pltpu.PrefetchScalarGridSpec(
            num_scalar_prefetch=0,
            grid=(N, n_strips),
            in_specs=[
                # first TH rows of this strip's (TH+4)-row padded-x window
                pl.BlockSpec((1, TH, W + 2, Cin_p), lambda n, i: (n, i, 0, 0)),
                # last 4 rows (bottom halo) of the window
                pl.BlockSpec((1, 4, W + 2, Cin_p),
                             lambda n, i: (n, (i + 1) * thb, 0, 0)),
                pl.BlockSpec((3, 3 * Cin_p, Cout_p), lambda n, i: (0, 0, 0)),
                pl.BlockSpec((3, 3 * Cout_p, Cout_p), lambda n, i: (0, 0, 0)),
                pl.BlockSpec((Cin_p, Cout_p), lambda n, i: (0, 0)),
                vec_spec(), vec_spec(),
            ],
            out_specs=pl.BlockSpec((1, TH, W, Cout_p), lambda n, i: (n, i, 0, 0)),
            scratch_shapes=[pltpu.VMEM((TH + 2, W + 2, Cout_p), jnp.float32)],
        ),
        compiler_params=pltpu.CompilerParams(
            dimension_semantics=("parallel", "parallel"),
            vmem_limit_bytes=64 * 1024 * 1024),
    )(xpad, xpad, w1f, w2f, wdf, sh1p, sh2dp)

    out = out[..., :Cout]                      # drop lane padding
    return jnp.transpose(out, (0, 3, 1, 2))    # NHWC -> NCHW


def basic_block_reference(x_nchw, params, eps=1e-5):
    """Pure-JAX f32 reference (inference-mode BN), NHWC internally."""
    x = jnp.transpose(x_nchw, (0, 2, 3, 1)).astype(jnp.float32)

    def conv(xx, w):
        return jax.lax.conv_general_dilated(
            xx, w, window_strides=(1, 1), padding='SAME',
            dimension_numbers=('NHWC', 'HWIO', 'NHWC'))

    def bn(xx, g, be, m, v):
        return (xx - m) / jnp.sqrt(v + eps) * g + be

    out = conv(x, params['w1']) + params['b1']
    out = jax.nn.relu(bn(out, params['g1'], params['be1'], params['m1'], params['v1']))
    out = conv(out, params['w2']) + params['b2']
    out = bn(out, params['g2'], params['be2'], params['m2'], params['v2'])
    idn = conv(x, params['wd'][None, None])
    idn = bn(idn, params['gd'], params['bed'], params['md'], params['vd'])
    out = jax.nn.relu(out + idn)
    return jnp.transpose(out, (0, 3, 1, 2))


def make_params(key, cin, cout):
    ks = jax.random.split(key, 18)
    return {
        'w1': 0.2 * jax.random.normal(ks[0], (3, 3, cin, cout), jnp.float32),
        'b1': 0.1 * jax.random.normal(ks[1], (cout,), jnp.float32),
        'g1': 1.0 + 0.1 * jax.random.normal(ks[2], (cout,), jnp.float32),
        'be1': 0.1 * jax.random.normal(ks[3], (cout,), jnp.float32),
        'm1': 0.1 * jax.random.normal(ks[4], (cout,), jnp.float32),
        'v1': jax.random.uniform(ks[5], (cout,), jnp.float32, 0.5, 1.5),
        'w2': 0.2 * jax.random.normal(ks[6], (3, 3, cout, cout), jnp.float32),
        'b2': 0.1 * jax.random.normal(ks[7], (cout,), jnp.float32),
        'g2': 1.0 + 0.1 * jax.random.normal(ks[8], (cout,), jnp.float32),
        'be2': 0.1 * jax.random.normal(ks[9], (cout,), jnp.float32),
        'm2': 0.1 * jax.random.normal(ks[10], (cout,), jnp.float32),
        'v2': jax.random.uniform(ks[11], (cout,), jnp.float32, 0.5, 1.5),
        'wd': 0.2 * jax.random.normal(ks[12], (cin, cout), jnp.float32),
        'gd': 1.0 + 0.1 * jax.random.normal(ks[13], (cout,), jnp.float32),
        'bed': 0.1 * jax.random.normal(ks[14], (cout,), jnp.float32),
        'md': 0.1 * jax.random.normal(ks[15], (cout,), jnp.float32),
        'vd': jax.random.uniform(ks[16], (cout,), jnp.float32, 0.5, 1.5),
    }


if __name__ == "__main__":
    key = jax.random.PRNGKey(0)
    k_x, k_p = jax.random.split(key)

    N, Cin, Cout, H, W = 2, 4, 8, 16, 16
    x = jax.random.normal(k_x, (N, Cin, H, W), jnp.float32)   # NCHW like PyTorch
    params = make_params(k_p, Cin, Cout)

    out = jax.block_until_ready(basic_block_pallas(x, params))
    ref = basic_block_reference(x, params)

    assert out.shape == (N, Cout, H, W), out.shape
    max_err = float(jnp.max(jnp.abs(out - ref)))
    # bf16 matmul operands (f32 accumulate) vs f32 reference -> loose-but-meaningful tol.
    assert max_err < 5e-2, max_err

    print("KERNEL_OK")
</pallas_src>

<mosaic_0001>
module attributes {stable_mosaic.version = 11 : i64} {
  func.func @basic_block_kernel(%arg0: i32, %arg1: i32, %arg2: memref<1x16x18x128xbf16, #tpu.memory_space<vmem>>, %arg3: memref<1x4x18x128xbf16, #tpu.memory_space<vmem>>, %arg4: memref<3x384x128xbf16, #tpu.memory_space<vmem>>, %arg5: memref<3x384x128xbf16, #tpu.memory_space<vmem>>, %arg6: memref<128x128xbf16, #tpu.memory_space<vmem>>, %arg7: memref<1x128xf32, #tpu.memory_space<vmem>>, %arg8: memref<1x128xf32, #tpu.memory_space<vmem>>, %arg9: memref<1x16x16x128xf32, #tpu.memory_space<vmem>>, %arg10: memref<18x18x128xf32, #tpu.memory_space<vmem>>) attributes {dimension_semantics = [#tpu.dimension_semantics<parallel>, #tpu.dimension_semantics<parallel>], iteration_bounds = array<i64: 2, 1>, scalar_prefetch = 0 : i64, scratch_operands = 1 : i64, tpu.core_type = #tpu.core_type<tc>, window_params = [{transform_indices = @transform_0, window_bounds = array<i64: 1, 16, 18, 128>}, {transform_indices = @transform_1, window_bounds = array<i64: 1, 4, 18, 128>}, {pipeline_mode = #tpu.pipeline_mode<synchronous>, transform_indices = @transform_2, window_bounds = array<i64: 3, 384, 128>}, {pipeline_mode = #tpu.pipeline_mode<synchronous>, transform_indices = @transform_3, window_bounds = array<i64: 3, 384, 128>}, {pipeline_mode = #tpu.pipeline_mode<synchronous>, transform_indices = @transform_4, window_bounds = array<i64: 128, 128>}, {pipeline_mode = #tpu.pipeline_mode<synchronous>, transform_indices = @transform_5, window_bounds = array<i64: 1, 128>}, {pipeline_mode = #tpu.pipeline_mode<synchronous>, transform_indices = @transform_6, window_bounds = array<i64: 1, 128>}, {transform_indices = @transform_7, window_bounds = array<i64: 1, 16, 16, 128>}]} {
    %c0 = arith.constant 0 : index
    %c0_0 = arith.constant 0 : index
    %c0_1 = arith.constant 0 : index
    %c0_2 = arith.constant 0 : index
    %0 = vector.load %arg2[%c0, %c0_0, %c0_1, %c0_2] : memref<1x16x18x128xbf16, #tpu.memory_space<vmem>>, vector<1x16x18x128xbf16>
    %1 = vector.shape_cast %0 : vector<1x16x18x128xbf16> to vector<16x18x128xbf16>
    %c0_3 = arith.constant 0 : index
    %c0_4 = arith.constant 0 : index
    %c0_5 = arith.constant 0 : index
    %c0_6 = arith.constant 0 : index
    %2 = vector.load %arg3[%c0_3, %c0_4, %c0_5, %c0_6] : memref<1x4x18x128xbf16, #tpu.memory_space<vmem>>, vector<1x4x18x128xbf16>
    %3 = vector.shape_cast %2 : vector<1x4x18x128xbf16> to vector<4x18x128xbf16>
    %4 = tpu.concatenate %1, %3 in 0 : vector<16x18x128xbf16>, vector<4x18x128xbf16> -> vector<20x18x128xbf16>
    %5 = vector.extract_strided_slice %4 {offsets = [0, 0, 0], sizes = [18, 16, 128], strides = [1, 1, 1]} : vector<20x18x128xbf16> to vector<18x16x128xbf16>
    %6 = vector.extract_strided_slice %4 {offsets = [0, 1, 0], sizes = [18, 16, 128], strides = [1, 1, 1]} : vector<20x18x128xbf16> to vector<18x16x128xbf16>
    %7 = vector.extract_strided_slice %4 {offsets = [0, 2, 0], sizes = [18, 16, 128], strides = [1, 1, 1]} : vector<20x18x128xbf16> to vector<18x16x128xbf16>
    %8 = tpu.concatenate %5, %6, %7 in 2 : vector<18x16x128xbf16>, vector<18x16x128xbf16>, vector<18x16x128xbf16> -> vector<18x16x384xbf16>
    %9 = vector.shape_cast %8 : vector<18x16x384xbf16> to vector<288x384xbf16>
    %c0_7 = arith.constant 0 : index
    %c0_8 = arith.constant 0 : index
    %c0_9 = arith.constant 0 : index
    %10 = vector.load %arg4[%c0_7, %c0_8, %c0_9] : memref<3x384x128xbf16, #tpu.memory_space<vmem>>, vector<1x384x128xbf16>
    %11 = vector.shape_cast %10 : vector<1x384x128xbf16> to vector<384x128xbf16>
    %cst = arith.constant dense<0.000000e+00> : vector<288x128xf32>
    %12 = tpu.matmul %9, %11, %cst {dimension_numbers = #tpu.dot_dimension_numbers<[1], [0], [0], [1], [0, 0, 1, 1], [], []>} : vector<288x384xbf16>, vector<384x128xbf16>, vector<288x128xf32> -> vector<288x128xf32>
    %13 = vector.extract_strided_slice %4 {offsets = [1, 0, 0], sizes = [18, 16, 128], strides = [1, 1, 1]} : vector<20x18x128xbf16> to vector<18x16x128xbf16>
    %14 = vector.extract_strided_slice %4 {offsets = [1, 1, 0], sizes = [18, 16, 128], strides = [1, 1, 1]} : vector<20x18x128xbf16> to vector<18x16x128xbf16>
    %15 = vector.extract_strided_slice %4 {offsets = [1, 2, 0], sizes = [18, 16, 128], strides = [1, 1, 1]} : vector<20x18x128xbf16> to vector<18x16x128xbf16>
    %16 = tpu.concatenate %13, %14, %15 in 2 : vector<18x16x128xbf16>, vector<18x16x128xbf16>, vector<18x16x128xbf16> -> vector<18x16x384xbf16>
    %17 = vector.shape_cast %16 : vector<18x16x384xbf16> to vector<288x384xbf16>
    %c1 = arith.constant 1 : index
    %c0_10 = arith.constant 0 : index
    %c0_11 = arith.constant 0 : index
    %18 = vector.load %arg4[%c1, %c0_10, %c0_11] : memref<3x384x128xbf16, #tpu.memory_space<vmem>>, vector<1x384x128xbf16>
    %19 = vector.shape_cast %18 : vector<1x384x128xbf16> to vector<384x128xbf16>
    %cst_12 = arith.constant dense<0.000000e+00> : vector<288x128xf32>
    %20 = tpu.matmul %17, %19, %cst_12 {dimension_numbers = #tpu.dot_dimension_numbers<[1], [0], [0], [1], [0, 0, 1, 1], [], []>} : vector<288x384xbf16>, vector<384x128xbf16>, vector<288x128xf32> -> vector<288x128xf32>
    %21 = arith.addf %12, %20 : vector<288x128xf32>
    %22 = vector.extract_strided_slice %4 {offsets = [2, 0, 0], sizes = [18, 16, 128], strides = [1, 1, 1]} : vector<20x18x128xbf16> to vector<18x16x128xbf16>
    %23 = vector.extract_strided_slice %4 {offsets = [2, 1, 0], sizes = [18, 16, 128], strides = [1, 1, 1]} : vector<20x18x128xbf16> to vector<18x16x128xbf16>
    %24 = vector.extract_strided_slice %4 {offsets = [2, 2, 0], sizes = [18, 16, 128], strides = [1, 1, 1]} : vector<20x18x128xbf16> to vector<18x16x128xbf16>
    %25 = tpu.concatenate %22, %23, %24 in 2 : vector<18x16x128xbf16>, vector<18x16x128xbf16>, vector<18x16x128xbf16> -> vector<18x16x384xbf16>
    %26 = vector.shape_cast %25 : vector<18x16x384xbf16> to vector<288x384xbf16>
    %c2 = arith.constant 2 : index
    %c0_13 = arith.constant 0 : index
    %c0_14 = arith.constant 0 : index
    %27 = vector.load %arg4[%c2, %c0_13, %c0_14] : memref<3x384x128xbf16, #tpu.memory_space<vmem>>, vector<1x384x128xbf16>
    %28 = vector.shape_cast %27 : vector<1x384x128xbf16> to vector<384x128xbf16>
    %cst_15 = arith.constant dense<0.000000e+00> : vector<288x128xf32>
    %29 = tpu.matmul %26, %28, %cst_15 {dimension_numbers = #tpu.dot_dimension_numbers<[1], [0], [0], [1], [0, 0, 1, 1], [], []>} : vector<288x384xbf16>, vector<384x128xbf16>, vector<288x128xf32> -> vector<288x128xf32>
    %30 = arith.addf %21, %29 : vector<288x128xf32>
    %c0_16 = arith.constant 0 : index
    %c0_17 = arith.constant 0 : index
    %31 = vector.load %arg7[%c0_16, %c0_17] : memref<1x128xf32, #tpu.memory_space<vmem>>, vector<1x128xf32>
    %32 = vector.broadcast %31 : vector<1x128xf32> to vector<288x128xf32>
    %33 = arith.addf %30, %32 : vector<288x128xf32>
    %cst_18 = arith.constant 0.000000e+00 : f32
    %34 = vector.broadcast %cst_18 : f32 to vector<288x128xf32>
    %35 = arith.maximumf %33, %34 : vector<288x128xf32>
    %cst_19 = arith.constant 0.000000e+00 : f32
    %36 = vector.broadcast %cst_19 : f32 to vector<18x1x128xf32>
    %c0_20 = arith.constant 0 : index
    %c0_21 = arith.constant 0 : index
    %c0_22 = arith.constant 0 : index
    %37 = vector.load %arg10[%c0_20, %c0_21, %c0_22] : memref<18x18x128xf32, #tpu.memory_space<vmem>>, vector<18x1x128xf32>
    tpu.vector_store %arg10[%c0_20, %c0_21, %c0_22], %36 {strides = array<i32>} : memref<18x18x128xf32, #tpu.memory_space<vmem>>, vector<18x1x128xf32>,
    %cst_23 = arith.constant 0.000000e+00 : f32
    %38 = vector.broadcast %cst_23 : f32 to vector<18x1x128xf32>
    %c0_24 = arith.constant 0 : index
    %c17 = arith.constant 17 : index
    %c0_25 = arith.constant 0 : index
    %39 = vector.load %arg10[%c0_24, %c17, %c0_25] : memref<18x18x128xf32, #tpu.memory_space<vmem>>, vector<18x1x128xf32>
    tpu.vector_store %arg10[%c0_24, %c17, %c0_25], %38 {strides = array<i32>} : memref<18x18x128xf32, #tpu.memory_space<vmem>>, vector<18x1x128xf32>,
    %40 = vector.shape_cast %35 : vector<288x128xf32> to vector<18x16x128xf32>
    %c0_26 = arith.constant 0 : index
    %c1_27 = arith.constant 1 : index
    %c0_28 = arith.constant 0 : index
    %41 = vector.load %arg10[%c0_26, %c1_27, %c0_28] : memref<18x18x128xf32, #tpu.memory_space<vmem>>, vector<18x16x128xf32>
    tpu.vector_store %arg10[%c0_26, %c1_27, %c0_28], %40 {strides = array<i32>} : memref<18x18x128xf32, #tpu.memory_space<vmem>>, vector<18x16x128xf32>,
    %c0_i32 = arith.constant 0 : i32
    %42 = arith.cmpi eq, %arg1, %c0_i32 : i32
    %43 = arith.extui %42 : i1 to i32
    %c0_i32_29 = arith.constant 0 : i32
    %44 = arith.cmpi ne, %43, %c0_i32_29 : i32
    scf.if %44 {
      %cst_57 = arith.constant 0.000000e+00 : f32
      %90 = vector.broadcast %cst_57 : f32 to vector<1x18x128xf32>
      %c0_58 = arith.constant 0 : index
      %c0_59 = arith.constant 0 : index
      %c0_60 = arith.constant 0 : index
      %91 = vector.load %arg10[%c0_58, %c0_59, %c0_60] : memref<18x18x128xf32, #tpu.memory_space<vmem>>, vector<1x18x128xf32>
      tpu.vector_store %arg10[%c0_58, %c0_59, %c0_60], %90 {strides = array<i32>} : memref<18x18x128xf32, #tpu.memory_space<vmem>>, vector<1x18x128xf32>,
    } else {
    }
    %c0_i32_30 = arith.constant 0 : i32
    %45 = arith.cmpi eq, %arg1, %c0_i32_30 : i32
    %46 = arith.extui %45 : i1 to i32
    %c0_i32_31 = arith.constant 0 : i32
    %47 = arith.cmpi ne, %46, %c0_i32_31 : i32
    scf.if %47 {
      %cst_57 = arith.constant 0.000000e+00 : f32
      %90 = vector.broadcast %cst_57 : f32 to vector<1x18x128xf32>
      %c17_58 = arith.constant 17 : index
      %c0_59 = arith.constant 0 : index
      %c0_60 = arith.constant 0 : index
      %91 = vector.load %arg10[%c17_58, %c0_59, %c0_60] : memref<18x18x128xf32, #tpu.memory_space<vmem>>, vector<1x18x128xf32>
      tpu.vector_store %arg10[%c17_58, %c0_59, %c0_60], %90 {strides = array<i32>} : memref<18x18x128xf32, #tpu.memory_space<vmem>>, vector<1x18x128xf32>,
    } else {
    }
    %c0_32 = arith.constant 0 : index
    %c0_33 = arith.constant 0 : index
    %c0_34 = arith.constant 0 : index
    %48 = vector.load %arg10[%c0_32, %c0_33, %c0_34] : memref<18x18x128xf32, #tpu.memory_space<vmem>>, vector<18x18x128xf32>
    %49 = arith.truncf %48 : vector<18x18x128xf32> to vector<18x18x128xbf16>
    %50 = vector.extract_strided_slice %49 {offsets = [0, 0, 0], sizes = [16, 16, 128], strides = [1, 1, 1]} : vector<18x18x128xbf16> to vector<16x16x128xbf16>
    %51 = vector.extract_strided_slice %49 {offsets = [0, 1, 0], sizes = [16, 16, 128], strides = [1, 1, 1]} : vector<18x18x128xbf16> to vector<16x16x128xbf16>
    %52 = vector.extract_strided_slice %49 {offsets = [0, 2, 0], sizes = [16, 16, 128], strides = [1, 1, 1]} : vector<18x18x128xbf16> to vector<16x16x128xbf16>
    %53 = tpu.concatenate %50, %51, %52 in 2 : vector<16x16x128xbf16>, vector<16x16x128xbf16>, vector<16x16x128xbf16> -> vector<16x16x384xbf16>
    %54 = vector.shape_cast %53 : vector<16x16x384xbf16> to vector<256x384xbf16>
    %c0_35 = arith.constant 0 : index
    %c0_36 = arith.constant 0 : index
    %c0_37 = arith.constant 0 : index
    %55 = vector.load %arg5[%c0_35, %c0_36, %c0_37] : memref<3x384x128xbf16, #tpu.memory_space<vmem>>, vector<1x384x128xbf16>
    %56 = vector.shape_cast %55 : vector<1x384x128xbf16> to vector<384x128xbf16>
    %cst_38 = arith.constant dense<0.000000e+00> : vector<256x128xf32>
    %57 = tpu.matmul %54, %56, %cst_38 {dimension_numbers = #tpu.dot_dimension_numbers<[1], [0], [0], [1], [0, 0, 1, 1], [], []>} : vector<256x384xbf16>, vector<384x128xbf16>, vector<256x128xf32> -> vector<256x128xf32>
    %58 = vector.extract_strided_slice %49 {offsets = [1, 0, 0], sizes = [16, 16, 128], strides = [1, 1, 1]} : vector<18x18x128xbf16> to vector<16x16x128xbf16>
    %59 = vector.extract_strided_slice %49 {offsets = [1, 1, 0], sizes = [16, 16, 128], strides = [1, 1, 1]} : vector<18x18x128xbf16> to vector<16x16x128xbf16>
    %60 = vector.extract_strided_slice %49 {offsets = [1, 2, 0], sizes = [16, 16, 128], strides = [1, 1, 1]} : vector<18x18x128xbf16> to vector<16x16x128xbf16>
    %61 = tpu.concatenate %58, %59, %60 in 2 : vector<16x16x128xbf16>, vector<16x16x128xbf16>, vector<16x16x128xbf16> -> vector<16x16x384xbf16>
    %62 = vector.shape_cast %61 : vector<16x16x384xbf16> to vector<256x384xbf16>
    %c1_39 = arith.constant 1 : index
    %c0_40 = arith.constant 0 : index
    %c0_41 = arith.constant 0 : index
    %63 = vector.load %arg5[%c1_39, %c0_40, %c0_41] : memref<3x384x128xbf16, #tpu.memory_space<vmem>>, vector<1x384x128xbf16>
    %64 = vector.shape_cast %63 : vector<1x384x128xbf16> to vector<384x128xbf16>
    %cst_42 = arith.constant dense<0.000000e+00> : vector<256x128xf32>
    %65 = tpu.matmul %62, %64, %cst_42 {dimension_numbers = #tpu.dot_dimension_numbers<[1], [0], [0], [1], [0, 0, 1, 1], [], []>} : vector<256x384xbf16>, vector<384x128xbf16>, vector<256x128xf32> -> vector<256x128xf32>
    %66 = arith.addf %57, %65 : vector<256x128xf32>
    %67 = vector.extract_strided_slice %49 {offsets = [2, 0, 0], sizes = [16, 16, 128], strides = [1, 1, 1]} : vector<18x18x128xbf16> to vector<16x16x128xbf16>
    %68 = vector.extract_strided_slice %49 {offsets = [2, 1, 0], sizes = [16, 16, 128], strides = [1, 1, 1]} : vector<18x18x128xbf16> to vector<16x16x128xbf16>
    %69 = vector.extract_strided_slice %49 {offsets = [2, 2, 0], sizes = [16, 16, 128], strides = [1, 1, 1]} : vector<18x18x128xbf16> to vector<16x16x128xbf16>
    %70 = tpu.concatenate %67, %68, %69 in 2 : vector<16x16x128xbf16>, vector<16x16x128xbf16>, vector<16x16x128xbf16> -> vector<16x16x384xbf16>
    %71 = vector.shape_cast %70 : vector<16x16x384xbf16> to vector<256x384xbf16>
    %c2_43 = arith.constant 2 : index
    %c0_44 = arith.constant 0 : index
    %c0_45 = arith.constant 0 : index
    %72 = vector.load %arg5[%c2_43, %c0_44, %c0_45] : memref<3x384x128xbf16, #tpu.memory_space<vmem>>, vector<1x384x128xbf16>
    %73 = vector.shape_cast %72 : vector<1x384x128xbf16> to vector<384x128xbf16>
    %cst_46 = arith.constant dense<0.000000e+00> : vector<256x128xf32>
    %74 = tpu.matmul %71, %73, %cst_46 {dimension_numbers = #tpu.dot_dimension_numbers<[1], [0], [0], [1], [0, 0, 1, 1], [], []>} : vector<256x384xbf16>, vector<384x128xbf16>, vector<256x128xf32> -> vector<256x128xf32>
    %75 = arith.addf %66, %74 : vector<256x128xf32>
    %76 = vector.extract_strided_slice %4 {offsets = [2, 1, 0], sizes = [16, 16, 128], strides = [1, 1, 1]} : vector<20x18x128xbf16> to vector<16x16x128xbf16>
    %77 = vector.shape_cast %76 : vector<16x16x128xbf16> to vector<256x128xbf16>
    %c0_47 = arith.constant 0 : index
    %c0_48 = arith.constant 0 : index
    %78 = vector.load %arg6[%c0_47, %c0_48] : memref<128x128xbf16, #tpu.memory_space<vmem>>, vector<128x128xbf16>
    %cst_49 = arith.constant dense<0.000000e+00> : vector<256x128xf32>
    %79 = tpu.matmul %77, %78, %cst_49 {dimension_numbers = #tpu.dot_dimension_numbers<[1], [0], [0], [1], [0, 0, 1, 1], [], []>} : vector<256x128xbf16>, vector<128x128xbf16>, vector<256x128xf32> -> vector<256x128xf32>
    %80 = arith.addf %75, %79 : vector<256x128xf32>
    %c0_50 = arith.constant 0 : index
    %c0_51 = arith.constant 0 : index
    %81 = vector.load %arg8[%c0_50, %c0_51] : memref<1x128xf32, #tpu.memory_space<vmem>>, vector<1x128xf32>
    %82 = vector.broadcast %81 : vector<1x128xf32> to vector<256x128xf32>
    %83 = arith.addf %80, %82 : vector<256x128xf32>
    %cst_52 = arith.constant 0.000000e+00 : f32
    %84 = vector.broadcast %cst_52 : f32 to vector<256x128xf32>
    %85 = arith.maximumf %83, %84 : vector<256x128xf32>
    %86 = vector.shape_cast %85 : vector<256x128xf32> to vector<16x16x128xf32>
    %c0_53 = arith.constant 0 : index
    %c0_54 = arith.constant 0 : index
    %c0_55 = arith.constant 0 : index
    %c0_56 = arith.constant 0 : index
    %87 = vector.load %arg9[%c0_53, %c0_54, %c0_55, %c0_56] : memref<1x16x16x128xf32, #tpu.memory_space<vmem>>, vector<1x16x16x128xf32>
    %88 = vector.shape_cast %87 : vector<1x16x16x128xf32> to vector<16x16x128xf32>
    %89 = vector.shape_cast %86 : vector<16x16x128xf32> to vector<1x16x16x128xf32>
    tpu.vector_store %arg9[%c0_53, %c0_54, %c0_55, %c0_56], %89 {strides = array<i32>} : memref<1x16x16x128xf32, #tpu.memory_space<vmem>>, vector<1x16x16x128xf32>,
    return
  }
  func.func @transform_0(%arg0: i32, %arg1: i32) -> (i32, i32, i32, i32) {
    %c0_i32 = arith.constant 0 : i32
    %c0_i32_0 = arith.constant 0 : i32
    %c0_i32_1 = arith.constant 0 : i32
    return %arg0, %arg1, %c0_i32, %c0_i32_0 : i32, i32, i32, i32
  }
  func.func @transform_1(%arg0: i32, %arg1: i32) -> (i32, i32, i32, i32) {
    %c1_i32 = arith.constant 1 : i32
    %0 = arith.addi %arg1, %c1_i32 : i32
    %c4_i32 = arith.constant 4 : i32
    %1 = arith.muli %0, %c4_i32 : i32
    %c0_i32 = arith.constant 0 : i32
    %c0_i32_0 = arith.constant 0 : i32
    %c0_i32_1 = arith.constant 0 : i32
    return %arg0, %1, %c0_i32, %c0_i32_0 : i32, i32, i32, i32
  }
  func.func @transform_2(%arg0: i32, %arg1: i32) -> (i32, i32, i32) {
    %c0_i32 = arith.constant 0 : i32
    %c0_i32_0 = arith.constant 0 : i32
    %c0_i32_1 = arith.constant 0 : i32
    %c0_i32_2 = arith.constant 0 : i32
    return %c0_i32, %c0_i32_0, %c0_i32_1 : i32, i32, i32
  }
  func.func @transform_3(%arg0: i32, %arg1: i32) -> (i32, i32, i32) {
    %c0_i32 = arith.constant 0 : i32
    %c0_i32_0 = arith.constant 0 : i32
    %c0_i32_1 = arith.constant 0 : i32
    %c0_i32_2 = arith.constant 0 : i32
    return %c0_i32, %c0_i32_0, %c0_i32_1 : i32, i32, i32
  }
  func.func @transform_4(%arg0: i32, %arg1: i32) -> (i32, i32) {
    %c0_i32 = arith.constant 0 : i32
    %c0_i32_0 = arith.constant 0 : i32
    %c0_i32_1 = arith.constant 0 : i32
    return %c0_i32, %c0_i32_0 : i32, i32
  }
  func.func @transform_5(%arg0: i32, %arg1: i32) -> (i32, i32) {
    %c0_i32 = arith.constant 0 : i32
    %c0_i32_0 = arith.constant 0 : i32
    %c0_i32_1 = arith.constant 0 : i32
    return %c0_i32, %c0_i32_0 : i32, i32
  }
  func.func @transform_6(%arg0: i32, %arg1: i32) -> (i32, i32) {
    %c0_i32 = arith.constant 0 : i32
    %c0_i32_0 = arith.constant 0 : i32
    %c0_i32_1 = arith.constant 0 : i32
    return %c0_i32, %c0_i32_0 : i32, i32
  }
  func.func @transform_7(%arg0: i32, %arg1: i32) -> (i32, i32, i32, i32) {
    %c0_i32 = arith.constant 0 : i32
    %c0_i32_0 = arith.constant 0 : i32
    %c0_i32_1 = arith.constant 0 : i32
    return %arg0, %arg1, %c0_i32, %c0_i32_0 : i32, i32, i32, i32
  }
}

</mosaic_0001>

<llo_original>
// kernel: basic_block_pallas.1
$region0: #{basic_block_pallas.1}
  #allocation0 [shape = 'u32[]', space=smem, size = 0x4, offset = 0x4, fixed_abs, tag = 'smem constant byte address 0x4 - core index']
  #allocation1 [shape = 'u32[144,128]{1,0:T(1,128)}', space=vmem, size = 0x12000, scoped, tag = 'internal scratch']
  #allocation2 [shape = 'f32[18,18,128]{2,1,0:T(8,128)}', space=vmem, size = 0x36000, scoped, tag = 'scratch operand']
  %s0 = inlined_call_operand.vmem [shape: bf16[2,20,18,128], index: 0, kind: input, shape index: {}, may-alias: {0,1}]
  %s1 = inlined_call_operand.vmem [shape: bf16[2,20,18,128], index: 1, kind: input, shape index: {}, may-alias: {0,1}]
  %s2 = inlined_call_operand.vmem [shape: bf16[3,384,128], index: 2, kind: input, shape index: {}]
  %s3 = inlined_call_operand.vmem [shape: bf16[3,384,128], index: 3, kind: input, shape index: {}]
  %s4 = inlined_call_operand.vmem [shape: bf16[128,128], index: 4, kind: input, shape index: {}]
  %s5 = inlined_call_operand.vmem [shape: f32[1,128], index: 5, kind: input, shape index: {}]
  %s6 = inlined_call_operand.vmem [shape: f32[1,128], index: 6, kind: input, shape index: {}]
  %s7 = inlined_call_operand.vmem [shape: f32[2,16,16,128], index: 7, kind: output, shape index: {}]
  %s8 = sld [smem:[#allocation0]]
  $region65: #{basic_block_pallas.1} parent=0
    _
  %s10 = ssub.s32 1, %s8
  %s11 = scalar_select 0, %s10, %s8
  loop: start=0, step=1, limit=4
  $region2: #{basic_block_pallas.1} parent=0 // loop_pre_header
    _
  $region3: #{basic_block_pallas.1} parent=0 // loop_header
    %s13 = sphi 0, %s17
    %p14 = scmp.ge.s32.totalorder %s13, 4
    %s20 = sphi 0, %s32
    %s21 = sphi 0, %s28
    %s22 = sphi 0, %s20
    %s23 = sphi 0, %s21
    %s24 = sphi 0, %s22
    %s25 = sphi 0, %s23
    %s37 = sphi 0, %s39
    %s40 = sphi 0, %s37
    %s41 = sphi 0, %s40
    %s57 = sphi 0, %s41
    %s69 = sphi 0, %s71
    %s72 = sphi 0, %s69
    %s73 = sphi 0, %s72
    %s89 = sphi 0, %s73
    %s93 = sphi 0, %s93
    %s95 = sphi 0, %s93
    %s96 = sphi 0, %s95
    %s110 = sphi 0, %s96
    %s114 = sphi 0, %s114
    %s116 = sphi 0, %s114
    %s117 = sphi 0, %s116
    %s131 = sphi 0, %s117
    %s135 = sphi 0, %s135
    %s137 = sphi 0, %s135
    %s138 = sphi 0, %s137
    %s152 = sphi 0, %s138
    %s156 = sphi 0, %s156
    %s158 = sphi 0, %s156
    %s159 = sphi 0, %s158
    %s173 = sphi 0, %s159
    %s177 = sphi 0, %s177
    %s179 = sphi 0, %s177
    %s180 = sphi 0, %s179
    %s194 = sphi 0, %s180
    %s202 = sphi 0, %s204
    %s205 = sphi 0, %s202
    %s206 = sphi 0, %s205
    %s222 = sphi 0, %s206
  $region4: #{basic_block_pallas.1} parent=0 // loop_header_branch
    %16 = sbr.rel (%p14) target = $region8
  $region5: #{basic_block_pallas.1} parent=0 // loop_body
    %s18 = ssub.s32 %s13, 1
    %s19 = ssub.s32 %s13, 2
    %s26 = sadd.s32 1, %s21
    %p27 = scmp.ge.s32.totalorder %s26, 1
    %s28 = scalar_select %p27, 0, %s26
    %s29 = sadd.s32 1, %s20
    %s30 = scalar_select %p27, %s29, %s20
    %p31 = scmp.ge.s32.totalorder %s30, 2
    %s32 = scalar_select %p31, 0, %s30
    %s33 = ssub.s32 %s20, %s32
    %s34 = ssub.s32 %s21, %s28
    %s35 = sor.u32 %s33, %s34
    %p36 = scmp.eq.s32.totalorder %s35, 0
    %s38 = sadd.s32 %s37, 1
    %s39 = scalar_select %p36, %s37, %s38
    %p42 = pneg %p36
    %p43 = scmp.eq.s32.totalorder %s13, 1
    %p44 = por %p42, %p43
    %p45 = scmp.ne.s32.totalorder %s37, %s40
    %p46 = scmp.eq.s32.totalorder %s13, 0
    %p47 = por %p45, %p46
    %p48 = scmp.ne.s32.totalorder %s37, %s40
    %p49 = scmp.eq.s32.totalorder %s18, 1
    %p50 = por %p48, %p49
    %p51 = scmp.ne.s32.totalorder %s40, %s41
    %p52 = scmp.eq.s32.totalorder %s18, 0
    %p53 = por %p51, %p52
    %p54 = scmp.ne.s32.totalorder %s40, %s41
    %p55 = scmp.eq.s32.totalorder %s19, 1
    %p56 = por %p54, %p55
    %p58 = scmp.ne.s32.totalorder %s41, %s57
    %p59 = scmp.eq.s32.totalorder %s19, 0
    %p60 = por %p58, %p59
    %s61 = sadd.s32 %s21, 1
    %s62 = smul.u32 %s61, 4
    %s63 = sadd.s32 %s28, 1
    %s64 = smul.u32 %s63, 4
    %s65 = ssub.s32 %s20, %s32
    %s66 = ssub.s32 %s62, %s64
    %s67 = sor.u32 %s65, %s66
    %p68 = scmp.eq.s32.totalorder %s67, 0
    %s70 = sadd.s32 %s69, 1
    %s71 = scalar_select %p68, %s69, %s70
    %p74 = pneg %p68
    %p75 = scmp.eq.s32.totalorder %s13, 1
    %p76 = por %p74, %p75
    %p77 = scmp.ne.s32.totalorder %s69, %s72
    %p78 = scmp.eq.s32.totalorder %s13, 0
    %p79 = por %p77, %p78
    %p80 = scmp.ne.s32.totalorder %s69, %s72
    %p81 = scmp.eq.s32.totalorder %s18, 1
    %p82 = por %p80, %p81
    %p83 = scmp.ne.s32.totalorder %s72, %s73
    %p84 = scmp.eq.s32.totalorder %s18, 0
    %p85 = por %p83, %p84
    %p86 = scmp.ne.s32.totalorder %s72, %s73
    %p87 = scmp.eq.s32.totalorder %s19, 1
    %p88 = por %p86, %p87
    %p90 = scmp.ne.s32.totalorder %s73, %s89
    %p91 = scmp.eq.s32.totalorder %s19, 0
    %p92 = por %p90, %p91
    %s94 = sadd.s32 %s93, 1
    %p97 = scmp.eq.s32.totalorder %s13, 1
    %p98 = scmp.ne.s32.totalorder %s93, %s95
    %p99 = scmp.eq.s32.totalorder %s13, 0
    %p100 = por %p98, %p99
    %p101 = scmp.ne.s32.totalorder %s93, %s95
    %p102 = scmp.eq.s32.totalorder %s18, 1
    %p103 = por %p101, %p102
    %p104 = scmp.ne.s32.totalorder %s95, %s96
    %p105 = scmp.eq.s32.totalorder %s18, 0
    %p106 = por %p104, %p105
    %p107 = scmp.ne.s32.totalorder %s95, %s96
    %p108 = scmp.eq.s32.totalorder %s19, 1
    %p109 = por %p107, %p108
    %p111 = scmp.ne.s32.totalorder %s96, %s110
    %p112 = scmp.eq.s32.totalorder %s19, 0
    %p113 = por %p111, %p112
    %s115 = sadd.s32 %s114, 1
    %p118 = scmp.eq.s32.totalorder %s13, 1
    %p119 = scmp.ne.s32.totalorder %s114, %s116
    %p120 = scmp.eq.s32.totalorder %s13, 0
    %p121 = por %p119, %p120
    %p122 = scmp.ne.s32.totalorder %s114, %s116
    %p123 = scmp.eq.s32.totalorder %s18, 1
    %p124 = por %p122, %p123
    %p125 = scmp.ne.s32.totalorder %s116, %s117
    %p126 = scmp.eq.s32.totalorder %s18, 0
    %p127 = por %p125, %p126
    %p128 = scmp.ne.s32.totalorder %s116, %s117
    %p129 = scmp.eq.s32.totalorder %s19, 1
    %p130 = por %p128, %p129
    %p132 = scmp.ne.s32.totalorder %s117, %s131
    %p133 = scmp.eq.s32.totalorder %s19, 0
    %p134 = por %p132, %p133
    %s136 = sadd.s32 %s135, 1
    %p139 = scmp.eq.s32.totalorder %s13, 1
    %p140 = scmp.ne.s32.totalorder %s135, %s137
    %p141 = scmp.eq.s32.totalorder %s13, 0
    %p142 = por %p140, %p141
    %p143 = scmp.ne.s32.totalorder %s135, %s137
    %p144 = scmp.eq.s32.totalorder %s18, 1
    %p145 = por %p143, %p144
    %p146 = scmp.ne.s32.totalorder %s137, %s138
    %p147 = scmp.eq.s32.totalorder %s18, 0
    %p148 = por %p146, %p147
    %p149 = scmp.ne.s32.totalorder %s137, %s138
    %p150 = scmp.eq.s32.totalorder %s19, 1
    %p151 = por %p149, %p150
    %p153 = scmp.ne.s32.totalorder %s138, %s152
    %p154 = scmp.eq.s32.totalorder %s19, 0
    %p155 = por %p153, %p154
    %s157 = sadd.s32 %s156, 1
    %p160 = scmp.eq.s32.totalorder %s13, 1
    %p161 = scmp.ne.s32.totalorder %s156, %s158
    %p162 = scmp.eq.s32.totalorder %s13, 0
    %p163 = por %p161, %p162
    %p164 = scmp.ne.s32.totalorder %s156, %s158
    %p165 = scmp.eq.s32.totalorder %s18, 1
    %p166 = por %p164, %p165
    %p167 = scmp.ne.s32.totalorder %s158, %s159
    %p168 = scmp.eq.s32.totalorder %s18, 0
    %p169 = por %p167, %p168
    %p170 = scmp.ne.s32.totalorder %s158, %s159
    %p171 = scmp.eq.s32.totalorder %s19, 1
    %p172 = por %p170, %p171
    %p174 = scmp.ne.s32.totalorder %s159, %s173
    %p175 = scmp.eq.s32.totalorder %s19, 0
    %p176 = por %p174, %p175
    %s178 = sadd.s32 %s177, 1
    %p181 = scmp.eq.s32.totalorder %s13, 1
    %p182 = scmp.ne.s32.totalorder %s177, %s179
    %p183 = scmp.eq.s32.totalorder %s13, 0
    %p184 = por %p182, %p183
    %p185 = scmp.ne.s32.totalorder %s177, %s179
    %p186 = scmp.eq.s32.totalorder %s18, 1
    %p187 = por %p185, %p186
    %p188 = scmp.ne.s32.totalorder %s179, %s180
    %p189 = scmp.eq.s32.totalorder %s18, 0
    %p190 = por %p188, %p189
    %p191 = scmp.ne.s32.totalorder %s179, %s180
    %p192 = scmp.eq.s32.totalorder %s19, 1
    %p193 = por %p191, %p192
    %p195 = scmp.ne.s32.totalorder %s180, %s194
    %p196 = scmp.eq.s32.totalorder %s19, 0
    %p197 = por %p195, %p196
    %s198 = ssub.s32 %s20, %s32
    %s199 = ssub.s32 %s21, %s28
    %s200 = sor.u32 %s198, %s199
    %p201 = scmp.eq.s32.totalorder %s200, 0
    %s203 = sadd.s32 %s202, 1
    %s204 = scalar_select %p201, %s202, %s203
    %p207 = pneg %p201
    %p208 = scmp.eq.s32.totalorder %s13, 1
    %p209 = por %p207, %p208
    %p210 = scmp.ne.s32.totalorder %s202, %s205
    %p211 = scmp.eq.s32.totalorder %s13, 0
    %p212 = por %p210, %p211
    %p213 = scmp.ne.s32.totalorder %s202, %s205
    %p214 = scmp.eq.s32.totalorder %s18, 1
    %p215 = por %p213, %p214
    %p216 = scmp.ne.s32.totalorder %s205, %s206
    %p217 = scmp.eq.s32.totalorder %s18, 0
    %p218 = por %p216, %p217
    %p219 = scmp.ne.s32.totalorder %s205, %s206
    %p220 = scmp.eq.s32.totalorder %s19, 1
    %p221 = por %p219, %p220
    %p223 = scmp.ne.s32.totalorder %s206, %s222
    %p224 = scmp.eq.s32.totalorder %s19, 0
    %p225 = por %p223, %p224
    %p226 = scmp.le.s32.totalorder 1, %s13
    %p227 = scmp.lt.s32.totalorder %s13, 3
    %p228 = pnand %p226, %p227
    %p229 = pneg %p228
    // Predicated region
    $region9: #{basic_block_pallas.1} parent=5 // pred_check
      _
    $region10: #{basic_block_pallas.1} parent=5 // pred_check_branch
      %231 = sbr.rel (%p228) target = $region12
    $region11: #{basic_block_pallas.1} parent=5 // pred_region
      %s232 = ssub.s32 %s13, 1
      // Predicated region
      $region13: #{basic_block_pallas.1} parent=11 // pred_check
        %p233 = pneg %p106
      $region14: #{basic_block_pallas.1} parent=11 // pred_check_branch
        %235 = sbr.rel (%p233) target = $region16
      $region15: #{basic_block_pallas.1} parent=11 // pred_region
        _
      $region16: #{basic_block_pallas.1} parent=11 // pred_fallthru
        _
      // Predicated region
      $region17: #{basic_block_pallas.1} parent=11 // pred_check
        %p236 = pneg %p127
      $region18: #{basic_block_pallas.1} parent=11 // pred_check_branch
        %238 = sbr.rel (%p236) target = $region20
      $region19: #{basic_block_pallas.1} parent=11 // pred_region
        _
      $region20: #{basic_block_pallas.1} parent=11 // pred_fallthru
        _
      // Predicated region
      $region21: #{basic_block_pallas.1} parent=11 // pred_check
        %p239 = pneg %p148
      $region22: #{basic_block_pallas.1} parent=11 // pred_check_branch
        %241 = sbr.rel (%p239) target = $region24
      $region23: #{basic_block_pallas.1} parent=11 // pred_region
        _
      $region24: #{basic_block_pallas.1} parent=11 // pred_fallthru
        _
      // Predicated region
      $region25: #{basic_block_pallas.1} parent=11 // pred_check
        %p242 = pneg %p169
      $region26: #{basic_block_pallas.1} parent=11 // pred_check_branch
        %244 = sbr.rel (%p242) target = $region28
      $region27: #{basic_block_pallas.1} parent=11 // pred_region
        _
      $region28: #{basic_block_pallas.1} parent=11 // pred_fallthru
        _
      // Predicated region
      $region29: #{basic_block_pallas.1} parent=11 // pred_check
        %p245 = pneg %p190
      $region30: #{basic_block_pallas.1} parent=11 // pred_check_branch
        %247 = sbr.rel (%p245) target = $region32
      $region31: #{basic_block_pallas.1} parent=11 // pred_region
        _
      $region32: #{basic_block_pallas.1} parent=11 // pred_fallthru
        _
    $region12: #{basic_block_pallas.1} parent=5 // pred_fallthru
      _
    %p248 = scmp.lt.s32.totalorder %s13, 2
    // Predicated region
    $region33: #{basic_block_pallas.1} parent=5 // pred_check
      %p249 = pneg %p248
    $region34: #{basic_block_pallas.1} parent=5 // pred_check_branch
      %251 = sbr.rel (%p249) target = $region36
    $region35: #{basic_block_pallas.1} parent=5 // pred_region
      // Predicated region
      $region37: #{basic_block_pallas.1} parent=35 // pred_check
        %p252 = pneg %p47
      $region38: #{basic_block_pallas.1} parent=35 // pred_check_branch
        %254 = sbr.rel (%p252) target = $region40
      $region39: #{basic_block_pallas.1} parent=35 // pred_region
        %s255 = smul.u32 16, %s21
        %s256 = ssub.s32 20, %s255
        %p257 = scmp.lt.s32.totalorder %s256, 16
        %s258 = scalar_select %p257, %s256, 16
        %s259 = smul.u32 64, %s258
        %s260 = smul.u32 %s259, 3
        %p261 = scmp.lt.s32.totalorder %s20, 1
        %s262 = scalar_select %p261, %s20, 1
        %p263 = scmp.lt.s32.totalorder %s255, 19
        %s264 = scalar_select %p263, %s255, 19
        %s265 = smul.addr %s264, 3
        %s266 = smul.addr %s262, 60
        %s267 = sadd.s32 %s265, %s266
        %s268 = smul.addr %s267, 4
        %s269 = scalar_lea.vmem %s0, %s268
        %s270 = smul.u32 16, %s21
        %s271 = ssub.s32 20, %s270
        %p272 = scmp.lt.s32.totalorder %s271, 16
        %s273 = scalar_select %p272, %s271, 16
        %s274 = smul.u32 64, %s273
        %s275 = smul.u32 %s274, 3
      $region40: #{basic_block_pallas.1} parent=35 // pred_fallthru
        _
      // Predicated region
      $region41: #{basic_block_pallas.1} parent=35 // pred_check
        %p276 = pneg %p79
      $region42: #{basic_block_pallas.1} parent=35 // pred_check_branch
        %278 = sbr.rel (%p276) target = $region44
      $region43: #{basic_block_pallas.1} parent=35 // pred_region
        %s279 = sadd.s32 %s21, 1
        %s280 = smul.u32 %s279, 4
        %s281 = smul.u32 4, %s280
        %p282 = scmp.lt.s32.totalorder %s20, 1
        %s283 = scalar_select %p282, %s20, 1
        %p284 = scmp.lt.s32.totalorder %s281, 19
        %s285 = scalar_select %p284, %s281, 19
        %s286 = smul.addr %s285, 3
        %s287 = smul.addr %s283, 60
        %s288 = sadd.s32 %s286, %s287
        %s289 = smul.addr %s288, 4
        %s290 = scalar_lea.vmem %s1, %s289
        %s291 = sadd.s32 %s21, 1
        %s292 = smul.u32 %s291, 4
        %s293 = smul.u32 4, %s292
      $region44: #{basic_block_pallas.1} parent=35 // pred_fallthru
        _
    $region36: #{basic_block_pallas.1} parent=5 // pred_fallthru
      _
    %p294 = scmp.le.s32.totalorder 1, %s13
    %p295 = scmp.lt.s32.totalorder %s13, 3
    %p296 = pnand %p294, %p295
    %p297 = pneg %p296
    // Predicated region
    $region45: #{basic_block_pallas.1} parent=5 // pred_check
      _
    $region46: #{basic_block_pallas.1} parent=5 // pred_check_branch
      %299 = sbr.rel (%p296) target = $region48
    $region47: #{basic_block_pallas.1} parent=5 // pred_region
      %s300 = ssub.s32 %s13, 1
      %s301 = smul.u32 16, %s23
      %s302 = ssub.s32 20, %s301
      %p303 = scmp.lt.s32.totalorder %s302, 16
      %s304 = scalar_select %p303, %s302, 16
      %s305 = smul.u32 64, %s304
      %s306 = smul.u32 %s305, 3
      %p307 = scmp.lt.s32.totalorder %s22, 1
      %s308 = scalar_select %p307, %s22, 1
      %p309 = scmp.lt.s32.totalorder %s301, 19
      %s310 = scalar_select %p309, %s301, 19
      %s311 = smul.addr %s310, 3
      %s312 = smul.addr %s308, 60
      %s313 = sadd.s32 %s311, %s312
      %s314 = smul.addr %s313, 4
      %s315 = scalar_lea.vmem %s0, %s314
      %p316 = pneg %p53
      %p317 = pneg %p50
      %s318 = sadd.s32 %s23, 1
      %s319 = smul.u32 %s318, 4
      %s320 = smul.u32 4, %s319
      %p321 = scmp.lt.s32.totalorder %s22, 1
      %s322 = scalar_select %p321, %s22, 1
      %p323 = scmp.lt.s32.totalorder %s320, 19
      %s324 = scalar_select %p323, %s320, 19
      %s325 = smul.addr %s324, 3
      %s326 = smul.addr %s322, 60
      %s327 = sadd.s32 %s325, %s326
      %s328 = smul.addr %s327, 4
      %s329 = scalar_lea.vmem %s1, %s328
      %p330 = pneg %p85
      %p331 = pneg %p82
      %p332 = pneg %p106
      %p333 = pneg %p103
      %p334 = pneg %p127
      %p335 = pneg %p124
      %p336 = pneg %p148
      %p337 = pneg %p145
      %p338 = pneg %p169
      %p339 = pneg %p166
      %p340 = pneg %p190
      %p341 = pneg %p187
      %p342 = pneg %p218
      %p343 = pneg %p215
      %s344 = smul.u32 16, %s23
      %p345 = scmp.lt.s32.totalorder %s22, 1
      %s346 = scalar_select %p345, %s22, 1
      %p347 = scmp.lt.s32.totalorder %s344, 15
      %s348 = scalar_select %p347, %s344, 15
      %s349 = smul.addr %s348, 2
      %s350 = smul.addr %s346, 32
      %s351 = sadd.s32 %s349, %s350
      %s352 = smul.addr %s351, 8
      %s353 = scalar_lea.vmem %s7, %s352
      %s354 = smul.u32 16, %s23
      %s355 = ssub.s32 20, %s354
      %p356 = scmp.lt.s32.totalorder %s355, 16
      %s357 = scalar_select %p356, %s355, 16
      %s358 = smul.u32 64, %s357
      %s359 = smul.u32 %s358, 3
      %p360 = scmp.lt.s32.totalorder %s22, 1
      %s361 = scalar_select %p360, %s22, 1
      %p362 = scmp.lt.s32.totalorder %s354, 19
      %s363 = scalar_select %p362, %s354, 19
      %s364 = smul.addr %s363, 3
      %s365 = smul.addr %s361, 60
      %s366 = sadd.s32 %s364, %s365
      %s367 = smul.addr %s366, 4
      %s368 = scalar_lea.vmem %s0, %s367
      %s369 = smul.u32 16, %s23
      %s370 = ssub.s32 20, %s369
      %p371 = scmp.lt.s32.totalorder %s370, 16
      %s372 = scalar_select %p371, %s370, 16
      %s373 = smul.u32 64, %s372
      %s374 = smul.u32 %s373, 3
      %s375 = sadd.s32 %s23, 1
      %s376 = smul.u32 %s375, 4
      %s377 = smul.u32 4, %s376
      %p378 = scmp.lt.s32.totalorder %s22, 1
      %s379 = scalar_select %p378, %s22, 1
      %p380 = scmp.lt.s32.totalorder %s377, 19
      %s381 = scalar_select %p380, %s377, 19
      %s382 = smul.addr %s381, 3
      %s383 = smul.addr %s379, 60
      %s384 = sadd.s32 %s382, %s383
      %s385 = smul.addr %s384, 4
      %s386 = scalar_lea.vmem %s1, %s385
      %s387 = sadd.s32 %s23, 1
      %s388 = smul.u32 %s387, 4
      %s389 = smul.u32 4, %s388
      %s390 = smul.u32 16, %s23
      %p391 = scmp.lt.s32.totalorder %s22, 1
      %s392 = scalar_select %p391, %s22, 1
      %p393 = scmp.lt.s32.totalorder %s390, 15
      %s394 = scalar_select %p393, %s390, 15
      %s395 = smul.addr %s394, 2
      %s396 = smul.addr %s392, 32
      %s397 = sadd.s32 %s395, %s396
      %s398 = smul.addr %s397, 8
      %s399 = scalar_lea.vmem %s7, %s398
      %s400 = smul.u32 16, %s23
      %v402 = vld [vmem:[%s368] sm:$0xf]
      %v403 = vld [vmem:[%s368 + $0x4] sm:$0xf]
      %v404 = vld [vmem:[%s368 + $0x8] sm:$0x1]
      %v405 = vld [vmem:[%s368 + $0xc] sm:$0xf]
      %v406 = vld [vmem:[%s368 + $0x10] sm:$0xf]
      %v407 = vld [vmem:[%s368 + $0x14] sm:$0x1]
      %v408 = vld [vmem:[%s368 + $0x18] sm:$0xf]
      %v409 = vld [vmem:[%s368 + $0x1c] sm:$0xf]
      %v410 = vld [vmem:[%s368 + $0x20] sm:$0x1]
      %v411 = vld [vmem:[%s368 + $0x24] sm:$0xf]
      %v412 = vld [vmem:[%s368 + $0x28] sm:$0xf]
      %v413 = vld [vmem:[%s368 + $0x2c] sm:$0x1]
      %v414 = vld [vmem:[%s368 + $0x30] sm:$0xf]
      %v415 = vld [vmem:[%s368 + $0x34] sm:$0xf]
      %v416 = vld [vmem:[%s368 + $0x38] sm:$0x1]
      %v417 = vld [vmem:[%s368 + $0x3c] sm:$0xf]
      %v418 = vld [vmem:[%s368 + $0x40] sm:$0xf]
      %v419 = vld [vmem:[%s368 + $0x44] sm:$0x1]
      %v420 = vld [vmem:[%s368 + $0x48] sm:$0xf]
      %v421 = vld [vmem:[%s368 + $0x4c] sm:$0xf]
      %v422 = vld [vmem:[%s368 + $0x50] sm:$0x1]
      %v423 = vld [vmem:[%s368 + $0x54] sm:$0xf]
      %v424 = vld [vmem:[%s368 + $0x58] sm:$0xf]
      %v425 = vld [vmem:[%s368 + $0x5c] sm:$0x1]
      %v426 = vld [vmem:[%s368 + $0x60] sm:$0xf]
      %v427 = vld [vmem:[%s368 + $0x64] sm:$0xf]
      %v428 = vld [vmem:[%s368 + $0x68] sm:$0x1]
      %v429 = vld [vmem:[%s368 + $0x6c] sm:$0xf]
      %v430 = vld [vmem:[%s368 + $0x70] sm:$0xf]
      %v431 = vld [vmem:[%s368 + $0x74] sm:$0x1]
      %v432 = vld [vmem:[%s368 + $0x78] sm:$0xf]
      %v433 = vld [vmem:[%s368 + $0x7c] sm:$0xf]
      %v434 = vld [vmem:[%s368 + $0x80] sm:$0x1]
      %v435 = vld [vmem:[%s368 + $0x84] sm:$0xf]
      %v436 = vld [vmem:[%s368 + $0x88] sm:$0xf]
      %v437 = vld [vmem:[%s368 + $0x8c] sm:$0x1]
      %v438 = vld [vmem:[%s368 + $0x90] sm:$0xf]
      %v439 = vld [vmem:[%s368 + $0x94] sm:$0xf]
      %v440 = vld [vmem:[%s368 + $0x98] sm:$0x1]
      %v441 = vld [vmem:[%s368 + $0x9c] sm:$0xf]
      %v442 = vld [vmem:[%s368 + $0xa0] sm:$0xf]
      %v443 = vld [vmem:[%s368 + $0xa4] sm:$0x1]
      %v444 = vld [vmem:[%s368 + $0xa8] sm:$0xf]
      %v445 = vld [vmem:[%s368 + $0xac] sm:$0xf]
      %v446 = vld [vmem:[%s368 + $0xb0] sm:$0x1]
      %v447 = vld [vmem:[%s368 + $0xb4] sm:$0xf]
      %v448 = vld [vmem:[%s368 + $0xb8] sm:$0xf]
      %v449 = vld [vmem:[%s368 + $0xbc] sm:$0x1]
      %v450 = vld [vmem:[%s386] sm:$0xf]
      %v451 = vld [vmem:[%s386 + $0x4] sm:$0xf]
      %v452 = vld [vmem:[%s386 + $0x8] sm:$0x1]
      %v453 = vld [vmem:[%s386 + $0xc] sm:$0xf]
      %v454 = vld [vmem:[%s386 + $0x10] sm:$0xf]
      %v455 = vld [vmem:[%s386 + $0x14] sm:$0x1]
      %v456 = vld [vmem:[%s386 + $0x18] sm:$0xf]
      %v457 = vld [vmem:[%s386 + $0x1c] sm:$0xf]
      %v458 = vld [vmem:[%s386 + $0x20] sm:$0x1]
      %v459 = vld [vmem:[%s386 + $0x24] sm:$0xf]
      %v460 = vld [vmem:[%s386 + $0x28] sm:$0xf]
      %v461 = vld [vmem:[%s386 + $0x2c] sm:$0x1]
      %v498 = vunpack.c.l.b16 %v402
      %v499 = vunpack.c.l.b16 %v403
      %v500 = vunpack.c.l.b16 %v405
      %v501 = vunpack.c.l.b16 %v406
      %v502 = vunpack.c.l.b16 %v408
      %v503 = vunpack.c.l.b16 %v409
      %v504 = vunpack.c.l.b16 %v411
      %v505 = vunpack.c.l.b16 %v412
      %v506 = vunpack.c.l.b16 %v414
      %v507 = vunpack.c.l.b16 %v415
      %v508 = vunpack.c.l.b16 %v417
      %v509 = vunpack.c.l.b16 %v418
      %v510 = vunpack.c.l.b16 %v420
      %v511 = vunpack.c.l.b16 %v421
      %v512 = vunpack.c.l.b16 %v423
      %v513 = vunpack.c.l.b16 %v424
      %v514 = vunpack.c.l.b16 %v426
      %v515 = vunpack.c.l.b16 %v427
      %v516 = vunpack.c.l.b16 %v429
      %v517 = vunpack.c.l.b16 %v430
      %v518 = vunpack.c.l.b16 %v432
      %v519 = vunpack.c.l.b16 %v433
      %v520 = vunpack.c.l.b16 %v435
      %v521 = vunpack.c.l.b16 %v436
      %v522 = vunpack.c.l.b16 %v438
      %v523 = vunpack.c.l.b16 %v439
      %v524 = vunpack.c.l.b16 %v441
      %v525 = vunpack.c.l.b16 %v442
      %v526 = vunpack.c.l.b16 %v444
      %v527 = vunpack.c.l.b16 %v445
      %v528 = vunpack.c.l.b16 %v447
      %v529 = vunpack.c.l.b16 %v448
      %v530 = vunpack.c.l.b16 %v450
      %v531 = vunpack.c.l.b16 %v451
      %v532 = vunpack.c.l.b16 %v453
      %v533 = vunpack.c.l.b16 %v454
      %v534 = vpack.c.b16 %v499, %v498
      %v535 = vpack.c.b16 %v501, %v500
      %v536 = vpack.c.b16 %v503, %v502
      %v537 = vpack.c.b16 %v505, %v504
      %v538 = vpack.c.b16 %v507, %v506
      %v539 = vpack.c.b16 %v509, %v508
      %v540 = vpack.c.b16 %v511, %v510
      %v541 = vpack.c.b16 %v513, %v512
      %v542 = vpack.c.b16 %v515, %v514
      %v543 = vpack.c.b16 %v517, %v516
      %v544 = vpack.c.b16 %v519, %v518
      %v545 = vpack.c.b16 %v521, %v520
      %v546 = vpack.c.b16 %v523, %v522
      %v547 = vpack.c.b16 %v525, %v524
      %v548 = vpack.c.b16 %v527, %v526
      %v549 = vpack.c.b16 %v529, %v528
      %v550 = vpack.c.b16 %v531, %v530
      %v551 = vpack.c.b16 %v533, %v532
      %v588 = vunpack.c.l.b16 %v404
      %v589 = vunpack.c.l.b16 %v407
      %v590 = vunpack.c.l.b16 %v410
      %v591 = vunpack.c.l.b16 %v413
      %v592 = vunpack.c.l.b16 %v416
      %v593 = vunpack.c.l.b16 %v419
      %v594 = vunpack.c.l.b16 %v422
      %v595 = vunpack.c.l.b16 %v425
      %v596 = vunpack.c.l.b16 %v428
      %v597 = vunpack.c.l.b16 %v431
      %v598 = vunpack.c.l.b16 %v434
      %v599 = vunpack.c.l.b16 %v437
      %v600 = vunpack.c.l.b16 %v440
      %v601 = vunpack.c.l.b16 %v443
      %v602 = vunpack.c.l.b16 %v446
      %v603 = vunpack.c.l.b16 %v449
      %v604 = vunpack.c.l.b16 %v452
      %v605 = vunpack.c.l.b16 %v455
      %v606 = vpack.c.b16 %v588, %v588
      %v607 = vpack.c.b16 %v589, %v589
      %v608 = vpack.c.b16 %v590, %v590
      %v609 = vpack.c.b16 %v591, %v591
      %v610 = vpack.c.b16 %v592, %v592
      %v611 = vpack.c.b16 %v593, %v593
      %v612 = vpack.c.b16 %v594, %v594
      %v613 = vpack.c.b16 %v595, %v595
      %v614 = vpack.c.b16 %v596, %v596
      %v615 = vpack.c.b16 %v597, %v597
      %v616 = vpack.c.b16 %v598, %v598
      %v617 = vpack.c.b16 %v599, %v599
      %v618 = vpack.c.b16 %v600, %v600
      %v619 = vpack.c.b16 %v601, %v601
      %v620 = vpack.c.b16 %v602, %v602
      %v621 = vpack.c.b16 %v603, %v603
      %v622 = vpack.c.b16 %v604, %v604
      %v623 = vpack.c.b16 %v605, %v605
      %vm624 = vsmask.f32 7424
      %v626 = vshrl.u32 %v534, 16
      %v628 = vshll.u32 %v534, 16
      %v630 = vrot.slane %v628, 1
      %v631 = vor.u32 %v626, %v630
      %v633 = vshll.u32 %v606, 16
      %v635 = vrot.slane %v633, 1
      %v636 = vsel %vm624, %v631, %v635
      %v638 = vshrl.u32 %v535, 16
      %v640 = vshll.u32 %v535, 16
      %v642 = vrot.slane %v640, 1
      %v643 = vor.u32 %v638, %v642
      %v645 = vshll.u32 %v607, 16
      %v647 = vrot.slane %v645, 1
      %v648 = vsel %vm624, %v643, %v647
      %v650 = vshrl.u32 %v536, 16
      %v652 = vshll.u32 %v536, 16
      %v654 = vrot.slane %v652, 1
      %v655 = vor.u32 %v650, %v654
      %v657 = vshll.u32 %v608, 16
      %v659 = vrot.slane %v657, 1
      %v660 = vsel %vm624, %v655, %v659
      %v662 = vshrl.u32 %v537, 16
      %v664 = vshll.u32 %v537, 16
      %v666 = vrot.slane %v664, 1
      %v667 = vor.u32 %v662, %v666
      %v669 = vshll.u32 %v609, 16
      %v671 = vrot.slane %v669, 1
      %v672 = vsel %vm624, %v667, %v671
      %v674 = vshrl.u32 %v538, 16
      %v676 = vshll.u32 %v538, 16
      %v678 = vrot.slane %v676, 1
      %v679 = vor.u32 %v674, %v678
      %v681 = vshll.u32 %v610, 16
      %v683 = vrot.slane %v681, 1
      %v684 = vsel %vm624, %v679, %v683
      %v686 = vshrl.u32 %v539, 16
      %v688 = vshll.u32 %v539, 16
      %v690 = vrot.slane %v688, 1
      %v691 = vor.u32 %v686, %v690
      %v693 = vshll.u32 %v611, 16
      %v695 = vrot.slane %v693, 1
      %v696 = vsel %vm624, %v691, %v695
      %v698 = vshrl.u32 %v540, 16
      %v700 = vshll.u32 %v540, 16
      %v702 = vrot.slane %v700, 1
      %v703 = vor.u32 %v698, %v702
      %v705 = vshll.u32 %v612, 16
      %v707 = vrot.slane %v705, 1
      %v708 = vsel %vm624, %v703, %v707
      %v710 = vshrl.u32 %v541, 16
      %v712 = vshll.u32 %v541, 16
      %v714 = vrot.slane %v712, 1
      %v715 = vor.u32 %v710, %v714
      %v717 = vshll.u32 %v613, 16
      %v719 = vrot.slane %v717, 1
      %v720 = vsel %vm624, %v715, %v719
      %v722 = vshrl.u32 %v542, 16
      %v724 = vshll.u32 %v542, 16
      %v726 = vrot.slane %v724, 1
      %v727 = vor.u32 %v722, %v726
      %v729 = vshll.u32 %v614, 16
      %v731 = vrot.slane %v729, 1
      %v732 = vsel %vm624, %v727, %v731
      %v734 = vshrl.u32 %v543, 16
      %v736 = vshll.u32 %v543, 16
      %v738 = vrot.slane %v736, 1
      %v739 = vor.u32 %v734, %v738
      %v741 = vshll.u32 %v615, 16
      %v743 = vrot.slane %v741, 1
      %v744 = vsel %vm624, %v739, %v743
      %v746 = vshrl.u32 %v544, 16
      %v748 = vshll.u32 %v544, 16
      %v750 = vrot.slane %v748, 1
      %v751 = vor.u32 %v746, %v750
      %v753 = vshll.u32 %v616, 16
      %v755 = vrot.slane %v753, 1
      %v756 = vsel %vm624, %v751, %v755
      %v758 = vshrl.u32 %v545, 16
      %v760 = vshll.u32 %v545, 16
      %v762 = vrot.slane %v760, 1
      %v763 = vor.u32 %v758, %v762
      %v765 = vshll.u32 %v617, 16
      %v767 = vrot.slane %v765, 1
      %v768 = vsel %vm624, %v763, %v767
      %v770 = vshrl.u32 %v546, 16
      %v772 = vshll.u32 %v546, 16
      %v774 = vrot.slane %v772, 1
      %v775 = vor.u32 %v770, %v774
      %v777 = vshll.u32 %v618, 16
      %v779 = vrot.slane %v777, 1
      %v780 = vsel %vm624, %v775, %v779
      %v782 = vshrl.u32 %v547, 16
      %v784 = vshll.u32 %v547, 16
      %v786 = vrot.slane %v784, 1
      %v787 = vor.u32 %v782, %v786
      %v789 = vshll.u32 %v619, 16
      %v791 = vrot.slane %v789, 1
      %v792 = vsel %vm624, %v787, %v791
      %v794 = vshrl.u32 %v548, 16
      %v796 = vshll.u32 %v548, 16
      %v798 = vrot.slane %v796, 1
      %v799 = vor.u32 %v794, %v798
      %v801 = vshll.u32 %v620, 16
      %v803 = vrot.slane %v801, 1
      %v804 = vsel %vm624, %v799, %v803
      %v806 = vshrl.u32 %v549, 16
      %v808 = vshll.u32 %v549, 16
      %v810 = vrot.slane %v808, 1
      %v811 = vor.u32 %v806, %v810
      %v813 = vshll.u32 %v621, 16
      %v815 = vrot.slane %v813, 1
      %v816 = vsel %vm624, %v811, %v815
      %v818 = vshrl.u32 %v550, 16
      %v820 = vshll.u32 %v550, 16
      %v822 = vrot.slane %v820, 1
      %v823 = vor.u32 %v818, %v822
      %v825 = vshll.u32 %v622, 16
      %v827 = vrot.slane %v825, 1
      %v828 = vsel %vm624, %v823, %v827
      %v830 = vshrl.u32 %v551, 16
      %v832 = vshll.u32 %v551, 16
      %v834 = vrot.slane %v832, 1
      %v835 = vor.u32 %v830, %v834
      %v837 = vshll.u32 %v623, 16
      %v839 = vrot.slane %v837, 1
      %v840 = vsel %vm624, %v835, %v839
      %vm859 = vcmask 1046528
      %v860 = vrot.slane %v534, 1
      %v861 = vrot.slane %v606, 1
      %v862 = vsel %vm859, %v860, %v861
      %v863 = vrot.slane %v535, 1
      %v864 = vrot.slane %v607, 1
      %v865 = vsel %vm859, %v863, %v864
      %v866 = vrot.slane %v536, 1
      %v867 = vrot.slane %v608, 1
      %v868 = vsel %vm859, %v866, %v867
      %v869 = vrot.slane %v537, 1
      %v870 = vrot.slane %v609, 1
      %v871 = vsel %vm859, %v869, %v870
      %v872 = vrot.slane %v538, 1
      %v873 = vrot.slane %v610, 1
      %v874 = vsel %vm859, %v872, %v873
      %v875 = vrot.slane %v539, 1
      %v876 = vrot.slane %v611, 1
      %v877 = vsel %vm859, %v875, %v876
      %v878 = vrot.slane %v540, 1
      %v879 = vrot.slane %v612, 1
      %v880 = vsel %vm859, %v878, %v879
      %v881 = vrot.slane %v541, 1
      %v882 = vrot.slane %v613, 1
      %v883 = vsel %vm859, %v881, %v882
      %v884 = vrot.slane %v542, 1
      %v885 = vrot.slane %v614, 1
      %v886 = vsel %vm859, %v884, %v885
      %v887 = vrot.slane %v543, 1
      %v888 = vrot.slane %v615, 1
      %v889 = vsel %vm859, %v887, %v888
      %v890 = vrot.slane %v544, 1
      %v891 = vrot.slane %v616, 1
      %v892 = vsel %vm859, %v890, %v891
      %v893 = vrot.slane %v545, 1
      %v894 = vrot.slane %v617, 1
      %v895 = vsel %vm859, %v893, %v894
      %v896 = vrot.slane %v546, 1
      %v897 = vrot.slane %v618, 1
      %v898 = vsel %vm859, %v896, %v897
      %v899 = vrot.slane %v547, 1
      %v900 = vrot.slane %v619, 1
      %v901 = vsel %vm859, %v899, %v900
      %v902 = vrot.slane %v548, 1
      %v903 = vrot.slane %v620, 1
      %v904 = vsel %vm859, %v902, %v903
      %v905 = vrot.slane %v549, 1
      %v906 = vrot.slane %v621, 1
      %v907 = vsel %vm859, %v905, %v906
      %v908 = vrot.slane %v550, 1
      %v909 = vrot.slane %v622, 1
      %v910 = vsel %vm859, %v908, %v909
      %v911 = vrot.slane %v551, 1
      %v912 = vrot.slane %v623, 1
      %v913 = vsel %vm859, %v911, %v912
      %v932 = vld [vmem:[%s2] sm:$0xf]
      %v933 = vld [vmem:[%s2 + $0x4] sm:$0xf]
      %v934 = vld [vmem:[%s2 + $0x8] sm:$0xf]
      %v935 = vld [vmem:[%s2 + $0xc] sm:$0xf]
      %v936 = vld [vmem:[%s2 + $0x10] sm:$0xf]
      %v937 = vld [vmem:[%s2 + $0x14] sm:$0xf]
      %v938 = vld [vmem:[%s2 + $0x18] sm:$0xf]
      %v939 = vld [vmem:[%s2 + $0x1c] sm:$0xf]
      %v940 = vld [vmem:[%s2 + $0x20] sm:$0xf]
      %v941 = vld [vmem:[%s2 + $0x24] sm:$0xf]
      %v942 = vld [vmem:[%s2 + $0x28] sm:$0xf]
      %v943 = vld [vmem:[%s2 + $0x2c] sm:$0xf]
      %v944 = vld [vmem:[%s2 + $0x30] sm:$0xf]
      %v945 = vld [vmem:[%s2 + $0x34] sm:$0xf]
      %v946 = vld [vmem:[%s2 + $0x38] sm:$0xf]
      %v947 = vld [vmem:[%s2 + $0x3c] sm:$0xf]
      %v948 = vld [vmem:[%s2 + $0x40] sm:$0xf]
      %v949 = vld [vmem:[%s2 + $0x44] sm:$0xf]
      %v950 = vld [vmem:[%s2 + $0x48] sm:$0xf]
      %v951 = vld [vmem:[%s2 + $0x4c] sm:$0xf]
      %v952 = vld [vmem:[%s2 + $0x50] sm:$0xf]
      %v953 = vld [vmem:[%s2 + $0x54] sm:$0xf]
      %v954 = vld [vmem:[%s2 + $0x58] sm:$0xf]
      %v955 = vld [vmem:[%s2 + $0x5c] sm:$0xf]
      %v956 = vld [vmem:[%s2 + $0x60] sm:$0xf]
      %v957 = vld [vmem:[%s2 + $0x64] sm:$0xf]
      %v958 = vld [vmem:[%s2 + $0x68] sm:$0xf]
      %v959 = vld [vmem:[%s2 + $0x6c] sm:$0xf]
      %v960 = vld [vmem:[%s2 + $0x70] sm:$0xf]
      %v961 = vld [vmem:[%s2 + $0x74] sm:$0xf]
      %v962 = vld [vmem:[%s2 + $0x78] sm:$0xf]
      %v963 = vld [vmem:[%s2 + $0x7c] sm:$0xf]
      %v964 = vld [vmem:[%s2 + $0x80] sm:$0xf]
      %v965 = vld [vmem:[%s2 + $0x84] sm:$0xf]
      %v966 = vld [vmem:[%s2 + $0x88] sm:$0xf]
      %v967 = vld [vmem:[%s2 + $0x8c] sm:$0xf]
      %v968 = vld [vmem:[%s2 + $0x90] sm:$0xf]
      %v969 = vld [vmem:[%s2 + $0x94] sm:$0xf]
      %v970 = vld [vmem:[%s2 + $0x98] sm:$0xf]
      %v971 = vld [vmem:[%s2 + $0x9c] sm:$0xf]
      %v972 = vld [vmem:[%s2 + $0xa0] sm:$0xf]
      %v973 = vld [vmem:[%s2 + $0xa4] sm:$0xf]
      %v974 = vld [vmem:[%s2 + $0xa8] sm:$0xf]
      %v975 = vld [vmem:[%s2 + $0xac] sm:$0xf]
      %v976 = vld [vmem:[%s2 + $0xb0] sm:$0xf]
      %v977 = vld [vmem:[%s2 + $0xb4] sm:$0xf]
      %v978 = vld [vmem:[%s2 + $0xb8] sm:$0xf]
      %v979 = vld [vmem:[%s2 + $0xbc] sm:$0xf]
      %v982 = vunpack.c.l.b16 %v456
      %v983 = vunpack.c.l.b16 %v457
      %v984 = vpack.c.b16 %v983, %v982
      %v987 = vunpack.c.l.b16 %v458
      %v988 = vpack.c.b16 %v987, %v987
      %v990 = vshrl.u32 %v984, 16
      %v992 = vshll.u32 %v984, 16
      %v994 = vrot.slane %v992, 1
      %v995 = vor.u32 %v990, %v994
      %v997 = vshll.u32 %v988, 16
      %v999 = vrot.slane %v997, 1
      %v1000 = vsel %vm624, %v995, %v999
      %v1002 = vrot.slane %v984, 1
      %v1003 = vrot.slane %v988, 1
      %v1004 = vsel %vm859, %v1002, %v1003
      %s1006 = scalar_lea.vmem %s2, 192
      %v1007 = vld [vmem:[%s1006] sm:$0xf]
      %v1008 = vld [vmem:[%s1006 + $0x4] sm:$0xf]
      %v1009 = vld [vmem:[%s1006 + $0x8] sm:$0xf]
      %v1010 = vld [vmem:[%s1006 + $0xc] sm:$0xf]
      %v1011 = vld [vmem:[%s1006 + $0x10] sm:$0xf]
      %v1012 = vld [vmem:[%s1006 + $0x14] sm:$0xf]
      %v1013 = vld [vmem:[%s1006 + $0x18] sm:$0xf]
      %v1014 = vld [vmem:[%s1006 + $0x1c] sm:$0xf]
      %v1015 = vld [vmem:[%s1006 + $0x20] sm:$0xf]
      %v1016 = vld [vmem:[%s1006 + $0x24] sm:$0xf]
      %v1017 = vld [vmem:[%s1006 + $0x28] sm:$0xf]
      %v1018 = vld [vmem:[%s1006 + $0x2c] sm:$0xf]
      %v1019 = vld [vmem:[%s1006 + $0x30] sm:$0xf]
      %v1020 = vld [vmem:[%s1006 + $0x34] sm:$0xf]
      %v1021 = vld [vmem:[%s1006 + $0x38] sm:$0xf]
      %v1022 = vld [vmem:[%s1006 + $0x3c] sm:$0xf]
      %v1023 = vld [vmem:[%s1006 + $0x40] sm:$0xf]
      %v1024 = vld [vmem:[%s1006 + $0x44] sm:$0xf]
      %v1025 = vld [vmem:[%s1006 + $0x48] sm:$0xf]
      %v1026 = vld [vmem:[%s1006 + $0x4c] sm:$0xf]
      %v1027 = vld [vmem:[%s1006 + $0x50] sm:$0xf]
      %v1028 = vld [vmem:[%s1006 + $0x54] sm:$0xf]
      %v1029 = vld [vmem:[%s1006 + $0x58] sm:$0xf]
      %v1030 = vld [vmem:[%s1006 + $0x5c] sm:$0xf]
      %v1031 = vld [vmem:[%s1006 + $0x60] sm:$0xf]
      %v1032 = vld [vmem:[%s1006 + $0x64] sm:$0xf]
      %v1033 = vld [vmem:[%s1006 + $0x68] sm:$0xf]
      %v1034 = vld [vmem:[%s1006 + $0x6c] sm:$0xf]
      %v1035 = vld [vmem:[%s1006 + $0x70] sm:$0xf]
      %v1036 = vld [vmem:[%s1006 + $0x74] sm:$0xf]
      %v1037 = vld [vmem:[%s1006 + $0x78] sm:$0xf]
      %v1038 = vld [vmem:[%s1006 + $0x7c] sm:$0xf]
      %v1039 = vld [vmem:[%s1006 + $0x80] sm:$0xf]
      %v1040 = vld [vmem:[%s1006 + $0x84] sm:$0xf]
      %v1041 = vld [vmem:[%s1006 + $0x88] sm:$0xf]
      %v1042 = vld [vmem:[%s1006 + $0x8c] sm:$0xf]
      %v1043 = vld [vmem:[%s1006 + $0x90] sm:$0xf]
      %v1044 = vld [vmem:[%s1006 + $0x94] sm:$0xf]
      %v1045 = vld [vmem:[%s1006 + $0x98] sm:$0xf]
      %v1046 = vld [vmem:[%s1006 + $0x9c] sm:$0xf]
      %v1047 = vld [vmem:[%s1006 + $0xa0] sm:$0xf]
      %v1048 = vld [vmem:[%s1006 + $0xa4] sm:$0xf]
      %v1049 = vld [vmem:[%s1006 + $0xa8] sm:$0xf]
      %v1050 = vld [vmem:[%s1006 + $0xac] sm:$0xf]
      %v1051 = vld [vmem:[%s1006 + $0xb0] sm:$0xf]
      %v1052 = vld [vmem:[%s1006 + $0xb4] sm:$0xf]
      %v1053 = vld [vmem:[%s1006 + $0xb8] sm:$0xf]
      %v1054 = vld [vmem:[%s1006 + $0xbc] sm:$0xf]
      %v1103 = vunpack.c.l.b16 %v1007
      %v1104 = vunpack.c.l.b16 %v1008
      %v1105 = vunpack.c.l.b16 %v1009
      %v1106 = vunpack.c.l.b16 %v1010
      %v1107 = vunpack.c.l.b16 %v1011
      %v1108 = vunpack.c.l.b16 %v1012
      %v1109 = vunpack.c.l.b16 %v1013
      %v1110 = vunpack.c.l.b16 %v1014
      %v1111 = vunpack.c.l.b16 %v1015
      %v1112 = vunpack.c.l.b16 %v1016
      %v1113 = vunpack.c.l.b16 %v1017
      %v1114 = vunpack.c.l.b16 %v1018
      %v1115 = vunpack.c.l.b16 %v1019
      %v1116 = vunpack.c.l.b16 %v1020
      %v1117 = vunpack.c.l.b16 %v1021
      %v1118 = vunpack.c.l.b16 %v1022
      %v1119 = vunpack.c.l.b16 %v1023
      %v1120 = vunpack.c.l.b16 %v1024
      %v1121 = vunpack.c.l.b16 %v1025
      %v1122 = vunpack.c.l.b16 %v1026
      %v1123 = vunpack.c.l.b16 %v1027
      %v1124 = vunpack.c.l.b16 %v1028
      %v1125 = vunpack.c.l.b16 %v1029
      %v1126 = vunpack.c.l.b16 %v1030
      %v1127 = vunpack.c.l.b16 %v1031
      %v1128 = vunpack.c.l.b16 %v1032
      %v1129 = vunpack.c.l.b16 %v1033
      %v1130 = vunpack.c.l.b16 %v1034
      %v1131 = vunpack.c.l.b16 %v1035
      %v1132 = vunpack.c.l.b16 %v1036
      %v1133 = vunpack.c.l.b16 %v1037
      %v1134 = vunpack.c.l.b16 %v1038
      %v1135 = vunpack.c.l.b16 %v1039
      %v1136 = vunpack.c.l.b16 %v1040
      %v1137 = vunpack.c.l.b16 %v1041
      %v1138 = vunpack.c.l.b16 %v1042
      %v1139 = vunpack.c.l.b16 %v1043
      %v1140 = vunpack.c.l.b16 %v1044
      %v1141 = vunpack.c.l.b16 %v1045
      %v1142 = vunpack.c.l.b16 %v1046
      %v1143 = vunpack.c.l.b16 %v1047
      %v1144 = vunpack.c.l.b16 %v1048
      %v1145 = vunpack.c.l.b16 %v1049
      %v1146 = vunpack.c.l.b16 %v1050
      %v1147 = vunpack.c.l.b16 %v1051
      %v1148 = vunpack.c.l.b16 %v1052
      %v1149 = vunpack.c.l.b16 %v1053
      %v1150 = vunpack.c.l.b16 %v1054
      %v1151 = vpack.c.b16 %v1104, %v1103
      %v1152 = vpack.c.b16 %v1106, %v1105
      %v1153 = vpack.c.b16 %v1108, %v1107
      %v1154 = vpack.c.b16 %v1110, %v1109
      %v1155 = vpack.c.b16 %v1112, %v1111
      %v1156 = vpack.c.b16 %v1114, %v1113
      %v1157 = vpack.c.b16 %v1116, %v1115
      %v1158 = vpack.c.b16 %v1118, %v1117
      %v1159 = vpack.c.b16 %v1120, %v1119
      %v1160 = vpack.c.b16 %v1122, %v1121
      %v1161 = vpack.c.b16 %v1124, %v1123
      %v1162 = vpack.c.b16 %v1126, %v1125
      %v1163 = vpack.c.b16 %v1128, %v1127
      %v1164 = vpack.c.b16 %v1130, %v1129
      %v1165 = vpack.c.b16 %v1132, %v1131
      %v1166 = vpack.c.b16 %v1134, %v1133
      %v1167 = vpack.c.b16 %v1136, %v1135
      %v1168 = vpack.c.b16 %v1138, %v1137
      %v1169 = vpack.c.b16 %v1140, %v1139
      %v1170 = vpack.c.b16 %v1142, %v1141
      %v1171 = vpack.c.b16 %v1144, %v1143
      %v1172 = vpack.c.b16 %v1146, %v1145
      %v1173 = vpack.c.b16 %v1148, %v1147
      %v1174 = vpack.c.b16 %v1150, %v1149
      %1199 = vmatprep.subr.bf16.mxu0 0
      %1200 = vmatpush1.bf16.msra.mxu0 %v1158
      %1201 = vmatprep.subr.bf16.mxu0 0
      %1202 = vmatpush1.bf16.msra.mxu0 %v1157
      %1203 = vmatprep.subr.bf16.mxu0 0
      %1204 = vmatpush1.bf16.msra.mxu0 %v1156
      %1205 = vmatprep.subr.bf16.mxu0 0
      %1206 = vmatpush1.bf16.msra.mxu0 %v1155
      %1207 = vmatprep.subr.bf16.mxu0 0
      %1208 = vmatpush1.bf16.msra.mxu0 %v1154
      %1209 = vmatprep.subr.bf16.mxu0 0
      %1210 = vmatpush1.bf16.msra.mxu0 %v1153
      %1211 = vmatprep.subr.bf16.mxu0 0
      %1212 = vmatpush1.bf16.msra.mxu0 %v1152
      %1213 = vmatprep.subr.bf16.mxu0 0
      %1214 = vmatpush1.bf16.msra.mxu0 %v1151
      %1215 = vmatprep.subr.bf16.mxu0 0
      %1216 = vmatpush2.bf16.msra.mxu0 %v1166
      %1217 = vmatprep.subr.bf16.mxu0 0
      %1218 = vmatpush2.bf16.msra.mxu0 %v1165
      %1219 = vmatprep.subr.bf16.mxu0 0
      %1220 = vmatpush2.bf16.msra.mxu0 %v1164
      %1221 = vmatprep.subr.bf16.mxu0 0
      %1222 = vmatpush2.bf16.msra.mxu0 %v1163
      %1223 = vmatprep.subr.bf16.mxu0 0
      %1224 = vmatpush2.bf16.msra.mxu0 %v1162
      %1225 = vmatprep.subr.bf16.mxu0 0
      %1226 = vmatpush2.bf16.msra.mxu0 %v1161
      %1227 = vmatprep.subr.bf16.mxu0 0
      %1228 = vmatpush2.bf16.msra.mxu0 %v1160
      %1229 = vmatprep.subr.bf16.mxu0 0
      %1230 = vmatpush2.bf16.msra.mxu0 %v1159
      %1231 = vmatprep.mubr.bf16.mxu0 %v648
      %1232 = vmatmul.mubr.bf16.gmra.mxu0 %v535
      %v1233 = vpop.f32.mrf.mxu0
      %v1234 = vadd.f32 0.0, %v1233
      %v1235 = vpop.f32.mrf.mxu0
      %v1236 = vpop.f32.mrf.mxu0
      %v1237 = vadd.f32 0.0, %v1236
      %v1238 = vpop.f32.mrf.mxu0
      %1239 = vmatprep.mubr.bf16.mxu0 %v660
      %1240 = vmatmul.mubr.bf16.gmra.mxu0 %v536
      %v1241 = vpop.f32.mrf.mxu0
      %v1242 = vadd.f32 0.0, %v1241
      %v1243 = vpop.f32.mrf.mxu0
      %v1244 = vpop.f32.mrf.mxu0
      %v1245 = vadd.f32 0.0, %v1244
      %v1246 = vpop.f32.mrf.mxu0
      %1247 = vmatprep.mubr.bf16.mxu0 %v672
      %1248 = vmatmul.mubr.bf16.gmra.mxu0 %v537
      %v1249 = vpop.f32.mrf.mxu0
      %v1250 = vadd.f32 0.0, %v1249
      %v1251 = vpop.f32.mrf.mxu0
      %v1252 = vpop.f32.mrf.mxu0
      %v1253 = vadd.f32 0.0, %v1252
      %v1254 = vpop.f32.mrf.mxu0
      %1255 = vmatprep.mubr.bf16.mxu0 %v684
      %1256 = vmatmul.mubr.bf16.gmra.mxu0 %v538
      %v1257 = vpop.f32.mrf.mxu0
      %v1258 = vadd.f32 0.0, %v1257
      %v1259 = vpop.f32.mrf.mxu0
      %v1260 = vpop.f32.mrf.mxu0
      %v1261 = vadd.f32 0.0, %v1260
      %v1262 = vpop.f32.mrf.mxu0
      %1263 = vmatprep.mubr.bf16.mxu0 %v696
      %1264 = vmatmul.mubr.bf16.gmra.mxu0 %v539
      %v1265 = vpop.f32.mrf.mxu0
      %v1266 = vadd.f32 0.0, %v1265
      %v1267 = vpop.f32.mrf.mxu0
      %v1268 = vpop.f32.mrf.mxu0
      %v1269 = vadd.f32 0.0, %v1268
      %v1270 = vpop.f32.mrf.mxu0
      %1271 = vmatprep.mubr.bf16.mxu0 %v708
      %1272 = vmatmul.mubr.bf16.gmra.mxu0 %v540
      %v1273 = vpop.f32.mrf.mxu0
      %v1274 = vadd.f32 0.0, %v1273
      %v1275 = vpop.f32.mrf.mxu0
      %v1276 = vpop.f32.mrf.mxu0
      %v1277 = vadd.f32 0.0, %v1276
      %v1278 = vpop.f32.mrf.mxu0
      %1279 = vmatprep.mubr.bf16.mxu0 %v720
      %1280 = vmatmul.mubr.bf16.gmra.mxu0 %v541
      %v1281 = vpop.f32.mrf.mxu0
      %v1282 = vadd.f32 0.0, %v1281
      %v1283 = vpop.f32.mrf.mxu0
      %v1284 = vpop.f32.mrf.mxu0
      %v1285 = vadd.f32 0.0, %v1284
      %v1286 = vpop.f32.mrf.mxu0
      %1287 = vmatprep.mubr.bf16.mxu0 %v732
      %1288 = vmatmul.mubr.bf16.gmra.mxu0 %v542
      %v1289 = vpop.f32.mrf.mxu0
      %v1290 = vadd.f32 0.0, %v1289
      %v1291 = vpop.f32.mrf.mxu0
      %v1292 = vpop.f32.mrf.mxu0
      %v1293 = vadd.f32 0.0, %v1292
      %v1294 = vpop.f32.mrf.mxu0
      %1295 = vmatprep.mubr.bf16.mxu0 %v744
      %1296 = vmatmul.mubr.bf16.gmra.mxu0 %v543
      %v1297 = vpop.f32.mrf.mxu0
      %v1298 = vadd.f32 0.0, %v1297
      %v1299 = vpop.f32.mrf.mxu0
      %v1300 = vpop.f32.mrf.mxu0
      %v1301 = vadd.f32 0.0, %v1300
      %v1302 = vpop.f32.mrf.mxu0
      %1303 = vmatprep.mubr.bf16.mxu0 %v756
      %1304 = vmatmul.mubr.bf16.gmra.mxu0 %v544
      %v1305 = vpop.f32.mrf.mxu0
      %v1306 = vadd.f32 0.0, %v1305
      %v1307 = vpop.f32.mrf.mxu0
      %v1308 = vpop.f32.mrf.mxu0
      %v1309 = vadd.f32 0.0, %v1308
      %v1310 = vpop.f32.mrf.mxu0
      %1311 = vmatprep.mubr.bf16.mxu0 %v768
      %1312 = vmatmul.mubr.bf16.gmra.mxu0 %v545
      %v1313 = vpop.f32.mrf.mxu0
      %v1314 = vadd.f32 0.0, %v1313
      %v1315 = vpop.f32.mrf.mxu0
      %v1316 = vpop.f32.mrf.mxu0
      %v1317 = vadd.f32 0.0, %v1316
      %v1318 = vpop.f32.mrf.mxu0
      %1319 = vmatprep.mubr.bf16.mxu0 %v780
      %1320 = vmatmul.mubr.bf16.gmra.mxu0 %v546
      %v1321 = vpop.f32.mrf.mxu0
      %v1322 = vadd.f32 0.0, %v1321
      %v1323 = vpop.f32.mrf.mxu0
      %v1324 = vpop.f32.mrf.mxu0
      %v1325 = vadd.f32 0.0, %v1324
      %v1326 = vpop.f32.mrf.mxu0
      %1327 = vmatprep.mubr.bf16.mxu0 %v792
      %1328 = vmatmul.mubr.bf16.gmra.mxu0 %v547
      %v1329 = vpop.f32.mrf.mxu0
      %v1330 = vadd.f32 0.0, %v1329
      %v1331 = vpop.f32.mrf.mxu0
      %v1332 = vpop.f32.mrf.mxu0
      %v1333 = vadd.f32 0.0, %v1332
      %v1334 = vpop.f32.mrf.mxu0
      %1335 = vmatprep.mubr.bf16.mxu0 %v804
      %1336 = vmatmul.mubr.bf16.gmra.mxu0 %v548
      %v1337 = vpop.f32.mrf.mxu0
      %v1338 = vadd.f32 0.0, %v1337
      %v1339 = vpop.f32.mrf.mxu0
      %v1340 = vpop.f32.mrf.mxu0
      %v1341 = vadd.f32 0.0, %v1340
      %v1342 = vpop.f32.mrf.mxu0
      %1343 = vmatprep.mubr.bf16.mxu0 %v816
      %1344 = vmatmul.mubr.bf16.gmra.mxu0 %v549
      %v1345 = vpop.f32.mrf.mxu0
      %v1346 = vadd.f32 0.0, %v1345
      %v1347 = vpop.f32.mrf.mxu0
      %v1348 = vpop.f32.mrf.mxu0
      %v1349 = vadd.f32 0.0, %v1348
      %v1350 = vpop.f32.mrf.mxu0
      %1351 = vmatprep.mubr.bf16.mxu0 %v828
      %1352 = vmatmul.mubr.bf16.gmra.mxu0 %v550
      %v1353 = vpop.f32.mrf.mxu0
      %v1354 = vadd.f32 0.0, %v1353
      %v1355 = vpop.f32.mrf.mxu0
      %v1356 = vpop.f32.mrf.mxu0
      %v1357 = vadd.f32 0.0, %v1356
      %v1358 = vpop.f32.mrf.mxu0
      %1359 = vmatprep.mubr.bf16.mxu0 %v840
      %1360 = vmatmul.mubr.bf16.gmra.mxu0 %v551
      %v1361 = vpop.f32.mrf.mxu0
      %v1362 = vadd.f32 0.0, %v1361
      %v1363 = vpop.f32.mrf.mxu0
      %v1364 = vpop.f32.mrf.mxu0
      %v1365 = vadd.f32 0.0, %v1364
      %v1366 = vpop.f32.mrf.mxu0
      %1367 = vmatprep.mubr.bf16.mxu0 %v1000
      %1368 = vmatmul.mubr.bf16.gmra.mxu0 %v984
      %v1369 = vpop.f32.mrf.mxu0
      %v1370 = vadd.f32 0.0, %v1369
      %v1371 = vpop.f32.mrf.mxu0
      %v1372 = vpop.f32.mrf.mxu0
      %v1373 = vadd.f32 0.0, %v1372
      %v1374 = vpop.f32.mrf.mxu0
      %1375 = vdwg.mxu0
      %1376 = vmatprep.subr.bf16.mxu0 0
      %1377 = vmatpush1.bf16.msra.mxu0 %v1174
      %1378 = vmatprep.subr.bf16.mxu0 0
      %1379 = vmatpush1.bf16.msra.mxu0 %v1173
      %1380 = vmatprep.subr.bf16.mxu0 0
      %1381 = vmatpush1.bf16.msra.mxu0 %v1172
      %1382 = vmatprep.subr.bf16.mxu0 0
      %1383 = vmatpush1.bf16.msra.mxu0 %v1171
      %1384 = vmatprep.subr.bf16.mxu0 0
      %1385 = vmatpush1.bf16.msra.mxu0 %v1170
      %1386 = vmatprep.subr.bf16.mxu0 0
      %1387 = vmatpush1.bf16.msra.mxu0 %v1169
      %1388 = vmatprep.subr.bf16.mxu0 0
      %1389 = vmatpush1.bf16.msra.mxu0 %v1168
      %1390 = vmatprep.subr.bf16.mxu0 0
      %1391 = vmatpush1.bf16.msra.mxu0 %v1167
      %1392 = vmatprep.subr.bf16.mxu0 0
      %1393 = vmatpush2.bf16.msra.mxu0 0
      %1394 = vmatprep.subr.bf16.mxu0 0
      %1395 = vmatpush2.bf16.msra.mxu0 0
      %1396 = vmatprep.subr.bf16.mxu0 0
      %1397 = vmatpush2.bf16.msra.mxu0 0
      %1398 = vmatprep.subr.bf16.mxu0 0
      %1399 = vmatpush2.bf16.msra.mxu0 0
      %1400 = vmatprep.subr.bf16.mxu0 0
      %1401 = vmatpush2.bf16.msra.mxu0 0
      %1402 = vmatprep.subr.bf16.mxu0 0
      %1403 = vmatpush2.bf16.msra.mxu0 0
      %1404 = vmatprep.subr.bf16.mxu0 0
      %1405 = vmatpush2.bf16.msra.mxu0 0
      %1406 = vmatprep.subr.bf16.mxu0 0
      %1407 = vmatpush2.bf16.msra.mxu0 0
      %1408 = vmatprep.mubr.bf16.mxu0 0
      %1409 = vmatmul.mubr.bf16.gmra.mxu0 %v865
      %v1410 = vpop.f32.mrf.mxu0
      %v1411 = vadd.f32 %v1234, %v1410
      %v1412 = vpop.f32.mrf.mxu0
      %v1413 = vpop.f32.mrf.mxu0
      %v1414 = vadd.f32 %v1237, %v1413
      %v1415 = vpop.f32.mrf.mxu0
      %1416 = vmatprep.mubr.bf16.mxu0 0
      %1417 = vmatmul.mubr.bf16.gmra.mxu0 %v868
      %v1418 = vpop.f32.mrf.mxu0
      %v1419 = vadd.f32 %v1242, %v1418
      %v1420 = vpop.f32.mrf.mxu0
      %v1421 = vpop.f32.mrf.mxu0
      %v1422 = vadd.f32 %v1245, %v1421
      %v1423 = vpop.f32.mrf.mxu0
      %1424 = vmatprep.mubr.bf16.mxu0 0
      %1425 = vmatmul.mubr.bf16.gmra.mxu0 %v871
      %v1426 = vpop.f32.mrf.mxu0
      %v1427 = vadd.f32 %v1250, %v1426
      %v1428 = vpop.f32.mrf.mxu0
      %v1429 = vpop.f32.mrf.mxu0
      %v1430 = vadd.f32 %v1253, %v1429
      %v1431 = vpop.f32.mrf.mxu0
      %1432 = vmatprep.mubr.bf16.mxu0 0
      %1433 = vmatmul.mubr.bf16.gmra.mxu0 %v874
      %v1434 = vpop.f32.mrf.mxu0
      %v1435 = vadd.f32 %v1258, %v1434
      %v1436 = vpop.f32.mrf.mxu0
      %v1437 = vpop.f32.mrf.mxu0
      %v1438 = vadd.f32 %v1261, %v1437
      %v1439 = vpop.f32.mrf.mxu0
      %1440 = vmatprep.mubr.bf16.mxu0 0
      %1441 = vmatmul.mubr.bf16.gmra.mxu0 %v877
      %v1442 = vpop.f32.mrf.mxu0
      %v1443 = vadd.f32 %v1266, %v1442
      %v1444 = vpop.f32.mrf.mxu0
      %v1445 = vpop.f32.mrf.mxu0
      %v1446 = vadd.f32 %v1269, %v1445
      %v1447 = vpop.f32.mrf.mxu0
      %1448 = vmatprep.mubr.bf16.mxu0 0
      %1449 = vmatmul.mubr.bf16.gmra.mxu0 %v880
      %v1450 = vpop.f32.mrf.mxu0
      %v1451 = vadd.f32 %v1274, %v1450
      %v1452 = vpop.f32.mrf.mxu0
      %v1453 = vpop.f32.mrf.mxu0
      %v1454 = vadd.f32 %v1277, %v1453
      %v1455 = vpop.f32.mrf.mxu0
      %1456 = vmatprep.mubr.bf16.mxu0 0
      %1457 = vmatmul.mubr.bf16.gmra.mxu0 %v883
      %v1458 = vpop.f32.mrf.mxu0
      %v1459 = vadd.f32 %v1282, %v1458
      %v1460 = vpop.f32.mrf.mxu0
      %v1461 = vpop.f32.mrf.mxu0
      %v1462 = vadd.f32 %v1285, %v1461
      %v1463 = vpop.f32.mrf.mxu0
      %1464 = vmatprep.mubr.bf16.mxu0 0
      %1465 = vmatmul.mubr.bf16.gmra.mxu0 %v886
      %v1466 = vpop.f32.mrf.mxu0
      %v1467 = vadd.f32 %v1290, %v1466
      %v1468 = vpop.f32.mrf.mxu0
      %v1469 = vpop.f32.mrf.mxu0
      %v1470 = vadd.f32 %v1293, %v1469
      %v1471 = vpop.f32.mrf.mxu0
      %1472 = vmatprep.mubr.bf16.mxu0 0
      %1473 = vmatmul.mubr.bf16.gmra.mxu0 %v889
      %v1474 = vpop.f32.mrf.mxu0
      %v1475 = vadd.f32 %v1298, %v1474
      %v1476 = vpop.f32.mrf.mxu0
      %v1477 = vpop.f32.mrf.mxu0
      %v1478 = vadd.f32 %v1301, %v1477
      %v1479 = vpop.f32.mrf.mxu0
      %1480 = vmatprep.mubr.bf16.mxu0 0
      %1481 = vmatmul.mubr.bf16.gmra.mxu0 %v892
      %v1482 = vpop.f32.mrf.mxu0
      %v1483 = vadd.f32 %v1306, %v1482
      %v1484 = vpop.f32.mrf.mxu0
      %v1485 = vpop.f32.mrf.mxu0
      %v1486 = vadd.f32 %v1309, %v1485
      %v1487 = vpop.f32.mrf.mxu0
      %1488 = vmatprep.mubr.bf16.mxu0 0
      %1489 = vmatmul.mubr.bf16.gmra.mxu0 %v895
      %v1490 = vpop.f32.mrf.mxu0
      %v1491 = vadd.f32 %v1314, %v1490
      %v1492 = vpop.f32.mrf.mxu0
      %v1493 = vpop.f32.mrf.mxu0
      %v1494 = vadd.f32 %v1317, %v1493
      %v1495 = vpop.f32.mrf.mxu0
      %1496 = vmatprep.mubr.bf16.mxu0 0
      %1497 = vmatmul.mubr.bf16.gmra.mxu0 %v898
      %v1498 = vpop.f32.mrf.mxu0
      %v1499 = vadd.f32 %v1322, %v1498
      %v1500 = vpop.f32.mrf.mxu0
      %v1501 = vpop.f32.mrf.mxu0
      %v1502 = vadd.f32 %v1325, %v1501
      %v1503 = vpop.f32.mrf.mxu0
      %1504 = vmatprep.mubr.bf16.mxu0 0
      %1505 = vmatmul.mubr.bf16.gmra.mxu0 %v901
      %v1506 = vpop.f32.mrf.mxu0
      %v1507 = vadd.f32 %v1330, %v1506
      %v1508 = vpop.f32.mrf.mxu0
      %v1509 = vpop.f32.mrf.mxu0
      %v1510 = vadd.f32 %v1333, %v1509
      %v1511 = vpop.f32.mrf.mxu0
      %1512 = vmatprep.mubr.bf16.mxu0 0
      %1513 = vmatmul.mubr.bf16.gmra.mxu0 %v904
      %v1514 = vpop.f32.mrf.mxu0
      %v1515 = vadd.f32 %v1338, %v1514
      %v1516 = vpop.f32.mrf.mxu0
      %v1517 = vpop.f32.mrf.mxu0
      %v1518 = vadd.f32 %v1341, %v1517
      %v1519 = vpop.f32.mrf.mxu0
      %1520 = vmatprep.mubr.bf16.mxu0 0
      %1521 = vmatmul.mubr.bf16.gmra.mxu0 %v907
      %v1522 = vpop.f32.mrf.mxu0
      %v1523 = vadd.f32 %v1346, %v1522
      %v1524 = vpop.f32.mrf.mxu0
      %v1525 = vpop.f32.mrf.mxu0
      %v1526 = vadd.f32 %v1349, %v1525
      %v1527 = vpop.f32.mrf.mxu0
      %1528 = vmatprep.mubr.bf16.mxu0 0
      %1529 = vmatmul.mubr.bf16.gmra.mxu0 %v910
      %v1530 = vpop.f32.mrf.mxu0
      %v1531 = vadd.f32 %v1354, %v1530
      %v1532 = vpop.f32.mrf.mxu0
      %v1533 = vpop.f32.mrf.mxu0
      %v1534 = vadd.f32 %v1357, %v1533
      %v1535 = vpop.f32.mrf.mxu0
      %1536 = vmatprep.mubr.bf16.mxu0 0
      %1537 = vmatmul.mubr.bf16.gmra.mxu0 %v913
      %v1538 = vpop.f32.mrf.mxu0
      %v1539 = vadd.f32 %v1362, %v1538
      %v1540 = vpop.f32.mrf.mxu0
      %v1541 = vpop.f32.mrf.mxu0
      %v1542 = vadd.f32 %v1365, %v1541
      %v1543 = vpop.f32.mrf.mxu0
      %1544 = vmatprep.mubr.bf16.mxu0 0
      %1545 = vmatmul.mubr.bf16.gmra.mxu0 %v1004
      %v1546 = vpop.f32.mrf.mxu0
      %v1547 = vadd.f32 %v1370, %v1546
      %v1548 = vpop.f32.mrf.mxu0
      %v1549 = vpop.f32.mrf.mxu0
      %v1550 = vadd.f32 %v1373, %v1549
      %v1551 = vpop.f32.mrf.mxu0
      %1552 = vdwg.mxu0
      %v1601 = vunpack.c.l.b16 %v932
      %v1602 = vunpack.c.l.b16 %v933
      %v1603 = vunpack.c.l.b16 %v934
      %v1604 = vunpack.c.l.b16 %v935
      %v1605 = vunpack.c.l.b16 %v936
      %v1606 = vunpack.c.l.b16 %v937
      %v1607 = vunpack.c.l.b16 %v938
      %v1608 = vunpack.c.l.b16 %v939
      %v1609 = vunpack.c.l.b16 %v940
      %v1610 = vunpack.c.l.b16 %v941
      %v1611 = vunpack.c.l.b16 %v942
      %v1612 = vunpack.c.l.b16 %v943
      %v1613 = vunpack.c.l.b16 %v944
      %v1614 = vunpack.c.l.b16 %v945
      %v1615 = vunpack.c.l.b16 %v946
      %v1616 = vunpack.c.l.b16 %v947
      %v1617 = vunpack.c.l.b16 %v948
      %v1618 = vunpack.c.l.b16 %v949
      %v1619 = vunpack.c.l.b16 %v950
      %v1620 = vunpack.c.l.b16 %v951
      %v1621 = vunpack.c.l.b16 %v952
      %v1622 = vunpack.c.l.b16 %v953
      %v1623 = vunpack.c.l.b16 %v954
      %v1624 = vunpack.c.l.b16 %v955
      %v1625 = vunpack.c.l.b16 %v956
      %v1626 = vunpack.c.l.b16 %v957
      %v1627 = vunpack.c.l.b16 %v958
      %v1628 = vunpack.c.l.b16 %v959
      %v1629 = vunpack.c.l.b16 %v960
      %v1630 = vunpack.c.l.b16 %v961
      %v1631 = vunpack.c.l.b16 %v962
      %v1632 = vunpack.c.l.b16 %v963
      %v1633 = vunpack.c.l.b16 %v964
      %v1634 = vunpack.c.l.b16 %v965
      %v1635 = vunpack.c.l.b16 %v966
      %v1636 = vunpack.c.l.b16 %v967
      %v1637 = vunpack.c.l.b16 %v968
      %v1638 = vunpack.c.l.b16 %v969
      %v1639 = vunpack.c.l.b16 %v970
      %v1640 = vunpack.c.l.b16 %v971
      %v1641 = vunpack.c.l.b16 %v972
      %v1642 = vunpack.c.l.b16 %v973
      %v1643 = vunpack.c.l.b16 %v974
      %v1644 = vunpack.c.l.b16 %v975
      %v1645 = vunpack.c.l.b16 %v976
      %v1646 = vunpack.c.l.b16 %v977
      %v1647 = vunpack.c.l.b16 %v978
      %v1648 = vunpack.c.l.b16 %v979
      %v1649 = vpack.c.b16 %v1602, %v1601
      %v1650 = vpack.c.b16 %v1604, %v1603
      %v1651 = vpack.c.b16 %v1606, %v1605
      %v1652 = vpack.c.b16 %v1608, %v1607
      %v1653 = vpack.c.b16 %v1610, %v1609
      %v1654 = vpack.c.b16 %v1612, %v1611
      %v1655 = vpack.c.b16 %v1614, %v1613
      %v1656 = vpack.c.b16 %v1616, %v1615
      %v1657 = vpack.c.b16 %v1618, %v1617
      %v1658 = vpack.c.b16 %v1620, %v1619
      %v1659 = vpack.c.b16 %v1622, %v1621
      %v1660 = vpack.c.b16 %v1624, %v1623
      %v1661 = vpack.c.b16 %v1626, %v1625
      %v1662 = vpack.c.b16 %v1628, %v1627
      %v1663 = vpack.c.b16 %v1630, %v1629
      %v1664 = vpack.c.b16 %v1632, %v1631
      %v1665 = vpack.c.b16 %v1634, %v1633
      %v1666 = vpack.c.b16 %v1636, %v1635
      %v1667 = vpack.c.b16 %v1638, %v1637
      %v1668 = vpack.c.b16 %v1640, %v1639
      %v1669 = vpack.c.b16 %v1642, %v1641
      %v1670 = vpack.c.b16 %v1644, %v1643
      %v1671 = vpack.c.b16 %v1646, %v1645
      %v1672 = vpack.c.b16 %v1648, %v1647
      %1697 = vmatprep.subr.bf16.mxu0 0
      %1698 = vmatpush1.bf16.msra.mxu0 %v1656
      %1699 = vmatprep.subr.bf16.mxu0 0
      %1700 = vmatpush1.bf16.msra.mxu0 %v1655
      %1701 = vmatprep.subr.bf16.mxu0 0
      %1702 = vmatpush1.bf16.msra.mxu0 %v1654
      %1703 = vmatprep.subr.bf16.mxu0 0
      %1704 = vmatpush1.bf16.msra.mxu0 %v1653
      %1705 = vmatprep.subr.bf16.mxu0 0
      %1706 = vmatpush1.bf16.msra.mxu0 %v1652
      %1707 = vmatprep.subr.bf16.mxu0 0
      %1708 = vmatpush1.bf16.msra.mxu0 %v1651
      %1709 = vmatprep.subr.bf16.mxu0 0
      %1710 = vmatpush1.bf16.msra.mxu0 %v1650
      %1711 = vmatprep.subr.bf16.mxu0 0
      %1712 = vmatpush1.bf16.msra.mxu0 %v1649
      %1713 = vmatprep.subr.bf16.mxu0 0
      %1714 = vmatpush2.bf16.msra.mxu0 %v1664
      %1715 = vmatprep.subr.bf16.mxu0 0
      %1716 = vmatpush2.bf16.msra.mxu0 %v1663
      %1717 = vmatprep.subr.bf16.mxu0 0
      %1718 = vmatpush2.bf16.msra.mxu0 %v1662
      %1719 = vmatprep.subr.bf16.mxu0 0
      %1720 = vmatpush2.bf16.msra.mxu0 %v1661
      %1721 = vmatprep.subr.bf16.mxu0 0
      %1722 = vmatpush2.bf16.msra.mxu0 %v1660
      %1723 = vmatprep.subr.bf16.mxu0 0
      %1724 = vmatpush2.bf16.msra.mxu0 %v1659
      %1725 = vmatprep.subr.bf16.mxu0 0
      %1726 = vmatpush2.bf16.msra.mxu0 %v1658
      %1727 = vmatprep.subr.bf16.mxu0 0
      %1728 = vmatpush2.bf16.msra.mxu0 %v1657
      %1729 = vmatprep.mubr.bf16.mxu0 %v636
      %1730 = vmatmul.mubr.bf16.gmra.mxu0 %v534
      %v1731 = vpop.f32.mrf.mxu0
      %v1732 = vadd.f32 %v1411, %v1731
      %v1733 = vpop.f32.mrf.mxu0
      %v1734 = vpop.f32.mrf.mxu0
      %v1735 = vadd.f32 %v1414, %v1734
      %v1736 = vpop.f32.mrf.mxu0
      %1737 = vmatprep.mubr.bf16.mxu0 %v648
      %1738 = vmatmul.mubr.bf16.gmra.mxu0 %v535
      %v1739 = vpop.f32.mrf.mxu0
      %v1740 = vadd.f32 %v1419, %v1739
      %v1741 = vpop.f32.mrf.mxu0
      %v1742 = vpop.f32.mrf.mxu0
      %v1743 = vadd.f32 %v1422, %v1742
      %v1744 = vpop.f32.mrf.mxu0
      %1745 = vmatprep.mubr.bf16.mxu0 %v660
      %1746 = vmatmul.mubr.bf16.gmra.mxu0 %v536
      %v1747 = vpop.f32.mrf.mxu0
      %v1748 = vadd.f32 %v1427, %v1747
      %v1749 = vpop.f32.mrf.mxu0
      %v1750 = vpop.f32.mrf.mxu0
      %v1751 = vadd.f32 %v1430, %v1750
      %v1752 = vpop.f32.mrf.mxu0
      %1753 = vmatprep.mubr.bf16.mxu0 %v672
      %1754 = vmatmul.mubr.bf16.gmra.mxu0 %v537
      %v1755 = vpop.f32.mrf.mxu0
      %v1756 = vadd.f32 %v1435, %v1755
      %v1757 = vpop.f32.mrf.mxu0
      %v1758 = vpop.f32.mrf.mxu0
      %v1759 = vadd.f32 %v1438, %v1758
      %v1760 = vpop.f32.mrf.mxu0
      %1761 = vmatprep.mubr.bf16.mxu0 %v684
      %1762 = vmatmul.mubr.bf16.gmra.mxu0 %v538
      %v1763 = vpop.f32.mrf.mxu0
      %v1764 = vadd.f32 %v1443, %v1763
      %v1765 = vpop.f32.mrf.mxu0
      %v1766 = vpop.f32.mrf.mxu0
      %v1767 = vadd.f32 %v1446, %v1766
      %v1768 = vpop.f32.mrf.mxu0
      %1769 = vmatprep.mubr.bf16.mxu0 %v696
      %1770 = vmatmul.mubr.bf16.gmra.mxu0 %v539
      %v1771 = vpop.f32.mrf.mxu0
      %v1772 = vadd.f32 %v1451, %v1771
      %v1773 = vpop.f32.mrf.mxu0
      %v1774 = vpop.f32.mrf.mxu0
      %v1775 = vadd.f32 %v1454, %v1774
      %v1776 = vpop.f32.mrf.mxu0
      %1777 = vmatprep.mubr.bf16.mxu0 %v708
      %1778 = vmatmul.mubr.bf16.gmra.mxu0 %v540
      %v1779 = vpop.f32.mrf.mxu0
      %v1780 = vadd.f32 %v1459, %v1779
      %v1781 = vpop.f32.mrf.mxu0
      %v1782 = vpop.f32.mrf.mxu0
      %v1783 = vadd.f32 %v1462, %v1782
      %v1784 = vpop.f32.mrf.mxu0
      %1785 = vmatprep.mubr.bf16.mxu0 %v720
      %1786 = vmatmul.mubr.bf16.gmra.mxu0 %v541
      %v1787 = vpop.f32.mrf.mxu0
      %v1788 = vadd.f32 %v1467, %v1787
      %v1789 = vpop.f32.mrf.mxu0
      %v1790 = vpop.f32.mrf.mxu0
      %v1791 = vadd.f32 %v1470, %v1790
      %v1792 = vpop.f32.mrf.mxu0
      %1793 = vmatprep.mubr.bf16.mxu0 %v732
      %1794 = vmatmul.mubr.bf16.gmra.mxu0 %v542
      %v1795 = vpop.f32.mrf.mxu0
      %v1796 = vadd.f32 %v1475, %v1795
      %v1797 = vpop.f32.mrf.mxu0
      %v1798 = vpop.f32.mrf.mxu0
      %v1799 = vadd.f32 %v1478, %v1798
      %v1800 = vpop.f32.mrf.mxu0
      %1801 = vmatprep.mubr.bf16.mxu0 %v744
      %1802 = vmatmul.mubr.bf16.gmra.mxu0 %v543
      %v1803 = vpop.f32.mrf.mxu0
      %v1804 = vadd.f32 %v1483, %v1803
      %v1805 = vpop.f32.mrf.mxu0
      %v1806 = vpop.f32.mrf.mxu0
      %v1807 = vadd.f32 %v1486, %v1806
      %v1808 = vpop.f32.mrf.mxu0
      %1809 = vmatprep.mubr.bf16.mxu0 %v756
      %1810 = vmatmul.mubr.bf16.gmra.mxu0 %v544
      %v1811 = vpop.f32.mrf.mxu0
      %v1812 = vadd.f32 %v1491, %v1811
      %v1813 = vpop.f32.mrf.mxu0
      %v1814 = vpop.f32.mrf.mxu0
      %v1815 = vadd.f32 %v1494, %v1814
      %v1816 = vpop.f32.mrf.mxu0
      %1817 = vmatprep.mubr.bf16.mxu0 %v768
      %1818 = vmatmul.mubr.bf16.gmra.mxu0 %v545
      %v1819 = vpop.f32.mrf.mxu0
      %v1820 = vadd.f32 %v1499, %v1819
      %v1821 = vpop.f32.mrf.mxu0
      %v1822 = vpop.f32.mrf.mxu0
      %v1823 = vadd.f32 %v1502, %v1822
      %v1824 = vpop.f32.mrf.mxu0
      %1825 = vmatprep.mubr.bf16.mxu0 %v780
      %1826 = vmatmul.mubr.bf16.gmra.mxu0 %v546
      %v1827 = vpop.f32.mrf.mxu0
      %v1828 = vadd.f32 %v1507, %v1827
      %v1829 = vpop.f32.mrf.mxu0
      %v1830 = vpop.f32.mrf.mxu0
      %v1831 = vadd.f32 %v1510, %v1830
      %v1832 = vpop.f32.mrf.mxu0
      %1833 = vmatprep.mubr.bf16.mxu0 %v792
      %1834 = vmatmul.mubr.bf16.gmra.mxu0 %v547
      %v1835 = vpop.f32.mrf.mxu0
      %v1836 = vadd.f32 %v1515, %v1835
      %v1837 = vpop.f32.mrf.mxu0
      %v1838 = vpop.f32.mrf.mxu0
      %v1839 = vadd.f32 %v1518, %v1838
      %v1840 = vpop.f32.mrf.mxu0
      %1841 = vmatprep.mubr.bf16.mxu0 %v804
      %1842 = vmatmul.mubr.bf16.gmra.mxu0 %v548
      %v1843 = vpop.f32.mrf.mxu0
      %v1844 = vadd.f32 %v1523, %v1843
      %v1845 = vpop.f32.mrf.mxu0
      %v1846 = vpop.f32.mrf.mxu0
      %v1847 = vadd.f32 %v1526, %v1846
      %v1848 = vpop.f32.mrf.mxu0
      %1849 = vmatprep.mubr.bf16.mxu0 %v816
      %1850 = vmatmul.mubr.bf16.gmra.mxu0 %v549
      %v1851 = vpop.f32.mrf.mxu0
      %v1852 = vadd.f32 %v1531, %v1851
      %v1853 = vpop.f32.mrf.mxu0
      %v1854 = vpop.f32.mrf.mxu0
      %v1855 = vadd.f32 %v1534, %v1854
      %v1856 = vpop.f32.mrf.mxu0
      %1857 = vmatprep.mubr.bf16.mxu0 %v828
      %1858 = vmatmul.mubr.bf16.gmra.mxu0 %v550
      %v1859 = vpop.f32.mrf.mxu0
      %v1860 = vadd.f32 %v1539, %v1859
      %v1861 = vpop.f32.mrf.mxu0
      %v1862 = vpop.f32.mrf.mxu0
      %v1863 = vadd.f32 %v1542, %v1862
      %v1864 = vpop.f32.mrf.mxu0
      %1865 = vmatprep.mubr.bf16.mxu0 %v840
      %1866 = vmatmul.mubr.bf16.gmra.mxu0 %v551
      %v1867 = vpop.f32.mrf.mxu0
      %v1868 = vadd.f32 %v1547, %v1867
      %v1869 = vpop.f32.mrf.mxu0
      %v1870 = vpop.f32.mrf.mxu0
      %v1871 = vadd.f32 %v1550, %v1870
      %v1872 = vpop.f32.mrf.mxu0
      %1873 = vdwg.mxu0
      %1874 = vmatprep.subr.bf16.mxu0 0
      %1875 = vmatpush1.bf16.msra.mxu0 %v1672
      %1876 = vmatprep.subr.bf16.mxu0 0
      %1877 = vmatpush1.bf16.msra.mxu0 %v1671
      %1878 = vmatprep.subr.bf16.mxu0 0
      %1879 = vmatpush1.bf16.msra.mxu0 %v1670
      %1880 = vmatprep.subr.bf16.mxu0 0
      %1881 = vmatpush1.bf16.msra.mxu0 %v1669
      %1882 = vmatprep.subr.bf16.mxu0 0
      %1883 = vmatpush1.bf16.msra.mxu0 %v1668
      %1884 = vmatprep.subr.bf16.mxu0 0
      %1885 = vmatpush1.bf16.msra.mxu0 %v1667
      %1886 = vmatprep.subr.bf16.mxu0 0
      %1887 = vmatpush1.bf16.msra.mxu0 %v1666
      %1888 = vmatprep.subr.bf16.mxu0 0
      %1889 = vmatpush1.bf16.msra.mxu0 %v1665
      %1890 = vmatprep.subr.bf16.mxu0 0
      %1891 = vmatpush2.bf16.msra.mxu0 0
      %1892 = vmatprep.subr.bf16.mxu0 0
      %1893 = vmatpush2.bf16.msra.mxu0 0
      %1894 = vmatprep.subr.bf16.mxu0 0
      %1895 = vmatpush2.bf16.msra.mxu0 0
      %1896 = vmatprep.subr.bf16.mxu0 0
      %1897 = vmatpush2.bf16.msra.mxu0 0
      %1898 = vmatprep.subr.bf16.mxu0 0
      %1899 = vmatpush2.bf16.msra.mxu0 0
      %1900 = vmatprep.subr.bf16.mxu0 0
      %1901 = vmatpush2.bf16.msra.mxu0 0
      %1902 = vmatprep.subr.bf16.mxu0 0
      %1903 = vmatpush2.bf16.msra.mxu0 0
      %1904 = vmatprep.subr.bf16.mxu0 0
      %1905 = vmatpush2.bf16.msra.mxu0 0
      %1906 = vmatprep.mubr.bf16.mxu0 0
      %1907 = vmatmul.mubr.bf16.gmra.mxu0 %v862
      %v1908 = vpop.f32.mrf.mxu0
      %v1909 = vadd.f32 %v1732, %v1908
      %v1910 = vpop.f32.mrf.mxu0
      %v1911 = vpop.f32.mrf.mxu0
      %v1912 = vadd.f32 %v1735, %v1911
      %v1913 = vpop.f32.mrf.mxu0
      %1914 = vmatprep.mubr.bf16.mxu0 0
      %1915 = vmatmul.mubr.bf16.gmra.mxu0 %v865
      %v1916 = vpop.f32.mrf.mxu0
      %v1917 = vadd.f32 %v1740, %v1916
      %v1918 = vpop.f32.mrf.mxu0
      %v1919 = vpop.f32.mrf.mxu0
      %v1920 = vadd.f32 %v1743, %v1919
      %v1921 = vpop.f32.mrf.mxu0
      %1922 = vmatprep.mubr.bf16.mxu0 0
      %1923 = vmatmul.mubr.bf16.gmra.mxu0 %v868
      %v1924 = vpop.f32.mrf.mxu0
      %v1925 = vadd.f32 %v1748, %v1924
      %v1926 = vpop.f32.mrf.mxu0
      %v1927 = vpop.f32.mrf.mxu0
      %v1928 = vadd.f32 %v1751, %v1927
      %v1929 = vpop.f32.mrf.mxu0
      %1930 = vmatprep.mubr.bf16.mxu0 0
      %1931 = vmatmul.mubr.bf16.gmra.mxu0 %v871
      %v1932 = vpop.f32.mrf.mxu0
      %v1933 = vadd.f32 %v1756, %v1932
      %v1934 = vpop.f32.mrf.mxu0
      %v1935 = vpop.f32.mrf.mxu0
      %v1936 = vadd.f32 %v1759, %v1935
      %v1937 = vpop.f32.mrf.mxu0
      %1938 = vmatprep.mubr.bf16.mxu0 0
      %1939 = vmatmul.mubr.bf16.gmra.mxu0 %v874
      %v1940 = vpop.f32.mrf.mxu0
      %v1941 = vadd.f32 %v1764, %v1940
      %v1942 = vpop.f32.mrf.mxu0
      %v1943 = vpop.f32.mrf.mxu0
      %v1944 = vadd.f32 %v1767, %v1943
      %v1945 = vpop.f32.mrf.mxu0
      %1946 = vmatprep.mubr.bf16.mxu0 0
      %1947 = vmatmul.mubr.bf16.gmra.mxu0 %v877
      %v1948 = vpop.f32.mrf.mxu0
      %v1949 = vadd.f32 %v1772, %v1948
      %v1950 = vpop.f32.mrf.mxu0
      %v1951 = vpop.f32.mrf.mxu0
      %v1952 = vadd.f32 %v1775, %v1951
      %v1953 = vpop.f32.mrf.mxu0
      %1954 = vmatprep.mubr.bf16.mxu0 0
      %1955 = vmatmul.mubr.bf16.gmra.mxu0 %v880
      %v1956 = vpop.f32.mrf.mxu0
      %v1957 = vadd.f32 %v1780, %v1956
      %v1958 = vpop.f32.mrf.mxu0
      %v1959 = vpop.f32.mrf.mxu0
      %v1960 = vadd.f32 %v1783, %v1959
      %v1961 = vpop.f32.mrf.mxu0
      %1962 = vmatprep.mubr.bf16.mxu0 0
      %1963 = vmatmul.mubr.bf16.gmra.mxu0 %v883
      %v1964 = vpop.f32.mrf.mxu0
      %v1965 = vadd.f32 %v1788, %v1964
      %v1966 = vpop.f32.mrf.mxu0
      %v1967 = vpop.f32.mrf.mxu0
      %v1968 = vadd.f32 %v1791, %v1967
      %v1969 = vpop.f32.mrf.mxu0
      %1970 = vmatprep.mubr.bf16.mxu0 0
      %1971 = vmatmul.mubr.bf16.gmra.mxu0 %v886
      %v1972 = vpop.f32.mrf.mxu0
      %v1973 = vadd.f32 %v1796, %v1972
      %v1974 = vpop.f32.mrf.mxu0
      %v1975 = vpop.f32.mrf.mxu0
      %v1976 = vadd.f32 %v1799, %v1975
      %v1977 = vpop.f32.mrf.mxu0
      %1978 = vmatprep.mubr.bf16.mxu0 0
      %1979 = vmatmul.mubr.bf16.gmra.mxu0 %v889
      %v1980 = vpop.f32.mrf.mxu0
      %v1981 = vadd.f32 %v1804, %v1980
      %v1982 = vpop.f32.mrf.mxu0
      %v1983 = vpop.f32.mrf.mxu0
      %v1984 = vadd.f32 %v1807, %v1983
      %v1985 = vpop.f32.mrf.mxu0
      %1986 = vmatprep.mubr.bf16.mxu0 0
      %1987 = vmatmul.mubr.bf16.gmra.mxu0 %v892
      %v1988 = vpop.f32.mrf.mxu0
      %v1989 = vadd.f32 %v1812, %v1988
      %v1990 = vpop.f32.mrf.mxu0
      %v1991 = vpop.f32.mrf.mxu0
      %v1992 = vadd.f32 %v1815, %v1991
      %v1993 = vpop.f32.mrf.mxu0
      %1994 = vmatprep.mubr.bf16.mxu0 0
      %1995 = vmatmul.mubr.bf16.gmra.mxu0 %v895
      %v1996 = vpop.f32.mrf.mxu0
      %v1997 = vadd.f32 %v1820, %v1996
      %v1998 = vpop.f32.mrf.mxu0
      %v1999 = vpop.f32.mrf.mxu0
      %v2000 = vadd.f32 %v1823, %v1999
      %v2001 = vpop.f32.mrf.mxu0
      %2002 = vmatprep.mubr.bf16.mxu0 0
      %2003 = vmatmul.mubr.bf16.gmra.mxu0 %v898
      %v2004 = vpop.f32.mrf.mxu0
      %v2005 = vadd.f32 %v1828, %v2004
      %v2006 = vpop.f32.mrf.mxu0
      %v2007 = vpop.f32.mrf.mxu0
      %v2008 = vadd.f32 %v1831, %v2007
      %v2009 = vpop.f32.mrf.mxu0
      %2010 = vmatprep.mubr.bf16.mxu0 0
      %2011 = vmatmul.mubr.bf16.gmra.mxu0 %v901
      %v2012 = vpop.f32.mrf.mxu0
      %v2013 = vadd.f32 %v1836, %v2012
      %v2014 = vpop.f32.mrf.mxu0
      %v2015 = vpop.f32.mrf.mxu0
      %v2016 = vadd.f32 %v1839, %v2015
      %v2017 = vpop.f32.mrf.mxu0
      %2018 = vmatprep.mubr.bf16.mxu0 0
      %2019 = vmatmul.mubr.bf16.gmra.mxu0 %v904
      %v2020 = vpop.f32.mrf.mxu0
      %v2021 = vadd.f32 %v1844, %v2020
      %v2022 = vpop.f32.mrf.mxu0
      %v2023 = vpop.f32.mrf.mxu0
      %v2024 = vadd.f32 %v1847, %v2023
      %v2025 = vpop.f32.mrf.mxu0
      %2026 = vmatprep.mubr.bf16.mxu0 0
      %2027 = vmatmul.mubr.bf16.gmra.mxu0 %v907
      %v2028 = vpop.f32.mrf.mxu0
      %v2029 = vadd.f32 %v1852, %v2028
      %v2030 = vpop.f32.mrf.mxu0
      %v2031 = vpop.f32.mrf.mxu0
      %v2032 = vadd.f32 %v1855, %v2031
      %v2033 = vpop.f32.mrf.mxu0
      %2034 = vmatprep.mubr.bf16.mxu0 0
      %2035 = vmatmul.mubr.bf16.gmra.mxu0 %v910
      %v2036 = vpop.f32.mrf.mxu0
      %v2037 = vadd.f32 %v1860, %v2036
      %v2038 = vpop.f32.mrf.mxu0
      %v2039 = vpop.f32.mrf.mxu0
      %v2040 = vadd.f32 %v1863, %v2039
      %v2041 = vpop.f32.mrf.mxu0
      %2042 = vmatprep.mubr.bf16.mxu0 0
      %2043 = vmatmul.mubr.bf16.gmra.mxu0 %v913
      %v2044 = vpop.f32.mrf.mxu0
      %v2045 = vadd.f32 %v1868, %v2044
      %v2046 = vpop.f32.mrf.mxu0
      %v2047 = vpop.f32.mrf.mxu0
      %v2048 = vadd.f32 %v1871, %v2047
      %v2049 = vpop.f32.mrf.mxu0
      %2050 = vdwg.mxu0
      %v2053 = vunpack.c.l.b16 %v459
      %v2054 = vunpack.c.l.b16 %v460
      %v2055 = vpack.c.b16 %v2054, %v2053
      %v2058 = vunpack.c.l.b16 %v461
      %v2059 = vpack.c.b16 %v2058, %v2058
      %v2061 = vshrl.u32 %v2055, 16
      %v2063 = vshll.u32 %v2055, 16
      %v2065 = vrot.slane %v2063, 1
      %v2066 = vor.u32 %v2061, %v2065
      %v2068 = vshll.u32 %v2059, 16
      %v2070 = vrot.slane %v2068, 1
      %v2071 = vsel %vm624, %v2066, %v2070
      %v2073 = vrot.slane %v2055, 1
      %v2074 = vrot.slane %v2059, 1
      %v2075 = vsel %vm859, %v2073, %v2074
      %s2077 = scalar_lea.vmem %s2, 384
      %v2078 = vld [vmem:[%s2077] sm:$0xf]
      %v2079 = vld [vmem:[%s2077 + $0x4] sm:$0xf]
      %v2080 = vld [vmem:[%s2077 + $0x8] sm:$0xf]
      %v2081 = vld [vmem:[%s2077 + $0xc] sm:$0xf]
      %v2082 = vld [vmem:[%s2077 + $0x10] sm:$0xf]
      %v2083 = vld [vmem:[%s2077 + $0x14] sm:$0xf]
      %v2084 = vld [vmem:[%s2077 + $0x18] sm:$0xf]
      %v2085 = vld [vmem:[%s2077 + $0x1c] sm:$0xf]
      %v2086 = vld [vmem:[%s2077 + $0x20] sm:$0xf]
      %v2087 = vld [vmem:[%s2077 + $0x24] sm:$0xf]
      %v2088 = vld [vmem:[%s2077 + $0x28] sm:$0xf]
      %v2089 = vld [vmem:[%s2077 + $0x2c] sm:$0xf]
      %v2090 = vld [vmem:[%s2077 + $0x30] sm:$0xf]
      %v2091 = vld [vmem:[%s2077 + $0x34] sm:$0xf]
      %v2092 = vld [vmem:[%s2077 + $0x38] sm:$0xf]
      %v2093 = vld [vmem:[%s2077 + $0x3c] sm:$0xf]
      %v2094 = vld [vmem:[%s2077 + $0x40] sm:$0xf]
      %v2095 = vld [vmem:[%s2077 + $0x44] sm:$0xf]
      %v2096 = vld [vmem:[%s2077 + $0x48] sm:$0xf]
      %v2097 = vld [vmem:[%s2077 + $0x4c] sm:$0xf]
      %v2098 = vld [vmem:[%s2077 + $0x50] sm:$0xf]
      %v2099 = vld [vmem:[%s2077 + $0x54] sm:$0xf]
      %v2100 = vld [vmem:[%s2077 + $0x58] sm:$0xf]
      %v2101 = vld [vmem:[%s2077 + $0x5c] sm:$0xf]
      %v2102 = vld [vmem:[%s2077 + $0x60] sm:$0xf]
      %v2103 = vld [vmem:[%s2077 + $0x64] sm:$0xf]
      %v2104 = vld [vmem:[%s2077 + $0x68] sm:$0xf]
      %v2105 = vld [vmem:[%s2077 + $0x6c] sm:$0xf]
      %v2106 = vld [vmem:[%s2077 + $0x70] sm:$0xf]
      %v2107 = vld [vmem:[%s2077 + $0x74] sm:$0xf]
      %v2108 = vld [vmem:[%s2077 + $0x78] sm:$0xf]
      %v2109 = vld [vmem:[%s2077 + $0x7c] sm:$0xf]
      %v2110 = vld [vmem:[%s2077 + $0x80] sm:$0xf]
      %v2111 = vld [vmem:[%s2077 + $0x84] sm:$0xf]
      %v2112 = vld [vmem:[%s2077 + $0x88] sm:$0xf]
      %v2113 = vld [vmem:[%s2077 + $0x8c] sm:$0xf]
      %v2114 = vld [vmem:[%s2077 + $0x90] sm:$0xf]
      %v2115 = vld [vmem:[%s2077 + $0x94] sm:$0xf]
      %v2116 = vld [vmem:[%s2077 + $0x98] sm:$0xf]
      %v2117 = vld [vmem:[%s2077 + $0x9c] sm:$0xf]
      %v2118 = vld [vmem:[%s2077 + $0xa0] sm:$0xf]
      %v2119 = vld [vmem:[%s2077 + $0xa4] sm:$0xf]
      %v2120 = vld [vmem:[%s2077 + $0xa8] sm:$0xf]
      %v2121 = vld [vmem:[%s2077 + $0xac] sm:$0xf]
      %v2122 = vld [vmem:[%s2077 + $0xb0] sm:$0xf]
      %v2123 = vld [vmem:[%s2077 + $0xb4] sm:$0xf]
      %v2124 = vld [vmem:[%s2077 + $0xb8] sm:$0xf]
      %v2125 = vld [vmem:[%s2077 + $0xbc] sm:$0xf]
      %v2174 = vunpack.c.l.b16 %v2078
      %v2175 = vunpack.c.l.b16 %v2079
      %v2176 = vunpack.c.l.b16 %v2080
      %v2177 = vunpack.c.l.b16 %v2081
      %v2178 = vunpack.c.l.b16 %v2082
      %v2179 = vunpack.c.l.b16 %v2083
      %v2180 = vunpack.c.l.b16 %v2084
      %v2181 = vunpack.c.l.b16 %v2085
      %v2182 = vunpack.c.l.b16 %v2086
      %v2183 = vunpack.c.l.b16 %v2087
      %v2184 = vunpack.c.l.b16 %v2088
      %v2185 = vunpack.c.l.b16 %v2089
      %v2186 = vunpack.c.l.b16 %v2090
      %v2187 = vunpack.c.l.b16 %v2091
      %v2188 = vunpack.c.l.b16 %v2092
      %v2189 = vunpack.c.l.b16 %v2093
      %v2190 = vunpack.c.l.b16 %v2094
      %v2191 = vunpack.c.l.b16 %v2095
      %v2192 = vunpack.c.l.b16 %v2096
      %v2193 = vunpack.c.l.b16 %v2097
      %v2194 = vunpack.c.l.b16 %v2098
      %v2195 = vunpack.c.l.b16 %v2099
      %v2196 = vunpack.c.l.b16 %v2100
      %v2197 = vunpack.c.l.b16 %v2101
      %v2198 = vunpack.c.l.b16 %v2102
      %v2199 = vunpack.c.l.b16 %v2103
      %v2200 = vunpack.c.l.b16 %v2104
      %v2201 = vunpack.c.l.b16 %v2105
      %v2202 = vunpack.c.l.b16 %v2106
      %v2203 = vunpack.c.l.b16 %v2107
      %v2204 = vunpack.c.l.b16 %v2108
      %v2205 = vunpack.c.l.b16 %v2109
      %v2206 = vunpack.c.l.b16 %v2110
      %v2207 = vunpack.c.l.b16 %v2111
      %v2208 = vunpack.c.l.b16 %v2112
      %v2209 = vunpack.c.l.b16 %v2113
      %v2210 = vunpack.c.l.b16 %v2114
      %v2211 = vunpack.c.l.b16 %v2115
      %v2212 = vunpack.c.l.b16 %v2116
      %v2213 = vunpack.c.l.b16 %v2117
      %v2214 = vunpack.c.l.b16 %v2118
      %v2215 = vunpack.c.l.b16 %v2119
      %v2216 = vunpack.c.l.b16 %v2120
      %v2217 = vunpack.c.l.b16 %v2121
      %v2218 = vunpack.c.l.b16 %v2122
      %v2219 = vunpack.c.l.b16 %v2123
      %v2220 = vunpack.c.l.b16 %v2124
      %v2221 = vunpack.c.l.b16 %v2125
      %v2222 = vpack.c.b16 %v2175, %v2174
      %v2223 = vpack.c.b16 %v2177, %v2176
      %v2224 = vpack.c.b16 %v2179, %v2178
      %v2225 = vpack.c.b16 %v2181, %v2180
      %v2226 = vpack.c.b16 %v2183, %v2182
      %v2227 = vpack.c.b16 %v2185, %v2184
      %v2228 = vpack.c.b16 %v2187, %v2186
      %v2229 = vpack.c.b16 %v2189, %v2188
      %v2230 = vpack.c.b16 %v2191, %v2190
      %v2231 = vpack.c.b16 %v2193, %v2192
      %v2232 = vpack.c.b16 %v2195, %v2194
      %v2233 = vpack.c.b16 %v2197, %v2196
      %v2234 = vpack.c.b16 %v2199, %v2198
      %v2235 = vpack.c.b16 %v2201, %v2200
      %v2236 = vpack.c.b16 %v2203, %v2202
      %v2237 = vpack.c.b16 %v2205, %v2204
      %v2238 = vpack.c.b16 %v2207, %v2206
      %v2239 = vpack.c.b16 %v2209, %v2208
      %v2240 = vpack.c.b16 %v2211, %v2210
      %v2241 = vpack.c.b16 %v2213, %v2212
      %v2242 = vpack.c.b16 %v2215, %v2214
      %v2243 = vpack.c.b16 %v2217, %v2216
      %v2244 = vpack.c.b16 %v2219, %v2218
      %v2245 = vpack.c.b16 %v2221, %v2220
      %2270 = vmatprep.subr.bf16.mxu0 0
      %2271 = vmatpush1.bf16.msra.mxu0 %v2229
      %2272 = vmatprep.subr.bf16.mxu0 0
      %2273 = vmatpush1.bf16.msra.mxu0 %v2228
      %2274 = vmatprep.subr.bf16.mxu0 0
      %2275 = vmatpush1.bf16.msra.mxu0 %v2227
      %2276 = vmatprep.subr.bf16.mxu0 0
      %2277 = vmatpush1.bf16.msra.mxu0 %v2226
      %2278 = vmatprep.subr.bf16.mxu0 0
      %2279 = vmatpush1.bf16.msra.mxu0 %v2225
      %2280 = vmatprep.subr.bf16.mxu0 0
      %2281 = vmatpush1.bf16.msra.mxu0 %v2224
      %2282 = vmatprep.subr.bf16.mxu0 0
      %2283 = vmatpush1.bf16.msra.mxu0 %v2223
      %2284 = vmatprep.subr.bf16.mxu0 0
      %2285 = vmatpush1.bf16.msra.mxu0 %v2222
      %2286 = vmatprep.subr.bf16.mxu0 0
      %2287 = vmatpush2.bf16.msra.mxu0 %v2237
      %2288 = vmatprep.subr.bf16.mxu0 0
      %2289 = vmatpush2.bf16.msra.mxu0 %v2236
      %2290 = vmatprep.subr.bf16.mxu0 0
      %2291 = vmatpush2.bf16.msra.mxu0 %v2235
      %2292 = vmatprep.subr.bf16.mxu0 0
      %2293 = vmatpush2.bf16.msra.mxu0 %v2234
      %2294 = vmatprep.subr.bf16.mxu0 0
      %2295 = vmatpush2.bf16.msra.mxu0 %v2233
      %2296 = vmatprep.subr.bf16.mxu0 0
      %2297 = vmatpush2.bf16.msra.mxu0 %v2232
      %2298 = vmatprep.subr.bf16.mxu0 0
      %2299 = vmatpush2.bf16.msra.mxu0 %v2231
      %2300 = vmatprep.subr.bf16.mxu0 0
      %2301 = vmatpush2.bf16.msra.mxu0 %v2230
      %2302 = vmatprep.mubr.bf16.mxu0 %v660
      %2303 = vmatmul.mubr.bf16.gmra.mxu0 %v536
      %v2304 = vpop.f32.mrf.mxu0
      %v2305 = vadd.f32 0.0, %v2304
      %v2306 = vpop.f32.mrf.mxu0
      %v2307 = vpop.f32.mrf.mxu0
      %v2308 = vadd.f32 0.0, %v2307
      %v2309 = vpop.f32.mrf.mxu0
      %2310 = vmatprep.mubr.bf16.mxu0 %v672
      %2311 = vmatmul.mubr.bf16.gmra.mxu0 %v537
      %v2312 = vpop.f32.mrf.mxu0
      %v2313 = vadd.f32 0.0, %v2312
      %v2314 = vpop.f32.mrf.mxu0
      %v2315 = vpop.f32.mrf.mxu0
      %v2316 = vadd.f32 0.0, %v2315
      %v2317 = vpop.f32.mrf.mxu0
      %2318 = vmatprep.mubr.bf16.mxu0 %v684
      %2319 = vmatmul.mubr.bf16.gmra.mxu0 %v538
      %v2320 = vpop.f32.mrf.mxu0
      %v2321 = vadd.f32 0.0, %v2320
      %v2322 = vpop.f32.mrf.mxu0
      %v2323 = vpop.f32.mrf.mxu0
      %v2324 = vadd.f32 0.0, %v2323
      %v2325 = vpop.f32.mrf.mxu0
      %2326 = vmatprep.mubr.bf16.mxu0 %v696
      %2327 = vmatmul.mubr.bf16.gmra.mxu0 %v539
      %v2328 = vpop.f32.mrf.mxu0
      %v2329 = vadd.f32 0.0, %v2328
      %v2330 = vpop.f32.mrf.mxu0
      %v2331 = vpop.f32.mrf.mxu0
      %v2332 = vadd.f32 0.0, %v2331
      %v2333 = vpop.f32.mrf.mxu0
      %2334 = vmatprep.mubr.bf16.mxu0 %v708
      %2335 = vmatmul.mubr.bf16.gmra.mxu0 %v540
      %v2336 = vpop.f32.mrf.mxu0
      %v2337 = vadd.f32 0.0, %v2336
      %v2338 = vpop.f32.mrf.mxu0
      %v2339 = vpop.f32.mrf.mxu0
      %v2340 = vadd.f32 0.0, %v2339
      %v2341 = vpop.f32.mrf.mxu0
      %2342 = vmatprep.mubr.bf16.mxu0 %v720
      %2343 = vmatmul.mubr.bf16.gmra.mxu0 %v541
      %v2344 = vpop.f32.mrf.mxu0
      %v2345 = vadd.f32 0.0, %v2344
      %v2346 = vpop.f32.mrf.mxu0
      %v2347 = vpop.f32.mrf.mxu0
      %v2348 = vadd.f32 0.0, %v2347
      %v2349 = vpop.f32.mrf.mxu0
      %2350 = vmatprep.mubr.bf16.mxu0 %v732
      %2351 = vmatmul.mubr.bf16.gmra.mxu0 %v542
      %v2352 = vpop.f32.mrf.mxu0
      %v2353 = vadd.f32 0.0, %v2352
      %v2354 = vpop.f32.mrf.mxu0
      %v2355 = vpop.f32.mrf.mxu0
      %v2356 = vadd.f32 0.0, %v2355
      %v2357 = vpop.f32.mrf.mxu0
      %2358 = vmatprep.mubr.bf16.mxu0 %v744
      %2359 = vmatmul.mubr.bf16.gmra.mxu0 %v543
      %v2360 = vpop.f32.mrf.mxu0
      %v2361 = vadd.f32 0.0, %v2360
      %v2362 = vpop.f32.mrf.mxu0
      %v2363 = vpop.f32.mrf.mxu0
      %v2364 = vadd.f32 0.0, %v2363
      %v2365 = vpop.f32.mrf.mxu0
      %2366 = vmatprep.mubr.bf16.mxu0 %v756
      %2367 = vmatmul.mubr.bf16.gmra.mxu0 %v544
      %v2368 = vpop.f32.mrf.mxu0
      %v2369 = vadd.f32 0.0, %v2368
      %v2370 = vpop.f32.mrf.mxu0
      %v2371 = vpop.f32.mrf.mxu0
      %v2372 = vadd.f32 0.0, %v2371
      %v2373 = vpop.f32.mrf.mxu0
      %2374 = vmatprep.mubr.bf16.mxu0 %v768
      %2375 = vmatmul.mubr.bf16.gmra.mxu0 %v545
      %v2376 = vpop.f32.mrf.mxu0
      %v2377 = vadd.f32 0.0, %v2376
      %v2378 = vpop.f32.mrf.mxu0
      %v2379 = vpop.f32.mrf.mxu0
      %v2380 = vadd.f32 0.0, %v2379
      %v2381 = vpop.f32.mrf.mxu0
      %2382 = vmatprep.mubr.bf16.mxu0 %v780
      %2383 = vmatmul.mubr.bf16.gmra.mxu0 %v546
      %v2384 = vpop.f32.mrf.mxu0
      %v2385 = vadd.f32 0.0, %v2384
      %v2386 = vpop.f32.mrf.mxu0
      %v2387 = vpop.f32.mrf.mxu0
      %v2388 = vadd.f32 0.0, %v2387
      %v2389 = vpop.f32.mrf.mxu0
      %2390 = vmatprep.mubr.bf16.mxu0 %v792
      %2391 = vmatmul.mubr.bf16.gmra.mxu0 %v547
      %v2392 = vpop.f32.mrf.mxu0
      %v2393 = vadd.f32 0.0, %v2392
      %v2394 = vpop.f32.mrf.mxu0
      %v2395 = vpop.f32.mrf.mxu0
      %v2396 = vadd.f32 0.0, %v2395
      %v2397 = vpop.f32.mrf.mxu0
      %2398 = vmatprep.mubr.bf16.mxu0 %v804
      %2399 = vmatmul.mubr.bf16.gmra.mxu0 %v548
      %v2400 = vpop.f32.mrf.mxu0
      %v2401 = vadd.f32 0.0, %v2400
      %v2402 = vpop.f32.mrf.mxu0
      %v2403 = vpop.f32.mrf.mxu0
      %v2404 = vadd.f32 0.0, %v2403
      %v2405 = vpop.f32.mrf.mxu0
      %2406 = vmatprep.mubr.bf16.mxu0 %v816
      %2407 = vmatmul.mubr.bf16.gmra.mxu0 %v549
      %v2408 = vpop.f32.mrf.mxu0
      %v2409 = vadd.f32 0.0, %v2408
      %v2410 = vpop.f32.mrf.mxu0
      %v2411 = vpop.f32.mrf.mxu0
      %v2412 = vadd.f32 0.0, %v2411
      %v2413 = vpop.f32.mrf.mxu0
      %2414 = vmatprep.mubr.bf16.mxu0 %v828
      %2415 = vmatmul.mubr.bf16.gmra.mxu0 %v550
      %v2416 = vpop.f32.mrf.mxu0
      %v2417 = vadd.f32 0.0, %v2416
      %v2418 = vpop.f32.mrf.mxu0
      %v2419 = vpop.f32.mrf.mxu0
      %v2420 = vadd.f32 0.0, %v2419
      %v2421 = vpop.f32.mrf.mxu0
      %2422 = vmatprep.mubr.bf16.mxu0 %v840
      %2423 = vmatmul.mubr.bf16.gmra.mxu0 %v551
      %v2424 = vpop.f32.mrf.mxu0
      %v2425 = vadd.f32 0.0, %v2424
      %v2426 = vpop.f32.mrf.mxu0
      %v2427 = vpop.f32.mrf.mxu0
      %v2428 = vadd.f32 0.0, %v2427
      %v2429 = vpop.f32.mrf.mxu0
      %2430 = vmatprep.mubr.bf16.mxu0 %v1000
      %2431 = vmatmul.mubr.bf16.gmra.mxu0 %v984
      %v2432 = vpop.f32.mrf.mxu0
      %v2433 = vadd.f32 0.0, %v2432
      %v2434 = vpop.f32.mrf.mxu0
      %v2435 = vpop.f32.mrf.mxu0
      %v2436 = vadd.f32 0.0, %v2435
      %v2437 = vpop.f32.mrf.mxu0
      %2438 = vmatprep.mubr.bf16.mxu0 %v2071
      %2439 = vmatmul.mubr.bf16.gmra.mxu0 %v2055
      %v2440 = vpop.f32.mrf.mxu0
      %v2441 = vadd.f32 0.0, %v2440
      %v2442 = vpop.f32.mrf.mxu0
      %v2443 = vpop.f32.mrf.mxu0
      %v2444 = vadd.f32 0.0, %v2443
      %v2445 = vpop.f32.mrf.mxu0
      %2446 = vdwg.mxu0
      %2447 = vmatprep.subr.bf16.mxu0 0
      %2448 = vmatpush1.bf16.msra.mxu0 %v2245
      %2449 = vmatprep.subr.bf16.mxu0 0
      %2450 = vmatpush1.bf16.msra.mxu0 %v2244
      %2451 = vmatprep.subr.bf16.mxu0 0
      %2452 = vmatpush1.bf16.msra.mxu0 %v2243
      %2453 = vmatprep.subr.bf16.mxu0 0
      %2454 = vmatpush1.bf16.msra.mxu0 %v2242
      %2455 = vmatprep.subr.bf16.mxu0 0
      %2456 = vmatpush1.bf16.msra.mxu0 %v2241
      %2457 = vmatprep.subr.bf16.mxu0 0
      %2458 = vmatpush1.bf16.msra.mxu0 %v2240
      %2459 = vmatprep.subr.bf16.mxu0 0
      %2460 = vmatpush1.bf16.msra.mxu0 %v2239
      %2461 = vmatprep.subr.bf16.mxu0 0
      %2462 = vmatpush1.bf16.msra.mxu0 %v2238
      %2463 = vmatprep.subr.bf16.mxu0 0
      %2464 = vmatpush2.bf16.msra.mxu0 0
      %2465 = vmatprep.subr.bf16.mxu0 0
      %2466 = vmatpush2.bf16.msra.mxu0 0
      %2467 = vmatprep.subr.bf16.mxu0 0
      %2468 = vmatpush2.bf16.msra.mxu0 0
      %2469 = vmatprep.subr.bf16.mxu0 0
      %2470 = vmatpush2.bf16.msra.mxu0 0
      %2471 = vmatprep.subr.bf16.mxu0 0
      %2472 = vmatpush2.bf16.msra.mxu0 0
      %2473 = vmatprep.subr.bf16.mxu0 0
      %2474 = vmatpush2.bf16.msra.mxu0 0
      %2475 = vmatprep.subr.bf16.mxu0 0
      %2476 = vmatpush2.bf16.msra.mxu0 0
      %2477 = vmatprep.subr.bf16.mxu0 0
      %2478 = vmatpush2.bf16.msra.mxu0 0
      %2479 = vmatprep.mubr.bf16.mxu0 0
      %2480 = vmatmul.mubr.bf16.gmra.mxu0 %v868
      %v2481 = vpop.f32.mrf.mxu0
      %v2482 = vadd.f32 %v2305, %v2481
      %v2483 = vpop.f32.mrf.mxu0
      %v2484 = vpop.f32.mrf.mxu0
      %v2485 = vadd.f32 %v2308, %v2484
      %v2486 = vpop.f32.mrf.mxu0
      %2487 = vmatprep.mubr.bf16.mxu0 0
      %2488 = vmatmul.mubr.bf16.gmra.mxu0 %v871
      %v2489 = vpop.f32.mrf.mxu0
      %v2490 = vadd.f32 %v2313, %v2489
      %v2491 = vpop.f32.mrf.mxu0
      %v2492 = vpop.f32.mrf.mxu0
      %v2493 = vadd.f32 %v2316, %v2492
      %v2494 = vpop.f32.mrf.mxu0
      %2495 = vmatprep.mubr.bf16.mxu0 0
      %2496 = vmatmul.mubr.bf16.gmra.mxu0 %v874
      %v2497 = vpop.f32.mrf.mxu0
      %v2498 = vadd.f32 %v2321, %v2497
      %v2499 = vpop.f32.mrf.mxu0
      %v2500 = vpop.f32.mrf.mxu0
      %v2501 = vadd.f32 %v2324, %v2500
      %v2502 = vpop.f32.mrf.mxu0
      %2503 = vmatprep.mubr.bf16.mxu0 0
      %2504 = vmatmul.mubr.bf16.gmra.mxu0 %v877
      %v2505 = vpop.f32.mrf.mxu0
      %v2506 = vadd.f32 %v2329, %v2505
      %v2507 = vpop.f32.mrf.mxu0
      %v2508 = vpop.f32.mrf.mxu0
      %v2509 = vadd.f32 %v2332, %v2508
      %v2510 = vpop.f32.mrf.mxu0
      %2511 = vmatprep.mubr.bf16.mxu0 0
      %2512 = vmatmul.mubr.bf16.gmra.mxu0 %v880
      %v2513 = vpop.f32.mrf.mxu0
      %v2514 = vadd.f32 %v2337, %v2513
      %v2515 = vpop.f32.mrf.mxu0
      %v2516 = vpop.f32.mrf.mxu0
      %v2517 = vadd.f32 %v2340, %v2516
      %v2518 = vpop.f32.mrf.mxu0
      %2519 = vmatprep.mubr.bf16.mxu0 0
      %2520 = vmatmul.mubr.bf16.gmra.mxu0 %v883
      %v2521 = vpop.f32.mrf.mxu0
      %v2522 = vadd.f32 %v2345, %v2521
      %v2523 = vpop.f32.mrf.mxu0
      %v2524 = vpop.f32.mrf.mxu0
      %v2525 = vadd.f32 %v2348, %v2524
      %v2526 = vpop.f32.mrf.mxu0
      %2527 = vmatprep.mubr.bf16.mxu0 0
      %2528 = vmatmul.mubr.bf16.gmra.mxu0 %v886
      %v2529 = vpop.f32.mrf.mxu0
      %v2530 = vadd.f32 %v2353, %v2529
      %v2531 = vpop.f32.mrf.mxu0
      %v2532 = vpop.f32.mrf.mxu0
      %v2533 = vadd.f32 %v2356, %v2532
      %v2534 = vpop.f32.mrf.mxu0
      %2535 = vmatprep.mubr.bf16.mxu0 0
      %2536 = vmatmul.mubr.bf16.gmra.mxu0 %v889
      %v2537 = vpop.f32.mrf.mxu0
      %v2538 = vadd.f32 %v2361, %v2537
      %v2539 = vpop.f32.mrf.mxu0
      %v2540 = vpop.f32.mrf.mxu0
      %v2541 = vadd.f32 %v2364, %v2540
      %v2542 = vpop.f32.mrf.mxu0
      %2543 = vmatprep.mubr.bf16.mxu0 0
      %2544 = vmatmul.mubr.bf16.gmra.mxu0 %v892
      %v2545 = vpop.f32.mrf.mxu0
      %v2546 = vadd.f32 %v2369, %v2545
      %v2547 = vpop.f32.mrf.mxu0
      %v2548 = vpop.f32.mrf.mxu0
      %v2549 = vadd.f32 %v2372, %v2548
      %v2550 = vpop.f32.mrf.mxu0
      %2551 = vmatprep.mubr.bf16.mxu0 0
      %2552 = vmatmul.mubr.bf16.gmra.mxu0 %v895
      %v2553 = vpop.f32.mrf.mxu0
      %v2554 = vadd.f32 %v2377, %v2553
      %v2555 = vpop.f32.mrf.mxu0
      %v2556 = vpop.f32.mrf.mxu0
      %v2557 = vadd.f32 %v2380, %v2556
      %v2558 = vpop.f32.mrf.mxu0
      %2559 = vmatprep.mubr.bf16.mxu0 0
      %2560 = vmatmul.mubr.bf16.gmra.mxu0 %v898
      %v2561 = vpop.f32.mrf.mxu0
      %v2562 = vadd.f32 %v2385, %v2561
      %v2563 = vpop.f32.mrf.mxu0
      %v2564 = vpop.f32.mrf.mxu0
      %v2565 = vadd.f32 %v2388, %v2564
      %v2566 = vpop.f32.mrf.mxu0
      %2567 = vmatprep.mubr.bf16.mxu0 0
      %2568 = vmatmul.mubr.bf16.gmra.mxu0 %v901
      %v2569 = vpop.f32.mrf.mxu0
      %v2570 = vadd.f32 %v2393, %v2569
      %v2571 = vpop.f32.mrf.mxu0
      %v2572 = vpop.f32.mrf.mxu0
      %v2573 = vadd.f32 %v2396, %v2572
      %v2574 = vpop.f32.mrf.mxu0
      %2575 = vmatprep.mubr.bf16.mxu0 0
      %2576 = vmatmul.mubr.bf16.gmra.mxu0 %v904
      %v2577 = vpop.f32.mrf.mxu0
      %v2578 = vadd.f32 %v2401, %v2577
      %v2579 = vpop.f32.mrf.mxu0
      %v2580 = vpop.f32.mrf.mxu0
      %v2581 = vadd.f32 %v2404, %v2580
      %v2582 = vpop.f32.mrf.mxu0
      %2583 = vmatprep.mubr.bf16.mxu0 0
      %2584 = vmatmul.mubr.bf16.gmra.mxu0 %v907
      %v2585 = vpop.f32.mrf.mxu0
      %v2586 = vadd.f32 %v2409, %v2585
      %v2587 = vpop.f32.mrf.mxu0
      %v2588 = vpop.f32.mrf.mxu0
      %v2589 = vadd.f32 %v2412, %v2588
      %v2590 = vpop.f32.mrf.mxu0
      %2591 = vmatprep.mubr.bf16.mxu0 0
      %2592 = vmatmul.mubr.bf16.gmra.mxu0 %v910
      %v2593 = vpop.f32.mrf.mxu0
      %v2594 = vadd.f32 %v2417, %v2593
      %v2595 = vpop.f32.mrf.mxu0
      %v2596 = vpop.f32.mrf.mxu0
      %v2597 = vadd.f32 %v2420, %v2596
      %v2598 = vpop.f32.mrf.mxu0
      %2599 = vmatprep.mubr.bf16.mxu0 0
      %2600 = vmatmul.mubr.bf16.gmra.mxu0 %v913
      %v2601 = vpop.f32.mrf.mxu0
      %v2602 = vadd.f32 %v2425, %v2601
      %v2603 = vpop.f32.mrf.mxu0
      %v2604 = vpop.f32.mrf.mxu0
      %v2605 = vadd.f32 %v2428, %v2604
      %v2606 = vpop.f32.mrf.mxu0
      %2607 = vmatprep.mubr.bf16.mxu0 0
      %2608 = vmatmul.mubr.bf16.gmra.mxu0 %v1004
      %v2609 = vpop.f32.mrf.mxu0
      %v2610 = vadd.f32 %v2433, %v2609
      %v2611 = vpop.f32.mrf.mxu0
      %v2612 = vpop.f32.mrf.mxu0
      %v2613 = vadd.f32 %v2436, %v2612
      %v2614 = vpop.f32.mrf.mxu0
      %2615 = vmatprep.mubr.bf16.mxu0 0
      %2616 = vmatmul.mubr.bf16.gmra.mxu0 %v2075
      %v2617 = vpop.f32.mrf.mxu0
      %v2618 = vadd.f32 %v2441, %v2617
      %v2619 = vpop.f32.mrf.mxu0
      %v2620 = vpop.f32.mrf.mxu0
      %v2621 = vadd.f32 %v2444, %v2620
      %v2622 = vpop.f32.mrf.mxu0
      %2623 = vdwg.mxu0
      %v2624 = vadd.f32 %v1909, %v2482
      %v2625 = vadd.f32 %v1912, %v2485
      %v2626 = vadd.f32 %v1917, %v2490
      %v2627 = vadd.f32 %v1920, %v2493
      %v2628 = vadd.f32 %v1925, %v2498
      %v2629 = vadd.f32 %v1928, %v2501
      %v2630 = vadd.f32 %v1933, %v2506
      %v2631 = vadd.f32 %v1936, %v2509
      %v2632 = vadd.f32 %v1941, %v2514
      %v2633 = vadd.f32 %v1944, %v2517
      %v2634 = vadd.f32 %v1949, %v2522
      %v2635 = vadd.f32 %v1952, %v2525
      %v2636 = vadd.f32 %v1957, %v2530
      %v2637 = vadd.f32 %v1960, %v2533
      %v2638 = vadd.f32 %v1965, %v2538
      %v2639 = vadd.f32 %v1968, %v2541
      %v2640 = vadd.f32 %v1973, %v2546
      %v2641 = vadd.f32 %v1976, %v2549
      %v2642 = vadd.f32 %v1981, %v2554
      %v2643 = vadd.f32 %v1984, %v2557
      %v2644 = vadd.f32 %v1989, %v2562
      %v2645 = vadd.f32 %v1992, %v2565
      %v2646 = vadd.f32 %v1997, %v2570
      %v2647 = vadd.f32 %v2000, %v2573
      %v2648 = vadd.f32 %v2005, %v2578
      %v2649 = vadd.f32 %v2008, %v2581
      %v2650 = vadd.f32 %v2013, %v2586
      %v2651 = vadd.f32 %v2016, %v2589
      %v2652 = vadd.f32 %v2021, %v2594
      %v2653 = vadd.f32 %v2024, %v2597
      %v2654 = vadd.f32 %v2029, %v2602
      %v2655 = vadd.f32 %v2032, %v2605
      %v2656 = vadd.f32 %v2037, %v2610
      %v2657 = vadd.f32 %v2040, %v2613
      %v2658 = vadd.f32 %v2045, %v2618
      %v2659 = vadd.f32 %v2048, %v2621
      %v2660 = vld [vmem:[%s5] sm:$0x1]
      %v2662 = vlaneseq
      %v2663 = vshrl.u32 %v2662, 7
      %v2664 = vsub.s32 0, %v2663
      %v2665 = vrot.slane %v2660, %v2664
      %v2667 = vadd.f32 %v2624, %v2665
      %v2668 = vadd.f32 %v2625, %v2665
      %v2669 = vadd.f32 %v2626, %v2665
      %v2670 = vadd.f32 %v2627, %v2665
      %v2671 = vadd.f32 %v2628, %v2665
      %v2672 = vadd.f32 %v2629, %v2665
      %v2673 = vadd.f32 %v2630, %v2665
      %v2674 = vadd.f32 %v2631, %v2665
      %v2675 = vadd.f32 %v2632, %v2665
      %v2676 = vadd.f32 %v2633, %v2665
      %v2677 = vadd.f32 %v2634, %v2665
      %v2678 = vadd.f32 %v2635, %v2665
      %v2679 = vadd.f32 %v2636, %v2665
      %v2680 = vadd.f32 %v2637, %v2665
      %v2681 = vadd.f32 %v2638, %v2665
      %v2682 = vadd.f32 %v2639, %v2665
      %v2683 = vadd.f32 %v2640, %v2665
      %v2684 = vadd.f32 %v2641, %v2665
      %v2685 = vadd.f32 %v2642, %v2665
      %v2686 = vadd.f32 %v2643, %v2665
      %v2687 = vadd.f32 %v2644, %v2665
      %v2688 = vadd.f32 %v2645, %v2665
      %v2689 = vadd.f32 %v2646, %v2665
      %v2690 = vadd.f32 %v2647, %v2665
      %v2691 = vadd.f32 %v2648, %v2665
      %v2692 = vadd.f32 %v2649, %v2665
      %v2693 = vadd.f32 %v2650, %v2665
      %v2694 = vadd.f32 %v2651, %v2665
      %v2695 = vadd.f32 %v2652, %v2665
      %v2696 = vadd.f32 %v2653, %v2665
      %v2697 = vadd.f32 %v2654, %v2665
      %v2698 = vadd.f32 %v2655, %v2665
      %v2699 = vadd.f32 %v2656, %v2665
      %v2700 = vadd.f32 %v2657, %v2665
      %v2701 = vadd.f32 %v2658, %v2665
      %v2702 = vadd.f32 %v2659, %v2665
      %v2703 = vmax.f32 %v2667, 0.0
      %v2704 = vmax.f32 %v2668, 0.0
      %v2705 = vmax.f32 %v2669, 0.0
      %v2706 = vmax.f32 %v2670, 0.0
      %v2707 = vmax.f32 %v2671, 0.0
      %v2708 = vmax.f32 %v2672, 0.0
      %v2709 = vmax.f32 %v2673, 0.0
      %v2710 = vmax.f32 %v2674, 0.0
      %v2711 = vmax.f32 %v2675, 0.0
      %v2712 = vmax.f32 %v2676, 0.0
      %v2713 = vmax.f32 %v2677, 0.0
      %v2714 = vmax.f32 %v2678, 0.0
      %v2715 = vmax.f32 %v2679, 0.0
      %v2716 = vmax.f32 %v2680, 0.0
      %v2717 = vmax.f32 %v2681, 0.0
      %v2718 = vmax.f32 %v2682, 0.0
      %v2719 = vmax.f32 %v2683, 0.0
      %v2720 = vmax.f32 %v2684, 0.0
      %v2721 = vmax.f32 %v2685, 0.0
      %v2722 = vmax.f32 %v2686, 0.0
      %v2723 = vmax.f32 %v2687, 0.0
      %v2724 = vmax.f32 %v2688, 0.0
      %v2725 = vmax.f32 %v2689, 0.0
      %v2726 = vmax.f32 %v2690, 0.0
      %v2727 = vmax.f32 %v2691, 0.0
      %v2728 = vmax.f32 %v2692, 0.0
      %v2729 = vmax.f32 %v2693, 0.0
      %v2730 = vmax.f32 %v2694, 0.0
      %v2731 = vmax.f32 %v2695, 0.0
      %v2732 = vmax.f32 %v2696, 0.0
      %v2733 = vmax.f32 %v2697, 0.0
      %v2734 = vmax.f32 %v2698, 0.0
      %v2735 = vmax.f32 %v2699, 0.0
      %v2736 = vmax.f32 %v2700, 0.0
      %v2737 = vmax.f32 %v2701, 0.0
      %v2738 = vmax.f32 %v2702, 0.0
      %2739 = vst [vmem:[#allocation2] sm:$0x1] 0.0
      %2740 = vst [vmem:[#allocation2 + $0x18] sm:$0x1] 0.0
      %2741 = vst [vmem:[#allocation2 + $0x30] sm:$0x1] 0.0
      %2742 = vst [vmem:[#allocation2 + $0x48] sm:$0x1] 0.0
      %2743 = vst [vmem:[#allocation2 + $0x60] sm:$0x1] 0.0
      %2744 = vst [vmem:[#allocation2 + $0x78] sm:$0x1] 0.0
      %2745 = vst [vmem:[#allocation2 + $0x90] sm:$0x1] 0.0
      %2746 = vst [vmem:[#allocation2 + $0xa8] sm:$0x1] 0.0
      %2747 = vst [vmem:[#allocation2 + $0xc0] sm:$0x1] 0.0
      %2748 = vst [vmem:[#allocation2 + $0xd8] sm:$0x1] 0.0
      %2749 = vst [vmem:[#allocation2 + $0xf0] sm:$0x1] 0.0
      %2750 = vst [vmem:[#allocation2 + $0x108] sm:$0x1] 0.0
      %2751 = vst [vmem:[#allocation2 + $0x120] sm:$0x1] 0.0
      %2752 = vst [vmem:[#allocation2 + $0x138] sm:$0x1] 0.0
      %2753 = vst [vmem:[#allocation2 + $0x150] sm:$0x1] 0.0
      %2754 = vst [vmem:[#allocation2 + $0x168] sm:$0x1] 0.0
      %2755 = vst [vmem:[#allocation2 + $0x180] sm:$0x1] 0.0
      %2756 = vst [vmem:[#allocation2 + $0x198] sm:$0x1] 0.0
      %2757 = vst [vmem:[#allocation2 + $0x11] sm:$0x1] 0.0
      %2758 = vst [vmem:[#allocation2 + $0x29] sm:$0x1] 0.0
      %2759 = vst [vmem:[#allocation2 + $0x41] sm:$0x1] 0.0
      %2760 = vst [vmem:[#allocation2 + $0x59] sm:$0x1] 0.0
      %2761 = vst [vmem:[#allocation2 + $0x71] sm:$0x1] 0.0
      %2762 = vst [vmem:[#allocation2 + $0x89] sm:$0x1] 0.0
      %2763 = vst [vmem:[#allocation2 + $0xa1] sm:$0x1] 0.0
      %2764 = vst [vmem:[#allocation2 + $0xb9] sm:$0x1] 0.0
      %2765 = vst [vmem:[#allocation2 + $0xd1] sm:$0x1] 0.0
      %2766 = vst [vmem:[#allocation2 + $0xe9] sm:$0x1] 0.0
      %2767 = vst [vmem:[#allocation2 + $0x101] sm:$0x1] 0.0
      %2768 = vst [vmem:[#allocation2 + $0x119] sm:$0x1] 0.0
      %2769 = vst [vmem:[#allocation2 + $0x131] sm:$0x1] 0.0
      %2770 = vst [vmem:[#allocation2 + $0x149] sm:$0x1] 0.0
      %2771 = vst [vmem:[#allocation2 + $0x161] sm:$0x1] 0.0
      %2772 = vst [vmem:[#allocation2 + $0x179] sm:$0x1] 0.0
      %2773 = vst [vmem:[#allocation2 + $0x191] sm:$0x1] 0.0
      %2774 = vst [vmem:[#allocation2 + $0x1a9] sm:$0x1] 0.0
      %2775 = vst [vmem:[#allocation2 + $0x1] sm:$0xff] %v2703
      %2776 = vst [vmem:[#allocation2 + $0x9] sm:$0xff] %v2704
      %2777 = vst [vmem:[#allocation2 + $0x19] sm:$0xff] %v2705
      %2778 = vst [vmem:[#allocation2 + $0x21] sm:$0xff] %v2706
      %2779 = vst [vmem:[#allocation2 + $0x31] sm:$0xff] %v2707
      %2780 = vst [vmem:[#allocation2 + $0x39] sm:$0xff] %v2708
      %2781 = vst [vmem:[#allocation2 + $0x49] sm:$0xff] %v2709
      %2782 = vst [vmem:[#allocation2 + $0x51] sm:$0xff] %v2710
      %2783 = vst [vmem:[#allocation2 + $0x61] sm:$0xff] %v2711
      %2784 = vst [vmem:[#allocation2 + $0x69] sm:$0xff] %v2712
      %2785 = vst [vmem:[#allocation2 + $0x79] sm:$0xff] %v2713
      %2786 = vst [vmem:[#allocation2 + $0x81] sm:$0xff] %v2714
      %2787 = vst [vmem:[#allocation2 + $0x91] sm:$0xff] %v2715
      %2788 = vst [vmem:[#allocation2 + $0x99] sm:$0xff] %v2716
      %2789 = vst [vmem:[#allocation2 + $0xa9] sm:$0xff] %v2717
      %2790 = vst [vmem:[#allocation2 + $0xb1] sm:$0xff] %v2718
      %2791 = vst [vmem:[#allocation2 + $0xc1] sm:$0xff] %v2719
      %2792 = vst [vmem:[#allocation2 + $0xc9] sm:$0xff] %v2720
      %2793 = vst [vmem:[#allocation2 + $0xd9] sm:$0xff] %v2721
      %2794 = vst [vmem:[#allocation2 + $0xe1] sm:$0xff] %v2722
      %2795 = vst [vmem:[#allocation2 + $0xf1] sm:$0xff] %v2723
      %2796 = vst [vmem:[#allocation2 + $0xf9] sm:$0xff] %v2724
      %2797 = vst [vmem:[#allocation2 + $0x109] sm:$0xff] %v2725
      %2798 = vst [vmem:[#allocation2 + $0x111] sm:$0xff] %v2726
      %2799 = vst [vmem:[#allocation2 + $0x121] sm:$0xff] %v2727
      %2800 = vst [vmem:[#allocation2 + $0x129] sm:$0xff] %v2728
      %2801 = vst [vmem:[#allocation2 + $0x139] sm:$0xff] %v2729
      %2802 = vst [vmem:[#allocation2 + $0x141] sm:$0xff] %v2730
      %2803 = vst [vmem:[#allocation2 + $0x151] sm:$0xff] %v2731
      %2804 = vst [vmem:[#allocation2 + $0x159] sm:$0xff] %v2732
      %2805 = vst [vmem:[#allocation2 + $0x169] sm:$0xff] %v2733
      %2806 = vst [vmem:[#allocation2 + $0x171] sm:$0xff] %v2734
      %2807 = vst [vmem:[#allocation2 + $0x181] sm:$0xff] %v2735
      %2808 = vst [vmem:[#allocation2 + $0x189] sm:$0xff] %v2736
      %2809 = vst [vmem:[#allocation2 + $0x199] sm:$0xff] %v2737
      %2810 = vst [vmem:[#allocation2 + $0x1a1] sm:$0xff] %v2738
      %p2811 = scmp.eq.s32.totalorder %s23, 0
      // Predicated region
      $region49: #{basic_block_pallas.1} parent=47 // pred_check
        %p2812 = pneg %p2811
      $region50: #{basic_block_pallas.1} parent=47 // pred_check_branch
        %2814 = sbr.rel (%p2812) target = $region52
      $region51: #{basic_block_pallas.1} parent=47 // pred_region
        %2815 = vst [vmem:[#allocation2] sm:$0xff] 0.0
        %2816 = vst [vmem:[#allocation2 + $0x8] sm:$0xff] 0.0
        %2817 = vst [vmem:[#allocation2 + $0x10] sm:$0x3] 0.0
        %s2818 = scalar_lea.vmem [#allocation2], 408
        %2819 = vst [vmem:[%s2818] sm:$0xff] 0.0
        %2820 = vst [vmem:[%s2818 + $0x8] sm:$0xff] 0.0
        %2821 = vst [vmem:[%s2818 + $0x10] sm:$0x3] 0.0
      $region52: #{basic_block_pallas.1} parent=47 // pred_fallthru
        _
      %v2822 = vld [vmem:[#allocation2] sm:$0xff]
      %v2823 = vld [vmem:[#allocation2 + $0x8] sm:$0xff]
      %v2824 = vld [vmem:[#allocation2 + $0x10] sm:$0x3]
      %v2825 = vld [vmem:[#allocation2 + $0x18] sm:$0xff]
      %v2826 = vld [vmem:[#allocation2 + $0x20] sm:$0xff]
      %v2827 = vld [vmem:[#allocation2 + $0x28] sm:$0x3]
      %v2828 = vld [vmem:[#allocation2 + $0x30] sm:$0xff]
      %v2829 = vld [vmem:[#allocation2 + $0x38] sm:$0xff]
      %v2830 = vld [vmem:[#allocation2 + $0x40] sm:$0x3]
      %v2831 = vld [vmem:[#allocation2 + $0x48] sm:$0xff]
      %v2832 = vld [vmem:[#allocation2 + $0x50] sm:$0xff]
      %v2833 = vld [vmem:[#allocation2 + $0x58] sm:$0x3]
      %v2834 = vld [vmem:[#allocation2 + $0x60] sm:$0xff]
      %v2835 = vld [vmem:[#allocation2 + $0x68] sm:$0xff]
      %v2836 = vld [vmem:[#allocation2 + $0x70] sm:$0x3]
      %v2837 = vld [vmem:[#allocation2 + $0x78] sm:$0xff]
      %v2838 = vld [vmem:[#allocation2 + $0x80] sm:$0xff]
      %v2839 = vld [vmem:[#allocation2 + $0x88] sm:$0x3]
      %v2840 = vld [vmem:[#allocation2 + $0x90] sm:$0xff]
      %v2841 = vld [vmem:[#allocation2 + $0x98] sm:$0xff]
      %v2842 = vld [vmem:[#allocation2 + $0xa0] sm:$0x3]
      %v2843 = vld [vmem:[#allocation2 + $0xa8] sm:$0xff]
      %v2844 = vld [vmem:[#allocation2 + $0xb0] sm:$0xff]
      %v2845 = vld [vmem:[#allocation2 + $0xb8] sm:$0x3]
      %v2846 = vld [vmem:[#allocation2 + $0xc0] sm:$0xff]
      %v2847 = vld [vmem:[#allocation2 + $0xc8] sm:$0xff]
      %v2848 = vld [vmem:[#allocation2 + $0xd0] sm:$0x3]
      %v2849 = vld [vmem:[#allocation2 + $0xd8] sm:$0xff]
      %v2850 = vld [vmem:[#allocation2 + $0xe0] sm:$0xff]
      %v2851 = vld [vmem:[#allocation2 + $0xe8] sm:$0x3]
      %v2852 = vld [vmem:[#allocation2 + $0xf0] sm:$0xff]
      %v2853 = vld [vmem:[#allocation2 + $0xf8] sm:$0xff]
      %v2854 = vld [vmem:[#allocation2 + $0x100] sm:$0x3]
      %v2855 = vld [vmem:[#allocation2 + $0x108] sm:$0xff]
      %v2856 = vld [vmem:[#allocation2 + $0x110] sm:$0xff]
      %v2857 = vld [vmem:[#allocation2 + $0x118] sm:$0x3]
      %v2858 = vld [vmem:[#allocation2 + $0x120] sm:$0xff]
      %v2859 = vld [vmem:[#allocation2 + $0x128] sm:$0xff]
      %v2860 = vld [vmem:[#allocation2 + $0x130] sm:$0x3]
      %v2861 = vld [vmem:[#allocation2 + $0x138] sm:$0xff]
      %v2862 = vld [vmem:[#allocation2 + $0x140] sm:$0xff]
      %v2863 = vld [vmem:[#allocation2 + $0x148] sm:$0x3]
      %v2864 = vld [vmem:[#allocation2 + $0x150] sm:$0xff]
      %v2865 = vld [vmem:[#allocation2 + $0x158] sm:$0xff]
      %v2866 = vld [vmem:[#allocation2 + $0x160] sm:$0x3]
      %v2867 = vld [vmem:[#allocation2 + $0x168] sm:$0xff]
      %v2868 = vld [vmem:[#allocation2 + $0x170] sm:$0xff]
      %v2869 = vld [vmem:[#allocation2 + $0x178] sm:$0x3]
      %v2870 = vld [vmem:[#allocation2 + $0x180] sm:$0xff]
      %v2871 = vld [vmem:[#allocation2 + $0x188] sm:$0xff]
      %v2872 = vld [vmem:[#allocation2 + $0x190] sm:$0x3]
      %v2873 = vld [vmem:[#allocation2 + $0x198] sm:$0xff]
      %v2874 = vld [vmem:[#allocation2 + $0x1a0] sm:$0xff]
      %v2875 = vld [vmem:[#allocation2 + $0x1a8] sm:$0x3]
      %v2876 = vpack.c.bf16 %v2823, %v2822
      %v2877 = vpack.c.bf16 %v2824, %v2824
      %v2878 = vpack.c.bf16 %v2826, %v2825
      %v2879 = vpack.c.bf16 %v2827, %v2827
      %v2880 = vpack.c.bf16 %v2829, %v2828
      %v2881 = vpack.c.bf16 %v2830, %v2830
      %v2882 = vpack.c.bf16 %v2832, %v2831
      %v2883 = vpack.c.bf16 %v2833, %v2833
      %v2884 = vpack.c.bf16 %v2835, %v2834
      %v2885 = vpack.c.bf16 %v2836, %v2836
      %v2886 = vpack.c.bf16 %v2838, %v2837
      %v2887 = vpack.c.bf16 %v2839, %v2839
      %v2888 = vpack.c.bf16 %v2841, %v2840
      %v2889 = vpack.c.bf16 %v2842, %v2842
      %v2890 = vpack.c.bf16 %v2844, %v2843
      %v2891 = vpack.c.bf16 %v2845, %v2845
      %v2892 = vpack.c.bf16 %v2847, %v2846
      %v2893 = vpack.c.bf16 %v2848, %v2848
      %v2894 = vpack.c.bf16 %v2850, %v2849
      %v2895 = vpack.c.bf16 %v2851, %v2851
      %v2896 = vpack.c.bf16 %v2853, %v2852
      %v2897 = vpack.c.bf16 %v2854, %v2854
      %v2898 = vpack.c.bf16 %v2856, %v2855
      %v2899 = vpack.c.bf16 %v2857, %v2857
      %v2900 = vpack.c.bf16 %v2859, %v2858
      %v2901 = vpack.c.bf16 %v2860, %v2860
      %v2902 = vpack.c.bf16 %v2862, %v2861
      %v2903 = vpack.c.bf16 %v2863, %v2863
      %v2904 = vpack.c.bf16 %v2865, %v2864
      %v2905 = vpack.c.bf16 %v2866, %v2866
      %v2906 = vpack.c.bf16 %v2868, %v2867
      %v2907 = vpack.c.bf16 %v2869, %v2869
      %v2908 = vpack.c.bf16 %v2871, %v2870
      %v2909 = vpack.c.bf16 %v2872, %v2872
      %v2910 = vpack.c.bf16 %v2874, %v2873
      %v2911 = vpack.c.bf16 %v2875, %v2875
      %v2913 = vshrl.u32 %v2876, 16
      %v2915 = vshll.u32 %v2876, 16
      %v2917 = vrot.slane %v2915, 1
      %v2918 = vor.u32 %v2913, %v2917
      %v2920 = vshll.u32 %v2877, 16
      %v2922 = vrot.slane %v2920, 1
      %v2923 = vsel %vm624, %v2918, %v2922
      %v2925 = vshrl.u32 %v2878, 16
      %v2927 = vshll.u32 %v2878, 16
      %v2929 = vrot.slane %v2927, 1
      %v2930 = vor.u32 %v2925, %v2929
      %v2932 = vshll.u32 %v2879, 16
      %v2934 = vrot.slane %v2932, 1
      %v2935 = vsel %vm624, %v2930, %v2934
      %v2937 = vshrl.u32 %v2880, 16
      %v2939 = vshll.u32 %v2880, 16
      %v2941 = vrot.slane %v2939, 1
      %v2942 = vor.u32 %v2937, %v2941
      %v2944 = vshll.u32 %v2881, 16
      %v2946 = vrot.slane %v2944, 1
      %v2947 = vsel %vm624, %v2942, %v2946
      %v2949 = vshrl.u32 %v2882, 16
      %v2951 = vshll.u32 %v2882, 16
      %v2953 = vrot.slane %v2951, 1
      %v2954 = vor.u32 %v2949, %v2953
      %v2956 = vshll.u32 %v2883, 16
      %v2958 = vrot.slane %v2956, 1
      %v2959 = vsel %vm624, %v2954, %v2958
      %v2961 = vshrl.u32 %v2884, 16
      %v2963 = vshll.u32 %v2884, 16
      %v2965 = vrot.slane %v2963, 1
      %v2966 = vor.u32 %v2961, %v2965
      %v2968 = vshll.u32 %v2885, 16
      %v2970 = vrot.slane %v2968, 1
      %v2971 = vsel %vm624, %v2966, %v2970
      %v2973 = vshrl.u32 %v2886, 16
      %v2975 = vshll.u32 %v2886, 16
      %v2977 = vrot.slane %v2975, 1
      %v2978 = vor.u32 %v2973, %v2977
      %v2980 = vshll.u32 %v2887, 16
      %v2982 = vrot.slane %v2980, 1
      %v2983 = vsel %vm624, %v2978, %v2982
      %v2985 = vshrl.u32 %v2888, 16
      %v2987 = vshll.u32 %v2888, 16
      %v2989 = vrot.slane %v2987, 1
      %v2990 = vor.u32 %v2985, %v2989
      %v2992 = vshll.u32 %v2889, 16
      %v2994 = vrot.slane %v2992, 1
      %v2995 = vsel %vm624, %v2990, %v2994
      %v2997 = vshrl.u32 %v2890, 16
      %v2999 = vshll.u32 %v2890, 16
      %v3001 = vrot.slane %v2999, 1
      %v3002 = vor.u32 %v2997, %v3001
      %v3004 = vshll.u32 %v2891, 16
      %v3006 = vrot.slane %v3004, 1
      %v3007 = vsel %vm624, %v3002, %v3006
      %v3009 = vshrl.u32 %v2892, 16
      %v3011 = vshll.u32 %v2892, 16
      %v3013 = vrot.slane %v3011, 1
      %v3014 = vor.u32 %v3009, %v3013
      %v3016 = vshll.u32 %v2893, 16
      %v3018 = vrot.slane %v3016, 1
      %v3019 = vsel %vm624, %v3014, %v3018
      %v3021 = vshrl.u32 %v2894, 16
      %v3023 = vshll.u32 %v2894, 16
      %v3025 = vrot.slane %v3023, 1
      %v3026 = vor.u32 %v3021, %v3025
      %v3028 = vshll.u32 %v2895, 16
      %v3030 = vrot.slane %v3028, 1
      %v3031 = vsel %vm624, %v3026, %v3030
      %v3033 = vshrl.u32 %v2896, 16
      %v3035 = vshll.u32 %v2896, 16
      %v3037 = vrot.slane %v3035, 1
      %v3038 = vor.u32 %v3033, %v3037
      %v3040 = vshll.u32 %v2897, 16
      %v3042 = vrot.slane %v3040, 1
      %v3043 = vsel %vm624, %v3038, %v3042
      %v3045 = vshrl.u32 %v2898, 16
      %v3047 = vshll.u32 %v2898, 16
      %v3049 = vrot.slane %v3047, 1
      %v3050 = vor.u32 %v3045, %v3049
      %v3052 = vshll.u32 %v2899, 16
      %v3054 = vrot.slane %v3052, 1
      %v3055 = vsel %vm624, %v3050, %v3054
      %v3057 = vshrl.u32 %v2900, 16
      %v3059 = vshll.u32 %v2900, 16
      %v3061 = vrot.slane %v3059, 1
      %v3062 = vor.u32 %v3057, %v3061
      %v3064 = vshll.u32 %v2901, 16
      %v3066 = vrot.slane %v3064, 1
      %v3067 = vsel %vm624, %v3062, %v3066
      %v3069 = vshrl.u32 %v2902, 16
      %v3071 = vshll.u32 %v2902, 16
      %v3073 = vrot.slane %v3071, 1
      %v3074 = vor.u32 %v3069, %v3073
      %v3076 = vshll.u32 %v2903, 16
      %v3078 = vrot.slane %v3076, 1
      %v3079 = vsel %vm624, %v3074, %v3078
      %v3081 = vshrl.u32 %v2904, 16
      %v3083 = vshll.u32 %v2904, 16
      %v3085 = vrot.slane %v3083, 1
      %v3086 = vor.u32 %v3081, %v3085
      %v3088 = vshll.u32 %v2905, 16
      %v3090 = vrot.slane %v3088, 1
      %v3091 = vsel %vm624, %v3086, %v3090
      %v3093 = vshrl.u32 %v2906, 16
      %v3095 = vshll.u32 %v2906, 16
      %v3097 = vrot.slane %v3095, 1
      %v3098 = vor.u32 %v3093, %v3097
      %v3100 = vshll.u32 %v2907, 16
      %v3102 = vrot.slane %v3100, 1
      %v3103 = vsel %vm624, %v3098, %v3102
      %v3152 = vrot.slane %v2876, 1
      %v3153 = vrot.slane %v2877, 1
      %v3154 = vsel %vm859, %v3152, %v3153
      %v3155 = vrot.slane %v2878, 1
      %v3156 = vrot.slane %v2879, 1
      %v3157 = vsel %vm859, %v3155, %v3156
      %v3158 = vrot.slane %v2880, 1
      %v3159 = vrot.slane %v2881, 1
      %v3160 = vsel %vm859, %v3158, %v3159
      %v3161 = vrot.slane %v2882, 1
      %v3162 = vrot.slane %v2883, 1
      %v3163 = vsel %vm859, %v3161, %v3162
      %v3164 = vrot.slane %v2884, 1
      %v3165 = vrot.slane %v2885, 1
      %v3166 = vsel %vm859, %v3164, %v3165
      %v3167 = vrot.slane %v2886, 1
      %v3168 = vrot.slane %v2887, 1
      %v3169 = vsel %vm859, %v3167, %v3168
      %v3170 = vrot.slane %v2888, 1
      %v3171 = vrot.slane %v2889, 1
      %v3172 = vsel %vm859, %v3170, %v3171
      %v3173 = vrot.slane %v2890, 1
      %v3174 = vrot.slane %v2891, 1
      %v3175 = vsel %vm859, %v3173, %v3174
      %v3176 = vrot.slane %v2892, 1
      %v3177 = vrot.slane %v2893, 1
      %v3178 = vsel %vm859, %v3176, %v3177
      %v3179 = vrot.slane %v2894, 1
      %v3180 = vrot.slane %v2895, 1
      %v3181 = vsel %vm859, %v3179, %v3180
      %v3182 = vrot.slane %v2896, 1
      %v3183 = vrot.slane %v2897, 1
      %v3184 = vsel %vm859, %v3182, %v3183
      %v3185 = vrot.slane %v2898, 1
      %v3186 = vrot.slane %v2899, 1
      %v3187 = vsel %vm859, %v3185, %v3186
      %v3188 = vrot.slane %v2900, 1
      %v3189 = vrot.slane %v2901, 1
      %v3190 = vsel %vm859, %v3188, %v3189
      %v3191 = vrot.slane %v2902, 1
      %v3192 = vrot.slane %v2903, 1
      %v3193 = vsel %vm859, %v3191, %v3192
      %v3194 = vrot.slane %v2904, 1
      %v3195 = vrot.slane %v2905, 1
      %v3196 = vsel %vm859, %v3194, %v3195
      %v3197 = vrot.slane %v2906, 1
      %v3198 = vrot.slane %v2907, 1
      %v3199 = vsel %vm859, %v3197, %v3198
      %v3216 = vld [vmem:[%s3] sm:$0xf]
      %v3217 = vld [vmem:[%s3 + $0x4] sm:$0xf]
      %v3218 = vld [vmem:[%s3 + $0x8] sm:$0xf]
      %v3219 = vld [vmem:[%s3 + $0xc] sm:$0xf]
      %v3220 = vld [vmem:[%s3 + $0x10] sm:$0xf]
      %v3221 = vld [vmem:[%s3 + $0x14] sm:$0xf]
      %v3222 = vld [vmem:[%s3 + $0x18] sm:$0xf]
      %v3223 = vld [vmem:[%s3 + $0x1c] sm:$0xf]
      %v3224 = vld [vmem:[%s3 + $0x20] sm:$0xf]
      %v3225 = vld [vmem:[%s3 + $0x24] sm:$0xf]
      %v3226 = vld [vmem:[%s3 + $0x28] sm:$0xf]
      %v3227 = vld [vmem:[%s3 + $0x2c] sm:$0xf]
      %v3228 = vld [vmem:[%s3 + $0x30] sm:$0xf]
      %v3229 = vld [vmem:[%s3 + $0x34] sm:$0xf]
      %v3230 = vld [vmem:[%s3 + $0x38] sm:$0xf]
      %v3231 = vld [vmem:[%s3 + $0x3c] sm:$0xf]
      %v3232 = vld [vmem:[%s3 + $0x40] sm:$0xf]
      %v3233 = vld [vmem:[%s3 + $0x44] sm:$0xf]
      %v3234 = vld [vmem:[%s3 + $0x48] sm:$0xf]
      %v3235 = vld [vmem:[%s3 + $0x4c] sm:$0xf]
      %v3236 = vld [vmem:[%s3 + $0x50] sm:$0xf]
      %v3237 = vld [vmem:[%s3 + $0x54] sm:$0xf]
      %v3238 = vld [vmem:[%s3 + $0x58] sm:$0xf]
      %v3239 = vld [vmem:[%s3 + $0x5c] sm:$0xf]
      %v3240 = vld [vmem:[%s3 + $0x60] sm:$0xf]
      %v3241 = vld [vmem:[%s3 + $0x64] sm:$0xf]
      %v3242 = vld [vmem:[%s3 + $0x68] sm:$0xf]
      %v3243 = vld [vmem:[%s3 + $0x6c] sm:$0xf]
      %v3244 = vld [vmem:[%s3 + $0x70] sm:$0xf]
      %v3245 = vld [vmem:[%s3 + $0x74] sm:$0xf]
      %v3246 = vld [vmem:[%s3 + $0x78] sm:$0xf]
      %v3247 = vld [vmem:[%s3 + $0x7c] sm:$0xf]
      %v3248 = vld [vmem:[%s3 + $0x80] sm:$0xf]
      %v3249 = vld [vmem:[%s3 + $0x84] sm:$0xf]
      %v3250 = vld [vmem:[%s3 + $0x88] sm:$0xf]
      %v3251 = vld [vmem:[%s3 + $0x8c] sm:$0xf]
      %v3252 = vld [vmem:[%s3 + $0x90] sm:$0xf]
      %v3253 = vld [vmem:[%s3 + $0x94] sm:$0xf]
      %v3254 = vld [vmem:[%s3 + $0x98] sm:$0xf]
      %v3255 = vld [vmem:[%s3 + $0x9c] sm:$0xf]
      %v3256 = vld [vmem:[%s3 + $0xa0] sm:$0xf]
      %v3257 = vld [vmem:[%s3 + $0xa4] sm:$0xf]
      %v3258 = vld [vmem:[%s3 + $0xa8] sm:$0xf]
      %v3259 = vld [vmem:[%s3 + $0xac] sm:$0xf]
      %v3260 = vld [vmem:[%s3 + $0xb0] sm:$0xf]
      %v3261 = vld [vmem:[%s3 + $0xb4] sm:$0xf]
      %v3262 = vld [vmem:[%s3 + $0xb8] sm:$0xf]
      %v3263 = vld [vmem:[%s3 + $0xbc] sm:$0xf]
      %v3265 = vshrl.u32 %v2908, 16
      %v3267 = vshll.u32 %v2908, 16
      %v3269 = vrot.slane %v3267, 1
      %v3270 = vor.u32 %v3265, %v3269
      %v3272 = vshll.u32 %v2909, 16
      %v3274 = vrot.slane %v3272, 1
      %v3275 = vsel %vm624, %v3270, %v3274
      %v3279 = vrot.slane %v2908, 1
      %v3280 = vrot.slane %v2909, 1
      %v3281 = vsel %vm859, %v3279, %v3280
      %s3283 = scalar_lea.vmem %s3, 192
      %v3284 = vld [vmem:[%s3283] sm:$0xf]
      %v3285 = vld [vmem:[%s3283 + $0x4] sm:$0xf]
      %v3286 = vld [vmem:[%s3283 + $0x8] sm:$0xf]
      %v3287 = vld [vmem:[%s3283 + $0xc] sm:$0xf]
      %v3288 = vld [vmem:[%s3283 + $0x10] sm:$0xf]
      %v3289 = vld [vmem:[%s3283 + $0x14] sm:$0xf]
      %v3290 = vld [vmem:[%s3283 + $0x18] sm:$0xf]
      %v3291 = vld [vmem:[%s3283 + $0x1c] sm:$0xf]
      %v3292 = vld [vmem:[%s3283 + $0x20] sm:$0xf]
      %v3293 = vld [vmem:[%s3283 + $0x24] sm:$0xf]
      %v3294 = vld [vmem:[%s3283 + $0x28] sm:$0xf]
      %v3295 = vld [vmem:[%s3283 + $0x2c] sm:$0xf]
      %v3296 = vld [vmem:[%s3283 + $0x30] sm:$0xf]
      %v3297 = vld [vmem:[%s3283 + $0x34] sm:$0xf]
      %v3298 = vld [vmem:[%s3283 + $0x38] sm:$0xf]
      %v3299 = vld [vmem:[%s3283 + $0x3c] sm:$0xf]
      %v3300 = vld [vmem:[%s3283 + $0x40] sm:$0xf]
      %v3301 = vld [vmem:[%s3283 + $0x44] sm:$0xf]
      %v3302 = vld [vmem:[%s3283 + $0x48] sm:$0xf]
      %v3303 = vld [vmem:[%s3283 + $0x4c] sm:$0xf]
      %v3304 = vld [vmem:[%s3283 + $0x50] sm:$0xf]
      %v3305 = vld [vmem:[%s3283 + $0x54] sm:$0xf]
      %v3306 = vld [vmem:[%s3283 + $0x58] sm:$0xf]
      %v3307 = vld [vmem:[%s3283 + $0x5c] sm:$0xf]
      %v3308 = vld [vmem:[%s3283 + $0x60] sm:$0xf]
      %v3309 = vld [vmem:[%s3283 + $0x64] sm:$0xf]
      %v3310 = vld [vmem:[%s3283 + $0x68] sm:$0xf]
      %v3311 = vld [vmem:[%s3283 + $0x6c] sm:$0xf]
      %v3312 = vld [vmem:[%s3283 + $0x70] sm:$0xf]
      %v3313 = vld [vmem:[%s3283 + $0x74] sm:$0xf]
      %v3314 = vld [vmem:[%s3283 + $0x78] sm:$0xf]
      %v3315 = vld [vmem:[%s3283 + $0x7c] sm:$0xf]
      %v3316 = vld [vmem:[%s3283 + $0x80] sm:$0xf]
      %v3317 = vld [vmem:[%s3283 + $0x84] sm:$0xf]
      %v3318 = vld [vmem:[%s3283 + $0x88] sm:$0xf]
      %v3319 = vld [vmem:[%s3283 + $0x8c] sm:$0xf]
      %v3320 = vld [vmem:[%s3283 + $0x90] sm:$0xf]
      %v3321 = vld [vmem:[%s3283 + $0x94] sm:$0xf]
      %v3322 = vld [vmem:[%s3283 + $0x98] sm:$0xf]
      %v3323 = vld [vmem:[%s3283 + $0x9c] sm:$0xf]
      %v3324 = vld [vmem:[%s3283 + $0xa0] sm:$0xf]
      %v3325 = vld [vmem:[%s3283 + $0xa4] sm:$0xf]
      %v3326 = vld [vmem:[%s3283 + $0xa8] sm:$0xf]
      %v3327 = vld [vmem:[%s3283 + $0xac] sm:$0xf]
      %v3328 = vld [vmem:[%s3283 + $0xb0] sm:$0xf]
      %v3329 = vld [vmem:[%s3283 + $0xb4] sm:$0xf]
      %v3330 = vld [vmem:[%s3283 + $0xb8] sm:$0xf]
      %v3331 = vld [vmem:[%s3283 + $0xbc] sm:$0xf]
      %v3380 = vunpack.c.l.b16 %v3284
      %v3381 = vunpack.c.l.b16 %v3285
      %v3382 = vunpack.c.l.b16 %v3286
      %v3383 = vunpack.c.l.b16 %v3287
      %v3384 = vunpack.c.l.b16 %v3288
      %v3385 = vunpack.c.l.b16 %v3289
      %v3386 = vunpack.c.l.b16 %v3290
      %v3387 = vunpack.c.l.b16 %v3291
      %v3388 = vunpack.c.l.b16 %v3292
      %v3389 = vunpack.c.l.b16 %v3293
      %v3390 = vunpack.c.l.b16 %v3294
      %v3391 = vunpack.c.l.b16 %v3295
      %v3392 = vunpack.c.l.b16 %v3296
      %v3393 = vunpack.c.l.b16 %v3297
      %v3394 = vunpack.c.l.b16 %v3298
      %v3395 = vunpack.c.l.b16 %v3299
      %v3396 = vunpack.c.l.b16 %v3300
      %v3397 = vunpack.c.l.b16 %v3301
      %v3398 = vunpack.c.l.b16 %v3302
      %v3399 = vunpack.c.l.b16 %v3303
      %v3400 = vunpack.c.l.b16 %v3304
      %v3401 = vunpack.c.l.b16 %v3305
      %v3402 = vunpack.c.l.b16 %v3306
      %v3403 = vunpack.c.l.b16 %v3307
      %v3404 = vunpack.c.l.b16 %v3308
      %v3405 = vunpack.c.l.b16 %v3309
      %v3406 = vunpack.c.l.b16 %v3310
      %v3407 = vunpack.c.l.b16 %v3311
      %v3408 = vunpack.c.l.b16 %v3312
      %v3409 = vunpack.c.l.b16 %v3313
      %v3410 = vunpack.c.l.b16 %v3314
      %v3411 = vunpack.c.l.b16 %v3315
      %v3412 = vunpack.c.l.b16 %v3316
      %v3413 = vunpack.c.l.b16 %v3317
      %v3414 = vunpack.c.l.b16 %v3318
      %v3415 = vunpack.c.l.b16 %v3319
      %v3416 = vunpack.c.l.b16 %v3320
      %v3417 = vunpack.c.l.b16 %v3321
      %v3418 = vunpack.c.l.b16 %v3322
      %v3419 = vunpack.c.l.b16 %v3323
      %v3420 = vunpack.c.l.b16 %v3324
      %v3421 = vunpack.c.l.b16 %v3325
      %v3422 = vunpack.c.l.b16 %v3326
      %v3423 = vunpack.c.l.b16 %v3327
      %v3424 = vunpack.c.l.b16 %v3328
      %v3425 = vunpack.c.l.b16 %v3329
      %v3426 = vunpack.c.l.b16 %v3330
      %v3427 = vunpack.c.l.b16 %v3331
      %v3428 = vpack.c.b16 %v3381, %v3380
      %v3429 = vpack.c.b16 %v3383, %v3382
      %v3430 = vpack.c.b16 %v3385, %v3384
      %v3431 = vpack.c.b16 %v3387, %v3386
      %v3432 = vpack.c.b16 %v3389, %v3388
      %v3433 = vpack.c.b16 %v3391, %v3390
      %v3434 = vpack.c.b16 %v3393, %v3392
      %v3435 = vpack.c.b16 %v3395, %v3394
      %v3436 = vpack.c.b16 %v3397, %v3396
      %v3437 = vpack.c.b16 %v3399, %v3398
      %v3438 = vpack.c.b16 %v3401, %v3400
      %v3439 = vpack.c.b16 %v3403, %v3402
      %v3440 = vpack.c.b16 %v3405, %v3404
      %v3441 = vpack.c.b16 %v3407, %v3406
      %v3442 = vpack.c.b16 %v3409, %v3408
      %v3443 = vpack.c.b16 %v3411, %v3410
      %v3444 = vpack.c.b16 %v3413, %v3412
      %v3445 = vpack.c.b16 %v3415, %v3414
      %v3446 = vpack.c.b16 %v3417, %v3416
      %v3447 = vpack.c.b16 %v3419, %v3418
      %v3448 = vpack.c.b16 %v3421, %v3420
      %v3449 = vpack.c.b16 %v3423, %v3422
      %v3450 = vpack.c.b16 %v3425, %v3424
      %v3451 = vpack.c.b16 %v3427, %v3426
      %3476 = vmatprep.subr.bf16.mxu0 0
      %3477 = vmatpush1.bf16.msra.mxu0 %v3435
      %3478 = vmatprep.subr.bf16.mxu0 0
      %3479 = vmatpush1.bf16.msra.mxu0 %v3434
      %3480 = vmatprep.subr.bf16.mxu0 0
      %3481 = vmatpush1.bf16.msra.mxu0 %v3433
      %3482 = vmatprep.subr.bf16.mxu0 0
      %3483 = vmatpush1.bf16.msra.mxu0 %v3432
      %3484 = vmatprep.subr.bf16.mxu0 0
      %3485 = vmatpush1.bf16.msra.mxu0 %v3431
      %3486 = vmatprep.subr.bf16.mxu0 0
      %3487 = vmatpush1.bf16.msra.mxu0 %v3430
      %3488 = vmatprep.subr.bf16.mxu0 0
      %3489 = vmatpush1.bf16.msra.mxu0 %v3429
      %3490 = vmatprep.subr.bf16.mxu0 0
      %3491 = vmatpush1.bf16.msra.mxu0 %v3428
      %3492 = vmatprep.subr.bf16.mxu0 0
      %3493 = vmatpush2.bf16.msra.mxu0 %v3443
      %3494 = vmatprep.subr.bf16.mxu0 0
      %3495 = vmatpush2.bf16.msra.mxu0 %v3442
      %3496 = vmatprep.subr.bf16.mxu0 0
      %3497 = vmatpush2.bf16.msra.mxu0 %v3441
      %3498 = vmatprep.subr.bf16.mxu0 0
      %3499 = vmatpush2.bf16.msra.mxu0 %v3440
      %3500 = vmatprep.subr.bf16.mxu0 0
      %3501 = vmatpush2.bf16.msra.mxu0 %v3439
      %3502 = vmatprep.subr.bf16.mxu0 0
      %3503 = vmatpush2.bf16.msra.mxu0 %v3438
      %3504 = vmatprep.subr.bf16.mxu0 0
      %3505 = vmatpush2.bf16.msra.mxu0 %v3437
      %3506 = vmatprep.subr.bf16.mxu0 0
      %3507 = vmatpush2.bf16.msra.mxu0 %v3436
      %3508 = vmatprep.mubr.bf16.mxu0 %v2935
      %3509 = vmatmul.mubr.bf16.gmra.mxu0 %v2878
      %v3510 = vpop.f32.mrf.mxu0
      %v3511 = vadd.f32 0.0, %v3510
      %v3512 = vpop.f32.mrf.mxu0
      %v3513 = vpop.f32.mrf.mxu0
      %v3514 = vadd.f32 0.0, %v3513
      %v3515 = vpop.f32.mrf.mxu0
      %3516 = vmatprep.mubr.bf16.mxu0 %v2947
      %3517 = vmatmul.mubr.bf16.gmra.mxu0 %v2880
      %v3518 = vpop.f32.mrf.mxu0
      %v3519 = vadd.f32 0.0, %v3518
      %v3520 = vpop.f32.mrf.mxu0
      %v3521 = vpop.f32.mrf.mxu0
      %v3522 = vadd.f32 0.0, %v3521
      %v3523 = vpop.f32.mrf.mxu0
      %3524 = vmatprep.mubr.bf16.mxu0 %v2959
      %3525 = vmatmul.mubr.bf16.gmra.mxu0 %v2882
      %v3526 = vpop.f32.mrf.mxu0
      %v3527 = vadd.f32 0.0, %v3526
      %v3528 = vpop.f32.mrf.mxu0
      %v3529 = vpop.f32.mrf.mxu0
      %v3530 = vadd.f32 0.0, %v3529
      %v3531 = vpop.f32.mrf.mxu0
      %3532 = vmatprep.mubr.bf16.mxu0 %v2971
      %3533 = vmatmul.mubr.bf16.gmra.mxu0 %v2884
      %v3534 = vpop.f32.mrf.mxu0
      %v3535 = vadd.f32 0.0, %v3534
      %v3536 = vpop.f32.mrf.mxu0
      %v3537 = vpop.f32.mrf.mxu0
      %v3538 = vadd.f32 0.0, %v3537
      %v3539 = vpop.f32.mrf.mxu0
      %3540 = vmatprep.mubr.bf16.mxu0 %v2983
      %3541 = vmatmul.mubr.bf16.gmra.mxu0 %v2886
      %v3542 = vpop.f32.mrf.mxu0
      %v3543 = vadd.f32 0.0, %v3542
      %v3544 = vpop.f32.mrf.mxu0
      %v3545 = vpop.f32.mrf.mxu0
      %v3546 = vadd.f32 0.0, %v3545
      %v3547 = vpop.f32.mrf.mxu0
      %3548 = vmatprep.mubr.bf16.mxu0 %v2995
      %3549 = vmatmul.mubr.bf16.gmra.mxu0 %v2888
      %v3550 = vpop.f32.mrf.mxu0
      %v3551 = vadd.f32 0.0, %v3550
      %v3552 = vpop.f32.mrf.mxu0
      %v3553 = vpop.f32.mrf.mxu0
      %v3554 = vadd.f32 0.0, %v3553
      %v3555 = vpop.f32.mrf.mxu0
      %3556 = vmatprep.mubr.bf16.mxu0 %v3007
      %3557 = vmatmul.mubr.bf16.gmra.mxu0 %v2890
      %v3558 = vpop.f32.mrf.mxu0
      %v3559 = vadd.f32 0.0, %v3558
      %v3560 = vpop.f32.mrf.mxu0
      %v3561 = vpop.f32.mrf.mxu0
      %v3562 = vadd.f32 0.0, %v3561
      %v3563 = vpop.f32.mrf.mxu0
      %3564 = vmatprep.mubr.bf16.mxu0 %v3019
      %3565 = vmatmul.mubr.bf16.gmra.mxu0 %v2892
      %v3566 = vpop.f32.mrf.mxu0
      %v3567 = vadd.f32 0.0, %v3566
      %v3568 = vpop.f32.mrf.mxu0
      %v3569 = vpop.f32.mrf.mxu0
      %v3570 = vadd.f32 0.0, %v3569
      %v3571 = vpop.f32.mrf.mxu0
      %3572 = vmatprep.mubr.bf16.mxu0 %v3031
      %3573 = vmatmul.mubr.bf16.gmra.mxu0 %v2894
      %v3574 = vpop.f32.mrf.mxu0
      %v3575 = vadd.f32 0.0, %v3574
      %v3576 = vpop.f32.mrf.mxu0
      %v3577 = vpop.f32.mrf.mxu0
      %v3578 = vadd.f32 0.0, %v3577
      %v3579 = vpop.f32.mrf.mxu0
      %3580 = vmatprep.mubr.bf16.mxu0 %v3043
      %3581 = vmatmul.mubr.bf16.gmra.mxu0 %v2896
      %v3582 = vpop.f32.mrf.mxu0
      %v3583 = vadd.f32 0.0, %v3582
      %v3584 = vpop.f32.mrf.mxu0
      %v3585 = vpop.f32.mrf.mxu0
      %v3586 = vadd.f32 0.0, %v3585
      %v3587 = vpop.f32.mrf.mxu0
      %3588 = vmatprep.mubr.bf16.mxu0 %v3055
      %3589 = vmatmul.mubr.bf16.gmra.mxu0 %v2898
      %v3590 = vpop.f32.mrf.mxu0
      %v3591 = vadd.f32 0.0, %v3590
      %v3592 = vpop.f32.mrf.mxu0
      %v3593 = vpop.f32.mrf.mxu0
      %v3594 = vadd.f32 0.0, %v3593
      %v3595 = vpop.f32.mrf.mxu0
      %3596 = vmatprep.mubr.bf16.mxu0 %v3067
      %3597 = vmatmul.mubr.bf16.gmra.mxu0 %v2900
      %v3598 = vpop.f32.mrf.mxu0
      %v3599 = vadd.f32 0.0, %v3598
      %v3600 = vpop.f32.mrf.mxu0
      %v3601 = vpop.f32.mrf.mxu0
      %v3602 = vadd.f32 0.0, %v3601
      %v3603 = vpop.f32.mrf.mxu0
      %3604 = vmatprep.mubr.bf16.mxu0 %v3079
      %3605 = vmatmul.mubr.bf16.gmra.mxu0 %v2902
      %v3606 = vpop.f32.mrf.mxu0
      %v3607 = vadd.f32 0.0, %v3606
      %v3608 = vpop.f32.mrf.mxu0
      %v3609 = vpop.f32.mrf.mxu0
      %v3610 = vadd.f32 0.0, %v3609
      %v3611 = vpop.f32.mrf.mxu0
      %3612 = vmatprep.mubr.bf16.mxu0 %v3091
      %3613 = vmatmul.mubr.bf16.gmra.mxu0 %v2904
      %v3614 = vpop.f32.mrf.mxu0
      %v3615 = vadd.f32 0.0, %v3614
      %v3616 = vpop.f32.mrf.mxu0
      %v3617 = vpop.f32.mrf.mxu0
      %v3618 = vadd.f32 0.0, %v3617
      %v3619 = vpop.f32.mrf.mxu0
      %3620 = vmatprep.mubr.bf16.mxu0 %v3103
      %3621 = vmatmul.mubr.bf16.gmra.mxu0 %v2906
      %v3622 = vpop.f32.mrf.mxu0
      %v3623 = vadd.f32 0.0, %v3622
      %v3624 = vpop.f32.mrf.mxu0
      %v3625 = vpop.f32.mrf.mxu0
      %v3626 = vadd.f32 0.0, %v3625
      %v3627 = vpop.f32.mrf.mxu0
      %3628 = vmatprep.mubr.bf16.mxu0 %v3275
      %3629 = vmatmul.mubr.bf16.gmra.mxu0 %v2908
      %v3630 = vpop.f32.mrf.mxu0
      %v3631 = vadd.f32 0.0, %v3630
      %v3632 = vpop.f32.mrf.mxu0
      %v3633 = vpop.f32.mrf.mxu0
      %v3634 = vadd.f32 0.0, %v3633
      %v3635 = vpop.f32.mrf.mxu0
      %3636 = vdwg.mxu0
      %3637 = vmatprep.subr.bf16.mxu0 0
      %3638 = vmatpush1.bf16.msra.mxu0 %v3451
      %3639 = vmatprep.subr.bf16.mxu0 0
      %3640 = vmatpush1.bf16.msra.mxu0 %v3450
      %3641 = vmatprep.subr.bf16.mxu0 0
      %3642 = vmatpush1.bf16.msra.mxu0 %v3449
      %3643 = vmatprep.subr.bf16.mxu0 0
      %3644 = vmatpush1.bf16.msra.mxu0 %v3448
      %3645 = vmatprep.subr.bf16.mxu0 0
      %3646 = vmatpush1.bf16.msra.mxu0 %v3447
      %3647 = vmatprep.subr.bf16.mxu0 0
      %3648 = vmatpush1.bf16.msra.mxu0 %v3446
      %3649 = vmatprep.subr.bf16.mxu0 0
      %3650 = vmatpush1.bf16.msra.mxu0 %v3445
      %3651 = vmatprep.subr.bf16.mxu0 0
      %3652 = vmatpush1.bf16.msra.mxu0 %v3444
      %3653 = vmatprep.subr.bf16.mxu0 0
      %3654 = vmatpush2.bf16.msra.mxu0 0
      %3655 = vmatprep.subr.bf16.mxu0 0
      %3656 = vmatpush2.bf16.msra.mxu0 0
      %3657 = vmatprep.subr.bf16.mxu0 0
      %3658 = vmatpush2.bf16.msra.mxu0 0
      %3659 = vmatprep.subr.bf16.mxu0 0
      %3660 = vmatpush2.bf16.msra.mxu0 0
      %3661 = vmatprep.subr.bf16.mxu0 0
      %3662 = vmatpush2.bf16.msra.mxu0 0
      %3663 = vmatprep.subr.bf16.mxu0 0
      %3664 = vmatpush2.bf16.msra.mxu0 0
      %3665 = vmatprep.subr.bf16.mxu0 0
      %3666 = vmatpush2.bf16.msra.mxu0 0
      %3667 = vmatprep.subr.bf16.mxu0 0
      %3668 = vmatpush2.bf16.msra.mxu0 0
      %3669 = vmatprep.mubr.bf16.mxu0 0
      %3670 = vmatmul.mubr.bf16.gmra.mxu0 %v3157
      %v3671 = vpop.f32.mrf.mxu0
      %v3672 = vadd.f32 %v3511, %v3671
      %v3673 = vpop.f32.mrf.mxu0
      %v3674 = vpop.f32.mrf.mxu0
      %v3675 = vadd.f32 %v3514, %v3674
      %v3676 = vpop.f32.mrf.mxu0
      %3677 = vmatprep.mubr.bf16.mxu0 0
      %3678 = vmatmul.mubr.bf16.gmra.mxu0 %v3160
      %v3679 = vpop.f32.mrf.mxu0
      %v3680 = vadd.f32 %v3519, %v3679
      %v3681 = vpop.f32.mrf.mxu0
      %v3682 = vpop.f32.mrf.mxu0
      %v3683 = vadd.f32 %v3522, %v3682
      %v3684 = vpop.f32.mrf.mxu0
      %3685 = vmatprep.mubr.bf16.mxu0 0
      %3686 = vmatmul.mubr.bf16.gmra.mxu0 %v3163
      %v3687 = vpop.f32.mrf.mxu0
      %v3688 = vadd.f32 %v3527, %v3687
      %v3689 = vpop.f32.mrf.mxu0
      %v3690 = vpop.f32.mrf.mxu0
      %v3691 = vadd.f32 %v3530, %v3690
      %v3692 = vpop.f32.mrf.mxu0
      %3693 = vmatprep.mubr.bf16.mxu0 0
      %3694 = vmatmul.mubr.bf16.gmra.mxu0 %v3166
      %v3695 = vpop.f32.mrf.mxu0
      %v3696 = vadd.f32 %v3535, %v3695
      %v3697 = vpop.f32.mrf.mxu0
      %v3698 = vpop.f32.mrf.mxu0
      %v3699 = vadd.f32 %v3538, %v3698
      %v3700 = vpop.f32.mrf.mxu0
      %3701 = vmatprep.mubr.bf16.mxu0 0
      %3702 = vmatmul.mubr.bf16.gmra.mxu0 %v3169
      %v3703 = vpop.f32.mrf.mxu0
      %v3704 = vadd.f32 %v3543, %v3703
      %v3705 = vpop.f32.mrf.mxu0
      %v3706 = vpop.f32.mrf.mxu0
      %v3707 = vadd.f32 %v3546, %v3706
      %v3708 = vpop.f32.mrf.mxu0
      %3709 = vmatprep.mubr.bf16.mxu0 0
      %3710 = vmatmul.mubr.bf16.gmra.mxu0 %v3172
      %v3711 = vpop.f32.mrf.mxu0
      %v3712 = vadd.f32 %v3551, %v3711
      %v3713 = vpop.f32.mrf.mxu0
      %v3714 = vpop.f32.mrf.mxu0
      %v3715 = vadd.f32 %v3554, %v3714
      %v3716 = vpop.f32.mrf.mxu0
      %3717 = vmatprep.mubr.bf16.mxu0 0
      %3718 = vmatmul.mubr.bf16.gmra.mxu0 %v3175
      %v3719 = vpop.f32.mrf.mxu0
      %v3720 = vadd.f32 %v3559, %v3719
      %v3721 = vpop.f32.mrf.mxu0
      %v3722 = vpop.f32.mrf.mxu0
      %v3723 = vadd.f32 %v3562, %v3722
      %v3724 = vpop.f32.mrf.mxu0
      %3725 = vmatprep.mubr.bf16.mxu0 0
      %3726 = vmatmul.mubr.bf16.gmra.mxu0 %v3178
      %v3727 = vpop.f32.mrf.mxu0
      %v3728 = vadd.f32 %v3567, %v3727
      %v3729 = vpop.f32.mrf.mxu0
      %v3730 = vpop.f32.mrf.mxu0
      %v3731 = vadd.f32 %v3570, %v3730
      %v3732 = vpop.f32.mrf.mxu0
      %3733 = vmatprep.mubr.bf16.mxu0 0
      %3734 = vmatmul.mubr.bf16.gmra.mxu0 %v3181
      %v3735 = vpop.f32.mrf.mxu0
      %v3736 = vadd.f32 %v3575, %v3735
      %v3737 = vpop.f32.mrf.mxu0
      %v3738 = vpop.f32.mrf.mxu0
      %v3739 = vadd.f32 %v3578, %v3738
      %v3740 = vpop.f32.mrf.mxu0
      %3741 = vmatprep.mubr.bf16.mxu0 0
      %3742 = vmatmul.mubr.bf16.gmra.mxu0 %v3184
      %v3743 = vpop.f32.mrf.mxu0
      %v3744 = vadd.f32 %v3583, %v3743
      %v3745 = vpop.f32.mrf.mxu0
      %v3746 = vpop.f32.mrf.mxu0
      %v3747 = vadd.f32 %v3586, %v3746
      %v3748 = vpop.f32.mrf.mxu0
      %3749 = vmatprep.mubr.bf16.mxu0 0
      %3750 = vmatmul.mubr.bf16.gmra.mxu0 %v3187
      %v3751 = vpop.f32.mrf.mxu0
      %v3752 = vadd.f32 %v3591, %v3751
      %v3753 = vpop.f32.mrf.mxu0
      %v3754 = vpop.f32.mrf.mxu0
      %v3755 = vadd.f32 %v3594, %v3754
      %v3756 = vpop.f32.mrf.mxu0
      %3757 = vmatprep.mubr.bf16.mxu0 0
      %3758 = vmatmul.mubr.bf16.gmra.mxu0 %v3190
      %v3759 = vpop.f32.mrf.mxu0
      %v3760 = vadd.f32 %v3599, %v3759
      %v3761 = vpop.f32.mrf.mxu0
      %v3762 = vpop.f32.mrf.mxu0
      %v3763 = vadd.f32 %v3602, %v3762
      %v3764 = vpop.f32.mrf.mxu0
      %3765 = vmatprep.mubr.bf16.mxu0 0
      %3766 = vmatmul.mubr.bf16.gmra.mxu0 %v3193
      %v3767 = vpop.f32.mrf.mxu0
      %v3768 = vadd.f32 %v3607, %v3767
      %v3769 = vpop.f32.mrf.mxu0
      %v3770 = vpop.f32.mrf.mxu0
      %v3771 = vadd.f32 %v3610, %v3770
      %v3772 = vpop.f32.mrf.mxu0
      %3773 = vmatprep.mubr.bf16.mxu0 0
      %3774 = vmatmul.mubr.bf16.gmra.mxu0 %v3196
      %v3775 = vpop.f32.mrf.mxu0
      %v3776 = vadd.f32 %v3615, %v3775
      %v3777 = vpop.f32.mrf.mxu0
      %v3778 = vpop.f32.mrf.mxu0
      %v3779 = vadd.f32 %v3618, %v3778
      %v3780 = vpop.f32.mrf.mxu0
      %3781 = vmatprep.mubr.bf16.mxu0 0
      %3782 = vmatmul.mubr.bf16.gmra.mxu0 %v3199
      %v3783 = vpop.f32.mrf.mxu0
      %v3784 = vadd.f32 %v3623, %v3783
      %v3785 = vpop.f32.mrf.mxu0
      %v3786 = vpop.f32.mrf.mxu0
      %v3787 = vadd.f32 %v3626, %v3786
      %v3788 = vpop.f32.mrf.mxu0
      %3789 = vmatprep.mubr.bf16.mxu0 0
      %3790 = vmatmul.mubr.bf16.gmra.mxu0 %v3281
      %v3791 = vpop.f32.mrf.mxu0
      %v3792 = vadd.f32 %v3631, %v3791
      %v3793 = vpop.f32.mrf.mxu0
      %v3794 = vpop.f32.mrf.mxu0
      %v3795 = vadd.f32 %v3634, %v3794
      %v3796 = vpop.f32.mrf.mxu0
      %3797 = vdwg.mxu0
      %v3846 = vunpack.c.l.b16 %v3216
      %v3847 = vunpack.c.l.b16 %v3217
      %v3848 = vunpack.c.l.b16 %v3218
      %v3849 = vunpack.c.l.b16 %v3219
      %v3850 = vunpack.c.l.b16 %v3220
      %v3851 = vunpack.c.l.b16 %v3221
      %v3852 = vunpack.c.l.b16 %v3222
      %v3853 = vunpack.c.l.b16 %v3223
      %v3854 = vunpack.c.l.b16 %v3224
      %v3855 = vunpack.c.l.b16 %v3225
      %v3856 = vunpack.c.l.b16 %v3226
      %v3857 = vunpack.c.l.b16 %v3227
      %v3858 = vunpack.c.l.b16 %v3228
      %v3859 = vunpack.c.l.b16 %v3229
      %v3860 = vunpack.c.l.b16 %v3230
      %v3861 = vunpack.c.l.b16 %v3231
      %v3862 = vunpack.c.l.b16 %v3232
      %v3863 = vunpack.c.l.b16 %v3233
      %v3864 = vunpack.c.l.b16 %v3234
      %v3865 = vunpack.c.l.b16 %v3235
      %v3866 = vunpack.c.l.b16 %v3236
      %v3867 = vunpack.c.l.b16 %v3237
      %v3868 = vunpack.c.l.b16 %v3238
      %v3869 = vunpack.c.l.b16 %v3239
      %v3870 = vunpack.c.l.b16 %v3240
      %v3871 = vunpack.c.l.b16 %v3241
      %v3872 = vunpack.c.l.b16 %v3242
      %v3873 = vunpack.c.l.b16 %v3243
      %v3874 = vunpack.c.l.b16 %v3244
      %v3875 = vunpack.c.l.b16 %v3245
      %v3876 = vunpack.c.l.b16 %v3246
      %v3877 = vunpack.c.l.b16 %v3247
      %v3878 = vunpack.c.l.b16 %v3248
      %v3879 = vunpack.c.l.b16 %v3249
      %v3880 = vunpack.c.l.b16 %v3250
      %v3881 = vunpack.c.l.b16 %v3251
      %v3882 = vunpack.c.l.b16 %v3252
      %v3883 = vunpack.c.l.b16 %v3253
      %v3884 = vunpack.c.l.b16 %v3254
      %v3885 = vunpack.c.l.b16 %v3255
      %v3886 = vunpack.c.l.b16 %v3256
      %v3887 = vunpack.c.l.b16 %v3257
      %v3888 = vunpack.c.l.b16 %v3258
      %v3889 = vunpack.c.l.b16 %v3259
      %v3890 = vunpack.c.l.b16 %v3260
      %v3891 = vunpack.c.l.b16 %v3261
      %v3892 = vunpack.c.l.b16 %v3262
      %v3893 = vunpack.c.l.b16 %v3263
      %v3894 = vpack.c.b16 %v3847, %v3846
      %v3895 = vpack.c.b16 %v3849, %v3848
      %v3896 = vpack.c.b16 %v3851, %v3850
      %v3897 = vpack.c.b16 %v3853, %v3852
      %v3898 = vpack.c.b16 %v3855, %v3854
      %v3899 = vpack.c.b16 %v3857, %v3856
      %v3900 = vpack.c.b16 %v3859, %v3858
      %v3901 = vpack.c.b16 %v3861, %v3860
      %v3902 = vpack.c.b16 %v3863, %v3862
      %v3903 = vpack.c.b16 %v3865, %v3864
      %v3904 = vpack.c.b16 %v3867, %v3866
      %v3905 = vpack.c.b16 %v3869, %v3868
      %v3906 = vpack.c.b16 %v3871, %v3870
      %v3907 = vpack.c.b16 %v3873, %v3872
      %v3908 = vpack.c.b16 %v3875, %v3874
      %v3909 = vpack.c.b16 %v3877, %v3876
      %v3910 = vpack.c.b16 %v3879, %v3878
      %v3911 = vpack.c.b16 %v3881, %v3880
      %v3912 = vpack.c.b16 %v3883, %v3882
      %v3913 = vpack.c.b16 %v3885, %v3884
      %v3914 = vpack.c.b16 %v3887, %v3886
      %v3915 = vpack.c.b16 %v3889, %v3888
      %v3916 = vpack.c.b16 %v3891, %v3890
      %v3917 = vpack.c.b16 %v3893, %v3892
      %3942 = vmatprep.subr.bf16.mxu0 0
      %3943 = vmatpush1.bf16.msra.mxu0 %v3901
      %3944 = vmatprep.subr.bf16.mxu0 0
      %3945 = vmatpush1.bf16.msra.mxu0 %v3900
      %3946 = vmatprep.subr.bf16.mxu0 0
      %3947 = vmatpush1.bf16.msra.mxu0 %v3899
      %3948 = vmatprep.subr.bf16.mxu0 0
      %3949 = vmatpush1.bf16.msra.mxu0 %v3898
      %3950 = vmatprep.subr.bf16.mxu0 0
      %3951 = vmatpush1.bf16.msra.mxu0 %v3897
      %3952 = vmatprep.subr.bf16.mxu0 0
      %3953 = vmatpush1.bf16.msra.mxu0 %v3896
      %3954 = vmatprep.subr.bf16.mxu0 0
      %3955 = vmatpush1.bf16.msra.mxu0 %v3895
      %3956 = vmatprep.subr.bf16.mxu0 0
      %3957 = vmatpush1.bf16.msra.mxu0 %v3894
      %3958 = vmatprep.subr.bf16.mxu0 0
      %3959 = vmatpush2.bf16.msra.mxu0 %v3909
      %3960 = vmatprep.subr.bf16.mxu0 0
      %3961 = vmatpush2.bf16.msra.mxu0 %v3908
      %3962 = vmatprep.subr.bf16.mxu0 0
      %3963 = vmatpush2.bf16.msra.mxu0 %v3907
      %3964 = vmatprep.subr.bf16.mxu0 0
      %3965 = vmatpush2.bf16.msra.mxu0 %v3906
      %3966 = vmatprep.subr.bf16.mxu0 0
      %3967 = vmatpush2.bf16.msra.mxu0 %v3905
      %3968 = vmatprep.subr.bf16.mxu0 0
      %3969 = vmatpush2.bf16.msra.mxu0 %v3904
      %3970 = vmatprep.subr.bf16.mxu0 0
      %3971 = vmatpush2.bf16.msra.mxu0 %v3903
      %3972 = vmatprep.subr.bf16.mxu0 0
      %3973 = vmatpush2.bf16.msra.mxu0 %v3902
      %3974 = vmatprep.mubr.bf16.mxu0 %v2923
      %3975 = vmatmul.mubr.bf16.gmra.mxu0 %v2876
      %v3976 = vpop.f32.mrf.mxu0
      %v3977 = vadd.f32 %v3672, %v3976
      %v3978 = vpop.f32.mrf.mxu0
      %v3979 = vpop.f32.mrf.mxu0
      %v3980 = vadd.f32 %v3675, %v3979
      %v3981 = vpop.f32.mrf.mxu0
      %3982 = vmatprep.mubr.bf16.mxu0 %v2935
      %3983 = vmatmul.mubr.bf16.gmra.mxu0 %v2878
      %v3984 = vpop.f32.mrf.mxu0
      %v3985 = vadd.f32 %v3680, %v3984
      %v3986 = vpop.f32.mrf.mxu0
      %v3987 = vpop.f32.mrf.mxu0
      %v3988 = vadd.f32 %v3683, %v3987
      %v3989 = vpop.f32.mrf.mxu0
      %3990 = vmatprep.mubr.bf16.mxu0 %v2947
      %3991 = vmatmul.mubr.bf16.gmra.mxu0 %v2880
      %v3992 = vpop.f32.mrf.mxu0
      %v3993 = vadd.f32 %v3688, %v3992
      %v3994 = vpop.f32.mrf.mxu0
      %v3995 = vpop.f32.mrf.mxu0
      %v3996 = vadd.f32 %v3691, %v3995
      %v3997 = vpop.f32.mrf.mxu0
      %3998 = vmatprep.mubr.bf16.mxu0 %v2959
      %3999 = vmatmul.mubr.bf16.gmra.mxu0 %v2882
      %v4000 = vpop.f32.mrf.mxu0
      %v4001 = vadd.f32 %v3696, %v4000
      %v4002 = vpop.f32.mrf.mxu0
      %v4003 = vpop.f32.mrf.mxu0
      %v4004 = vadd.f32 %v3699, %v4003
      %v4005 = vpop.f32.mrf.mxu0
      %4006 = vmatprep.mubr.bf16.mxu0 %v2971
      %4007 = vmatmul.mubr.bf16.gmra.mxu0 %v2884
      %v4008 = vpop.f32.mrf.mxu0
      %v4009 = vadd.f32 %v3704, %v4008
      %v4010 = vpop.f32.mrf.mxu0
      %v4011 = vpop.f32.mrf.mxu0
      %v4012 = vadd.f32 %v3707, %v4011
      %v4013 = vpop.f32.mrf.mxu0
      %4014 = vmatprep.mubr.bf16.mxu0 %v2983
      %4015 = vmatmul.mubr.bf16.gmra.mxu0 %v2886
      %v4016 = vpop.f32.mrf.mxu0
      %v4017 = vadd.f32 %v3712, %v4016
      %v4018 = vpop.f32.mrf.mxu0
      %v4019 = vpop.f32.mrf.mxu0
      %v4020 = vadd.f32 %v3715, %v4019
      %v4021 = vpop.f32.mrf.mxu0
      %4022 = vmatprep.mubr.bf16.mxu0 %v2995
      %4023 = vmatmul.mubr.bf16.gmra.mxu0 %v2888
      %v4024 = vpop.f32.mrf.mxu0
      %v4025 = vadd.f32 %v3720, %v4024
      %v4026 = vpop.f32.mrf.mxu0
      %v4027 = vpop.f32.mrf.mxu0
      %v4028 = vadd.f32 %v3723, %v4027
      %v4029 = vpop.f32.mrf.mxu0
      %4030 = vmatprep.mubr.bf16.mxu0 %v3007
      %4031 = vmatmul.mubr.bf16.gmra.mxu0 %v2890
      %v4032 = vpop.f32.mrf.mxu0
      %v4033 = vadd.f32 %v3728, %v4032
      %v4034 = vpop.f32.mrf.mxu0
      %v4035 = vpop.f32.mrf.mxu0
      %v4036 = vadd.f32 %v3731, %v4035
      %v4037 = vpop.f32.mrf.mxu0
      %4038 = vmatprep.mubr.bf16.mxu0 %v3019
      %4039 = vmatmul.mubr.bf16.gmra.mxu0 %v2892
      %v4040 = vpop.f32.mrf.mxu0
      %v4041 = vadd.f32 %v3736, %v4040
      %v4042 = vpop.f32.mrf.mxu0
      %v4043 = vpop.f32.mrf.mxu0
      %v4044 = vadd.f32 %v3739, %v4043
      %v4045 = vpop.f32.mrf.mxu0
      %4046 = vmatprep.mubr.bf16.mxu0 %v3031
      %4047 = vmatmul.mubr.bf16.gmra.mxu0 %v2894
      %v4048 = vpop.f32.mrf.mxu0
      %v4049 = vadd.f32 %v3744, %v4048
      %v4050 = vpop.f32.mrf.mxu0
      %v4051 = vpop.f32.mrf.mxu0
      %v4052 = vadd.f32 %v3747, %v4051
      %v4053 = vpop.f32.mrf.mxu0
      %4054 = vmatprep.mubr.bf16.mxu0 %v3043
      %4055 = vmatmul.mubr.bf16.gmra.mxu0 %v2896
      %v4056 = vpop.f32.mrf.mxu0
      %v4057 = vadd.f32 %v3752, %v4056
      %v4058 = vpop.f32.mrf.mxu0
      %v4059 = vpop.f32.mrf.mxu0
      %v4060 = vadd.f32 %v3755, %v4059
      %v4061 = vpop.f32.mrf.mxu0
      %4062 = vmatprep.mubr.bf16.mxu0 %v3055
      %4063 = vmatmul.mubr.bf16.gmra.mxu0 %v2898
      %v4064 = vpop.f32.mrf.mxu0
      %v4065 = vadd.f32 %v3760, %v4064
      %v4066 = vpop.f32.mrf.mxu0
      %v4067 = vpop.f32.mrf.mxu0
      %v4068 = vadd.f32 %v3763, %v4067
      %v4069 = vpop.f32.mrf.mxu0
      %4070 = vmatprep.mubr.bf16.mxu0 %v3067
      %4071 = vmatmul.mubr.bf16.gmra.mxu0 %v2900
      %v4072 = vpop.f32.mrf.mxu0
      %v4073 = vadd.f32 %v3768, %v4072
      %v4074 = vpop.f32.mrf.mxu0
      %v4075 = vpop.f32.mrf.mxu0
      %v4076 = vadd.f32 %v3771, %v4075
      %v4077 = vpop.f32.mrf.mxu0
      %4078 = vmatprep.mubr.bf16.mxu0 %v3079
      %4079 = vmatmul.mubr.bf16.gmra.mxu0 %v2902
      %v4080 = vpop.f32.mrf.mxu0
      %v4081 = vadd.f32 %v3776, %v4080
      %v4082 = vpop.f32.mrf.mxu0
      %v4083 = vpop.f32.mrf.mxu0
      %v4084 = vadd.f32 %v3779, %v4083
      %v4085 = vpop.f32.mrf.mxu0
      %4086 = vmatprep.mubr.bf16.mxu0 %v3091
      %4087 = vmatmul.mubr.bf16.gmra.mxu0 %v2904
      %v4088 = vpop.f32.mrf.mxu0
      %v4089 = vadd.f32 %v3784, %v4088
      %v4090 = vpop.f32.mrf.mxu0
      %v4091 = vpop.f32.mrf.mxu0
      %v4092 = vadd.f32 %v3787, %v4091
      %v4093 = vpop.f32.mrf.mxu0
      %4094 = vmatprep.mubr.bf16.mxu0 %v3103
      %4095 = vmatmul.mubr.bf16.gmra.mxu0 %v2906
      %v4096 = vpop.f32.mrf.mxu0
      %v4097 = vadd.f32 %v3792, %v4096
      %v4098 = vpop.f32.mrf.mxu0
      %v4099 = vpop.f32.mrf.mxu0
      %v4100 = vadd.f32 %v3795, %v4099
      %v4101 = vpop.f32.mrf.mxu0
      %4102 = vdwg.mxu0
      %4103 = vmatprep.subr.bf16.mxu0 0
      %4104 = vmatpush1.bf16.msra.mxu0 %v3917
      %4105 = vmatprep.subr.bf16.mxu0 0
      %4106 = vmatpush1.bf16.msra.mxu0 %v3916
      %4107 = vmatprep.subr.bf16.mxu0 0
      %4108 = vmatpush1.bf16.msra.mxu0 %v3915
      %4109 = vmatprep.subr.bf16.mxu0 0
      %4110 = vmatpush1.bf16.msra.mxu0 %v3914
      %4111 = vmatprep.subr.bf16.mxu0 0
      %4112 = vmatpush1.bf16.msra.mxu0 %v3913
      %4113 = vmatprep.subr.bf16.mxu0 0
      %4114 = vmatpush1.bf16.msra.mxu0 %v3912
      %4115 = vmatprep.subr.bf16.mxu0 0
      %4116 = vmatpush1.bf16.msra.mxu0 %v3911
      %4117 = vmatprep.subr.bf16.mxu0 0
      %4118 = vmatpush1.bf16.msra.mxu0 %v3910
      %4119 = vmatprep.subr.bf16.mxu0 0
      %4120 = vmatpush2.bf16.msra.mxu0 0
      %4121 = vmatprep.subr.bf16.mxu0 0
      %4122 = vmatpush2.bf16.msra.mxu0 0
      %4123 = vmatprep.subr.bf16.mxu0 0
      %4124 = vmatpush2.bf16.msra.mxu0 0
      %4125 = vmatprep.subr.bf16.mxu0 0
      %4126 = vmatpush2.bf16.msra.mxu0 0
      %4127 = vmatprep.subr.bf16.mxu0 0
      %4128 = vmatpush2.bf16.msra.mxu0 0
      %4129 = vmatprep.subr.bf16.mxu0 0
      %4130 = vmatpush2.bf16.msra.mxu0 0
      %4131 = vmatprep.subr.bf16.mxu0 0
      %4132 = vmatpush2.bf16.msra.mxu0 0
      %4133 = vmatprep.subr.bf16.mxu0 0
      %4134 = vmatpush2.bf16.msra.mxu0 0
      %4135 = vmatprep.mubr.bf16.mxu0 0
      %4136 = vmatmul.mubr.bf16.gmra.mxu0 %v3154
      %v4137 = vpop.f32.mrf.mxu0
      %v4138 = vadd.f32 %v3977, %v4137
      %v4139 = vpop.f32.mrf.mxu0
      %v4140 = vpop.f32.mrf.mxu0
      %v4141 = vadd.f32 %v3980, %v4140
      %v4142 = vpop.f32.mrf.mxu0
      %4143 = vmatprep.mubr.bf16.mxu0 0
      %4144 = vmatmul.mubr.bf16.gmra.mxu0 %v3157
      %v4145 = vpop.f32.mrf.mxu0
      %v4146 = vadd.f32 %v3985, %v4145
      %v4147 = vpop.f32.mrf.mxu0
      %v4148 = vpop.f32.mrf.mxu0
      %v4149 = vadd.f32 %v3988, %v4148
      %v4150 = vpop.f32.mrf.mxu0
      %4151 = vmatprep.mubr.bf16.mxu0 0
      %4152 = vmatmul.mubr.bf16.gmra.mxu0 %v3160
      %v4153 = vpop.f32.mrf.mxu0
      %v4154 = vadd.f32 %v3993, %v4153
      %v4155 = vpop.f32.mrf.mxu0
      %v4156 = vpop.f32.mrf.mxu0
      %v4157 = vadd.f32 %v3996, %v4156
      %v4158 = vpop.f32.mrf.mxu0
      %4159 = vmatprep.mubr.bf16.mxu0 0
      %4160 = vmatmul.mubr.bf16.gmra.mxu0 %v3163
      %v4161 = vpop.f32.mrf.mxu0
      %v4162 = vadd.f32 %v4001, %v4161
      %v4163 = vpop.f32.mrf.mxu0
      %v4164 = vpop.f32.mrf.mxu0
      %v4165 = vadd.f32 %v4004, %v4164
      %v4166 = vpop.f32.mrf.mxu0
      %4167 = vmatprep.mubr.bf16.mxu0 0
      %4168 = vmatmul.mubr.bf16.gmra.mxu0 %v3166
      %v4169 = vpop.f32.mrf.mxu0
      %v4170 = vadd.f32 %v4009, %v4169
      %v4171 = vpop.f32.mrf.mxu0
      %v4172 = vpop.f32.mrf.mxu0
      %v4173 = vadd.f32 %v4012, %v4172
      %v4174 = vpop.f32.mrf.mxu0
      %4175 = vmatprep.mubr.bf16.mxu0 0
      %4176 = vmatmul.mubr.bf16.gmra.mxu0 %v3169
      %v4177 = vpop.f32.mrf.mxu0
      %v4178 = vadd.f32 %v4017, %v4177
      %v4179 = vpop.f32.mrf.mxu0
      %v4180 = vpop.f32.mrf.mxu0
      %v4181 = vadd.f32 %v4020, %v4180
      %v4182 = vpop.f32.mrf.mxu0
      %4183 = vmatprep.mubr.bf16.mxu0 0
      %4184 = vmatmul.mubr.bf16.gmra.mxu0 %v3172
      %v4185 = vpop.f32.mrf.mxu0
      %v4186 = vadd.f32 %v4025, %v4185
      %v4187 = vpop.f32.mrf.mxu0
      %v4188 = vpop.f32.mrf.mxu0
      %v4189 = vadd.f32 %v4028, %v4188
      %v4190 = vpop.f32.mrf.mxu0
      %4191 = vmatprep.mubr.bf16.mxu0 0
      %4192 = vmatmul.mubr.bf16.gmra.mxu0 %v3175
      %v4193 = vpop.f32.mrf.mxu0
      %v4194 = vadd.f32 %v4033, %v4193
      %v4195 = vpop.f32.mrf.mxu0
      %v4196 = vpop.f32.mrf.mxu0
      %v4197 = vadd.f32 %v4036, %v4196
      %v4198 = vpop.f32.mrf.mxu0
      %4199 = vmatprep.mubr.bf16.mxu0 0
      %4200 = vmatmul.mubr.bf16.gmra.mxu0 %v3178
      %v4201 = vpop.f32.mrf.mxu0
      %v4202 = vadd.f32 %v4041, %v4201
      %v4203 = vpop.f32.mrf.mxu0
      %v4204 = vpop.f32.mrf.mxu0
      %v4205 = vadd.f32 %v4044, %v4204
      %v4206 = vpop.f32.mrf.mxu0
      %4207 = vmatprep.mubr.bf16.mxu0 0
      %4208 = vmatmul.mubr.bf16.gmra.mxu0 %v3181
      %v4209 = vpop.f32.mrf.mxu0
      %v4210 = vadd.f32 %v4049, %v4209
      %v4211 = vpop.f32.mrf.mxu0
      %v4212 = vpop.f32.mrf.mxu0
      %v4213 = vadd.f32 %v4052, %v4212
      %v4214 = vpop.f32.mrf.mxu0
      %4215 = vmatprep.mubr.bf16.mxu0 0
      %4216 = vmatmul.mubr.bf16.gmra.mxu0 %v3184
      %v4217 = vpop.f32.mrf.mxu0
      %v4218 = vadd.f32 %v4057, %v4217
      %v4219 = vpop.f32.mrf.mxu0
      %v4220 = vpop.f32.mrf.mxu0
      %v4221 = vadd.f32 %v4060, %v4220
      %v4222 = vpop.f32.mrf.mxu0
      %4223 = vmatprep.mubr.bf16.mxu0 0
      %4224 = vmatmul.mubr.bf16.gmra.mxu0 %v3187
      %v4225 = vpop.f32.mrf.mxu0
      %v4226 = vadd.f32 %v4065, %v4225
      %v4227 = vpop.f32.mrf.mxu0
      %v4228 = vpop.f32.mrf.mxu0
      %v4229 = vadd.f32 %v4068, %v4228
      %v4230 = vpop.f32.mrf.mxu0
      %4231 = vmatprep.mubr.bf16.mxu0 0
      %4232 = vmatmul.mubr.bf16.gmra.mxu0 %v3190
      %v4233 = vpop.f32.mrf.mxu0
      %v4234 = vadd.f32 %v4073, %v4233
      %v4235 = vpop.f32.mrf.mxu0
      %v4236 = vpop.f32.mrf.mxu0
      %v4237 = vadd.f32 %v4076, %v4236
      %v4238 = vpop.f32.mrf.mxu0
      %4239 = vmatprep.mubr.bf16.mxu0 0
      %4240 = vmatmul.mubr.bf16.gmra.mxu0 %v3193
      %v4241 = vpop.f32.mrf.mxu0
      %v4242 = vadd.f32 %v4081, %v4241
      %v4243 = vpop.f32.mrf.mxu0
      %v4244 = vpop.f32.mrf.mxu0
      %v4245 = vadd.f32 %v4084, %v4244
      %v4246 = vpop.f32.mrf.mxu0
      %4247 = vmatprep.mubr.bf16.mxu0 0
      %4248 = vmatmul.mubr.bf16.gmra.mxu0 %v3196
      %v4249 = vpop.f32.mrf.mxu0
      %v4250 = vadd.f32 %v4089, %v4249
      %v4251 = vpop.f32.mrf.mxu0
      %v4252 = vpop.f32.mrf.mxu0
      %v4253 = vadd.f32 %v4092, %v4252
      %v4254 = vpop.f32.mrf.mxu0
      %4255 = vmatprep.mubr.bf16.mxu0 0
      %4256 = vmatmul.mubr.bf16.gmra.mxu0 %v3199
      %v4257 = vpop.f32.mrf.mxu0
      %v4258 = vadd.f32 %v4097, %v4257
      %v4259 = vpop.f32.mrf.mxu0
      %v4260 = vpop.f32.mrf.mxu0
      %v4261 = vadd.f32 %v4100, %v4260
      %v4262 = vpop.f32.mrf.mxu0
      %4263 = vdwg.mxu0
      %v4265 = vshrl.u32 %v2910, 16
      %v4267 = vshll.u32 %v2910, 16
      %v4269 = vrot.slane %v4267, 1
      %v4270 = vor.u32 %v4265, %v4269
      %v4272 = vshll.u32 %v2911, 16
      %v4274 = vrot.slane %v4272, 1
      %v4275 = vsel %vm624, %v4270, %v4274
      %v4279 = vrot.slane %v2910, 1
      %v4280 = vrot.slane %v2911, 1
      %v4281 = vsel %vm859, %v4279, %v4280
      %s4283 = scalar_lea.vmem %s3, 384
      %v4284 = vld [vmem:[%s4283] sm:$0xf]
      %v4285 = vld [vmem:[%s4283 + $0x4] sm:$0xf]
      %v4286 = vld [vmem:[%s4283 + $0x8] sm:$0xf]
      %v4287 = vld [vmem:[%s4283 + $0xc] sm:$0xf]
      %v4288 = vld [vmem:[%s4283 + $0x10] sm:$0xf]
      %v4289 = vld [vmem:[%s4283 + $0x14] sm:$0xf]
      %v4290 = vld [vmem:[%s4283 + $0x18] sm:$0xf]
      %v4291 = vld [vmem:[%s4283 + $0x1c] sm:$0xf]
      %v4292 = vld [vmem:[%s4283 + $0x20] sm:$0xf]
      %v4293 = vld [vmem:[%s4283 + $0x24] sm:$0xf]
      %v4294 = vld [vmem:[%s4283 + $0x28] sm:$0xf]
      %v4295 = vld [vmem:[%s4283 + $0x2c] sm:$0xf]
      %v4296 = vld [vmem:[%s4283 + $0x30] sm:$0xf]
      %v4297 = vld [vmem:[%s4283 + $0x34] sm:$0xf]
      %v4298 = vld [vmem:[%s4283 + $0x38] sm:$0xf]
      %v4299 = vld [vmem:[%s4283 + $0x3c] sm:$0xf]
      %v4300 = vld [vmem:[%s4283 + $0x40] sm:$0xf]
      %v4301 = vld [vmem:[%s4283 + $0x44] sm:$0xf]
      %v4302 = vld [vmem:[%s4283 + $0x48] sm:$0xf]
      %v4303 = vld [vmem:[%s4283 + $0x4c] sm:$0xf]
      %v4304 = vld [vmem:[%s4283 + $0x50] sm:$0xf]
      %v4305 = vld [vmem:[%s4283 + $0x54] sm:$0xf]
      %v4306 = vld [vmem:[%s4283 + $0x58] sm:$0xf]
      %v4307 = vld [vmem:[%s4283 + $0x5c] sm:$0xf]
      %v4308 = vld [vmem:[%s4283 + $0x60] sm:$0xf]
      %v4309 = vld [vmem:[%s4283 + $0x64] sm:$0xf]
      %v4310 = vld [vmem:[%s4283 + $0x68] sm:$0xf]
      %v4311 = vld [vmem:[%s4283 + $0x6c] sm:$0xf]
      %v4312 = vld [vmem:[%s4283 + $0x70] sm:$0xf]
      %v4313 = vld [vmem:[%s4283 + $0x74] sm:$0xf]
      %v4314 = vld [vmem:[%s4283 + $0x78] sm:$0xf]
      %v4315 = vld [vmem:[%s4283 + $0x7c] sm:$0xf]
      %v4316 = vld [vmem:[%s4283 + $0x80] sm:$0xf]
      %v4317 = vld [vmem:[%s4283 + $0x84] sm:$0xf]
      %v4318 = vld [vmem:[%s4283 + $0x88] sm:$0xf]
      %v4319 = vld [vmem:[%s4283 + $0x8c] sm:$0xf]
      %v4320 = vld [vmem:[%s4283 + $0x90] sm:$0xf]
      %v4321 = vld [vmem:[%s4283 + $0x94] sm:$0xf]
      %v4322 = vld [vmem:[%s4283 + $0x98] sm:$0xf]
      %v4323 = vld [vmem:[%s4283 + $0x9c] sm:$0xf]
      %v4324 = vld [vmem:[%s4283 + $0xa0] sm:$0xf]
      %v4325 = vld [vmem:[%s4283 + $0xa4] sm:$0xf]
      %v4326 = vld [vmem:[%s4283 + $0xa8] sm:$0xf]
      %v4327 = vld [vmem:[%s4283 + $0xac] sm:$0xf]
      %v4328 = vld [vmem:[%s4283 + $0xb0] sm:$0xf]
      %v4329 = vld [vmem:[%s4283 + $0xb4] sm:$0xf]
      %v4330 = vld [vmem:[%s4283 + $0xb8] sm:$0xf]
      %v4331 = vld [vmem:[%s4283 + $0xbc] sm:$0xf]
      %v4380 = vunpack.c.l.b16 %v4284
      %v4381 = vunpack.c.l.b16 %v4285
      %v4382 = vunpack.c.l.b16 %v4286
      %v4383 = vunpack.c.l.b16 %v4287
      %v4384 = vunpack.c.l.b16 %v4288
      %v4385 = vunpack.c.l.b16 %v4289
      %v4386 = vunpack.c.l.b16 %v4290
      %v4387 = vunpack.c.l.b16 %v4291
      %v4388 = vunpack.c.l.b16 %v4292
      %v4389 = vunpack.c.l.b16 %v4293
      %v4390 = vunpack.c.l.b16 %v4294
      %v4391 = vunpack.c.l.b16 %v4295
      %v4392 = vunpack.c.l.b16 %v4296
      %v4393 = vunpack.c.l.b16 %v4297
      %v4394 = vunpack.c.l.b16 %v4298
      %v4395 = vunpack.c.l.b16 %v4299
      %v4396 = vunpack.c.l.b16 %v4300
      %v4397 = vunpack.c.l.b16 %v4301
      %v4398 = vunpack.c.l.b16 %v4302
      %v4399 = vunpack.c.l.b16 %v4303
      %v4400 = vunpack.c.l.b16 %v4304
      %v4401 = vunpack.c.l.b16 %v4305
      %v4402 = vunpack.c.l.b16 %v4306
      %v4403 = vunpack.c.l.b16 %v4307
      %v4404 = vunpack.c.l.b16 %v4308
      %v4405 = vunpack.c.l.b16 %v4309
      %v4406 = vunpack.c.l.b16 %v4310
      %v4407 = vunpack.c.l.b16 %v4311
      %v4408 = vunpack.c.l.b16 %v4312
      %v4409 = vunpack.c.l.b16 %v4313
      %v4410 = vunpack.c.l.b16 %v4314
      %v4411 = vunpack.c.l.b16 %v4315
      %v4412 = vunpack.c.l.b16 %v4316
      %v4413 = vunpack.c.l.b16 %v4317
      %v4414 = vunpack.c.l.b16 %v4318
      %v4415 = vunpack.c.l.b16 %v4319
      %v4416 = vunpack.c.l.b16 %v4320
      %v4417 = vunpack.c.l.b16 %v4321
      %v4418 = vunpack.c.l.b16 %v4322
      %v4419 = vunpack.c.l.b16 %v4323
      %v4420 = vunpack.c.l.b16 %v4324
      %v4421 = vunpack.c.l.b16 %v4325
      %v4422 = vunpack.c.l.b16 %v4326
      %v4423 = vunpack.c.l.b16 %v4327
      %v4424 = vunpack.c.l.b16 %v4328
      %v4425 = vunpack.c.l.b16 %v4329
      %v4426 = vunpack.c.l.b16 %v4330
      %v4427 = vunpack.c.l.b16 %v4331
      %v4428 = vpack.c.b16 %v4381, %v4380
      %v4429 = vpack.c.b16 %v4383, %v4382
      %v4430 = vpack.c.b16 %v4385, %v4384
      %v4431 = vpack.c.b16 %v4387, %v4386
      %v4432 = vpack.c.b16 %v4389, %v4388
      %v4433 = vpack.c.b16 %v4391, %v4390
      %v4434 = vpack.c.b16 %v4393, %v4392
      %v4435 = vpack.c.b16 %v4395, %v4394
      %v4436 = vpack.c.b16 %v4397, %v4396
      %v4437 = vpack.c.b16 %v4399, %v4398
      %v4438 = vpack.c.b16 %v4401, %v4400
      %v4439 = vpack.c.b16 %v4403, %v4402
      %v4440 = vpack.c.b16 %v4405, %v4404
      %v4441 = vpack.c.b16 %v4407, %v4406
      %v4442 = vpack.c.b16 %v4409, %v4408
      %v4443 = vpack.c.b16 %v4411, %v4410
      %v4444 = vpack.c.b16 %v4413, %v4412
      %v4445 = vpack.c.b16 %v4415, %v4414
      %v4446 = vpack.c.b16 %v4417, %v4416
      %v4447 = vpack.c.b16 %v4419, %v4418
      %v4448 = vpack.c.b16 %v4421, %v4420
      %v4449 = vpack.c.b16 %v4423, %v4422
      %v4450 = vpack.c.b16 %v4425, %v4424
      %v4451 = vpack.c.b16 %v4427, %v4426
      %4476 = vmatprep.subr.bf16.mxu0 0
      %4477 = vmatpush1.bf16.msra.mxu0 %v4435
      %4478 = vmatprep.subr.bf16.mxu0 0
      %4479 = vmatpush1.bf16.msra.mxu0 %v4434
      %4480 = vmatprep.subr.bf16.mxu0 0
      %4481 = vmatpush1.bf16.msra.mxu0 %v4433
      %4482 = vmatprep.subr.bf16.mxu0 0
      %4483 = vmatpush1.bf16.msra.mxu0 %v4432
      %4484 = vmatprep.subr.bf16.mxu0 0
      %4485 = vmatpush1.bf16.msra.mxu0 %v4431
      %4486 = vmatprep.subr.bf16.mxu0 0
      %4487 = vmatpush1.bf16.msra.mxu0 %v4430
      %4488 = vmatprep.subr.bf16.mxu0 0
      %4489 = vmatpush1.bf16.msra.mxu0 %v4429
      %4490 = vmatprep.subr.bf16.mxu0 0
      %4491 = vmatpush1.bf16.msra.mxu0 %v4428
      %4492 = vmatprep.subr.bf16.mxu0 0
      %4493 = vmatpush2.bf16.msra.mxu0 %v4443
      %4494 = vmatprep.subr.bf16.mxu0 0
      %4495 = vmatpush2.bf16.msra.mxu0 %v4442
      %4496 = vmatprep.subr.bf16.mxu0 0
      %4497 = vmatpush2.bf16.msra.mxu0 %v4441
      %4498 = vmatprep.subr.bf16.mxu0 0
      %4499 = vmatpush2.bf16.msra.mxu0 %v4440
      %4500 = vmatprep.subr.bf16.mxu0 0
      %4501 = vmatpush2.bf16.msra.mxu0 %v4439
      %4502 = vmatprep.subr.bf16.mxu0 0
      %4503 = vmatpush2.bf16.msra.mxu0 %v4438
      %4504 = vmatprep.subr.bf16.mxu0 0
      %4505 = vmatpush2.bf16.msra.mxu0 %v4437
      %4506 = vmatprep.subr.bf16.mxu0 0
      %4507 = vmatpush2.bf16.msra.mxu0 %v4436
      %4508 = vmatprep.mubr.bf16.mxu0 %v2947
      %4509 = vmatmul.mubr.bf16.gmra.mxu0 %v2880
      %v4510 = vpop.f32.mrf.mxu0
      %v4511 = vadd.f32 0.0, %v4510
      %v4512 = vpop.f32.mrf.mxu0
      %v4513 = vpop.f32.mrf.mxu0
      %v4514 = vadd.f32 0.0, %v4513
      %v4515 = vpop.f32.mrf.mxu0
      %4516 = vmatprep.mubr.bf16.mxu0 %v2959
      %4517 = vmatmul.mubr.bf16.gmra.mxu0 %v2882
      %v4518 = vpop.f32.mrf.mxu0
      %v4519 = vadd.f32 0.0, %v4518
      %v4520 = vpop.f32.mrf.mxu0
      %v4521 = vpop.f32.mrf.mxu0
      %v4522 = vadd.f32 0.0, %v4521
      %v4523 = vpop.f32.mrf.mxu0
      %4524 = vmatprep.mubr.bf16.mxu0 %v2971
      %4525 = vmatmul.mubr.bf16.gmra.mxu0 %v2884
      %v4526 = vpop.f32.mrf.mxu0
      %v4527 = vadd.f32 0.0, %v4526
      %v4528 = vpop.f32.mrf.mxu0
      %v4529 = vpop.f32.mrf.mxu0
      %v4530 = vadd.f32 0.0, %v4529
      %v4531 = vpop.f32.mrf.mxu0
      %4532 = vmatprep.mubr.bf16.mxu0 %v2983
      %4533 = vmatmul.mubr.bf16.gmra.mxu0 %v2886
      %v4534 = vpop.f32.mrf.mxu0
      %v4535 = vadd.f32 0.0, %v4534
      %v4536 = vpop.f32.mrf.mxu0
      %v4537 = vpop.f32.mrf.mxu0
      %v4538 = vadd.f32 0.0, %v4537
      %v4539 = vpop.f32.mrf.mxu0
      %4540 = vmatprep.mubr.bf16.mxu0 %v2995
      %4541 = vmatmul.mubr.bf16.gmra.mxu0 %v2888
      %v4542 = vpop.f32.mrf.mxu0
      %v4543 = vadd.f32 0.0, %v4542
      %v4544 = vpop.f32.mrf.mxu0
      %v4545 = vpop.f32.mrf.mxu0
      %v4546 = vadd.f32 0.0, %v4545
      %v4547 = vpop.f32.mrf.mxu0
      %4548 = vmatprep.mubr.bf16.mxu0 %v3007
      %4549 = vmatmul.mubr.bf16.gmra.mxu0 %v2890
      %v4550 = vpop.f32.mrf.mxu0
      %v4551 = vadd.f32 0.0, %v4550
      %v4552 = vpop.f32.mrf.mxu0
      %v4553 = vpop.f32.mrf.mxu0
      %v4554 = vadd.f32 0.0, %v4553
      %v4555 = vpop.f32.mrf.mxu0
      %4556 = vmatprep.mubr.bf16.mxu0 %v3019
      %4557 = vmatmul.mubr.bf16.gmra.mxu0 %v2892
      %v4558 = vpop.f32.mrf.mxu0
      %v4559 = vadd.f32 0.0, %v4558
      %v4560 = vpop.f32.mrf.mxu0
      %v4561 = vpop.f32.mrf.mxu0
      %v4562 = vadd.f32 0.0, %v4561
      %v4563 = vpop.f32.mrf.mxu0
      %4564 = vmatprep.mubr.bf16.mxu0 %v3031
      %4565 = vmatmul.mubr.bf16.gmra.mxu0 %v2894
      %v4566 = vpop.f32.mrf.mxu0
      %v4567 = vadd.f32 0.0, %v4566
      %v4568 = vpop.f32.mrf.mxu0
      %v4569 = vpop.f32.mrf.mxu0
      %v4570 = vadd.f32 0.0, %v4569
      %v4571 = vpop.f32.mrf.mxu0
      %4572 = vmatprep.mubr.bf16.mxu0 %v3043
      %4573 = vmatmul.mubr.bf16.gmra.mxu0 %v2896
      %v4574 = vpop.f32.mrf.mxu0
      %v4575 = vadd.f32 0.0, %v4574
      %v4576 = vpop.f32.mrf.mxu0
      %v4577 = vpop.f32.mrf.mxu0
      %v4578 = vadd.f32 0.0, %v4577
      %v4579 = vpop.f32.mrf.mxu0
      %4580 = vmatprep.mubr.bf16.mxu0 %v3055
      %4581 = vmatmul.mubr.bf16.gmra.mxu0 %v2898
      %v4582 = vpop.f32.mrf.mxu0
      %v4583 = vadd.f32 0.0, %v4582
      %v4584 = vpop.f32.mrf.mxu0
      %v4585 = vpop.f32.mrf.mxu0
      %v4586 = vadd.f32 0.0, %v4585
      %v4587 = vpop.f32.mrf.mxu0
      %4588 = vmatprep.mubr.bf16.mxu0 %v3067
      %4589 = vmatmul.mubr.bf16.gmra.mxu0 %v2900
      %v4590 = vpop.f32.mrf.mxu0
      %v4591 = vadd.f32 0.0, %v4590
      %v4592 = vpop.f32.mrf.mxu0
      %v4593 = vpop.f32.mrf.mxu0
      %v4594 = vadd.f32 0.0, %v4593
      %v4595 = vpop.f32.mrf.mxu0
      %4596 = vmatprep.mubr.bf16.mxu0 %v3079
      %4597 = vmatmul.mubr.bf16.gmra.mxu0 %v2902
      %v4598 = vpop.f32.mrf.mxu0
      %v4599 = vadd.f32 0.0, %v4598
      %v4600 = vpop.f32.mrf.mxu0
      %v4601 = vpop.f32.mrf.mxu0
      %v4602 = vadd.f32 0.0, %v4601
      %v4603 = vpop.f32.mrf.mxu0
      %4604 = vmatprep.mubr.bf16.mxu0 %v3091
      %4605 = vmatmul.mubr.bf16.gmra.mxu0 %v2904
      %v4606 = vpop.f32.mrf.mxu0
      %v4607 = vadd.f32 0.0, %v4606
      %v4608 = vpop.f32.mrf.mxu0
      %v4609 = vpop.f32.mrf.mxu0
      %v4610 = vadd.f32 0.0, %v4609
      %v4611 = vpop.f32.mrf.mxu0
      %4612 = vmatprep.mubr.bf16.mxu0 %v3103
      %4613 = vmatmul.mubr.bf16.gmra.mxu0 %v2906
      %v4614 = vpop.f32.mrf.mxu0
      %v4615 = vadd.f32 0.0, %v4614
      %v4616 = vpop.f32.mrf.mxu0
      %v4617 = vpop.f32.mrf.mxu0
      %v4618 = vadd.f32 0.0, %v4617
      %v4619 = vpop.f32.mrf.mxu0
      %4620 = vmatprep.mubr.bf16.mxu0 %v3275
      %4621 = vmatmul.mubr.bf16.gmra.mxu0 %v2908
      %v4622 = vpop.f32.mrf.mxu0
      %v4623 = vadd.f32 0.0, %v4622
      %v4624 = vpop.f32.mrf.mxu0
      %v4625 = vpop.f32.mrf.mxu0
      %v4626 = vadd.f32 0.0, %v4625
      %v4627 = vpop.f32.mrf.mxu0
      %4628 = vmatprep.mubr.bf16.mxu0 %v4275
      %4629 = vmatmul.mubr.bf16.gmra.mxu0 %v2910
      %v4630 = vpop.f32.mrf.mxu0
      %v4631 = vadd.f32 0.0, %v4630
      %v4632 = vpop.f32.mrf.mxu0
      %v4633 = vpop.f32.mrf.mxu0
      %v4634 = vadd.f32 0.0, %v4633
      %v4635 = vpop.f32.mrf.mxu0
      %4636 = vdwg.mxu0
      %4637 = vmatprep.subr.bf16.mxu0 0
      %4638 = vmatpush1.bf16.msra.mxu0 %v4451
      %4639 = vmatprep.subr.bf16.mxu0 0
      %4640 = vmatpush1.bf16.msra.mxu0 %v4450
      %4641 = vmatprep.subr.bf16.mxu0 0
      %4642 = vmatpush1.bf16.msra.mxu0 %v4449
      %4643 = vmatprep.subr.bf16.mxu0 0
      %4644 = vmatpush1.bf16.msra.mxu0 %v4448
      %4645 = vmatprep.subr.bf16.mxu0 0
      %4646 = vmatpush1.bf16.msra.mxu0 %v4447
      %4647 = vmatprep.subr.bf16.mxu0 0
      %4648 = vmatpush1.bf16.msra.mxu0 %v4446
      %4649 = vmatprep.subr.bf16.mxu0 0
      %4650 = vmatpush1.bf16.msra.mxu0 %v4445
      %4651 = vmatprep.subr.bf16.mxu0 0
      %4652 = vmatpush1.bf16.msra.mxu0 %v4444
      %4653 = vmatprep.subr.bf16.mxu0 0
      %4654 = vmatpush2.bf16.msra.mxu0 0
      %4655 = vmatprep.subr.bf16.mxu0 0
      %4656 = vmatpush2.bf16.msra.mxu0 0
      %4657 = vmatprep.subr.bf16.mxu0 0
      %4658 = vmatpush2.bf16.msra.mxu0 0
      %4659 = vmatprep.subr.bf16.mxu0 0
      %4660 = vmatpush2.bf16.msra.mxu0 0
      %4661 = vmatprep.subr.bf16.mxu0 0
      %4662 = vmatpush2.bf16.msra.mxu0 0
      %4663 = vmatprep.subr.bf16.mxu0 0
      %4664 = vmatpush2.bf16.msra.mxu0 0
      %4665 = vmatprep.subr.bf16.mxu0 0
      %4666 = vmatpush2.bf16.msra.mxu0 0
      %4667 = vmatprep.subr.bf16.mxu0 0
      %4668 = vmatpush2.bf16.msra.mxu0 0
      %4669 = vmatprep.mubr.bf16.mxu0 0
      %4670 = vmatmul.mubr.bf16.gmra.mxu0 %v3160
      %v4671 = vpop.f32.mrf.mxu0
      %v4672 = vadd.f32 %v4511, %v4671
      %v4673 = vpop.f32.mrf.mxu0
      %v4674 = vpop.f32.mrf.mxu0
      %v4675 = vadd.f32 %v4514, %v4674
      %v4676 = vpop.f32.mrf.mxu0
      %4677 = vmatprep.mubr.bf16.mxu0 0
      %4678 = vmatmul.mubr.bf16.gmra.mxu0 %v3163
      %v4679 = vpop.f32.mrf.mxu0
      %v4680 = vadd.f32 %v4519, %v4679
      %v4681 = vpop.f32.mrf.mxu0
      %v4682 = vpop.f32.mrf.mxu0
      %v4683 = vadd.f32 %v4522, %v4682
      %v4684 = vpop.f32.mrf.mxu0
      %4685 = vmatprep.mubr.bf16.mxu0 0
      %4686 = vmatmul.mubr.bf16.gmra.mxu0 %v3166
      %v4687 = vpop.f32.mrf.mxu0
      %v4688 = vadd.f32 %v4527, %v4687
      %v4689 = vpop.f32.mrf.mxu0
      %v4690 = vpop.f32.mrf.mxu0
      %v4691 = vadd.f32 %v4530, %v4690
      %v4692 = vpop.f32.mrf.mxu0
      %4693 = vmatprep.mubr.bf16.mxu0 0
      %4694 = vmatmul.mubr.bf16.gmra.mxu0 %v3169
      %v4695 = vpop.f32.mrf.mxu0
      %v4696 = vadd.f32 %v4535, %v4695
      %v4697 = vpop.f32.mrf.mxu0
      %v4698 = vpop.f32.mrf.mxu0
      %v4699 = vadd.f32 %v4538, %v4698
      %v4700 = vpop.f32.mrf.mxu0
      %4701 = vmatprep.mubr.bf16.mxu0 0
      %4702 = vmatmul.mubr.bf16.gmra.mxu0 %v3172
      %v4703 = vpop.f32.mrf.mxu0
      %v4704 = vadd.f32 %v4543, %v4703
      %v4705 = vpop.f32.mrf.mxu0
      %v4706 = vpop.f32.mrf.mxu0
      %v4707 = vadd.f32 %v4546, %v4706
      %v4708 = vpop.f32.mrf.mxu0
      %4709 = vmatprep.mubr.bf16.mxu0 0
      %4710 = vmatmul.mubr.bf16.gmra.mxu0 %v3175
      %v4711 = vpop.f32.mrf.mxu0
      %v4712 = vadd.f32 %v4551, %v4711
      %v4713 = vpop.f32.mrf.mxu0
      %v4714 = vpop.f32.mrf.mxu0
      %v4715 = vadd.f32 %v4554, %v4714
      %v4716 = vpop.f32.mrf.mxu0
      %4717 = vmatprep.mubr.bf16.mxu0 0
      %4718 = vmatmul.mubr.bf16.gmra.mxu0 %v3178
      %v4719 = vpop.f32.mrf.mxu0
      %v4720 = vadd.f32 %v4559, %v4719
      %v4721 = vpop.f32.mrf.mxu0
      %v4722 = vpop.f32.mrf.mxu0
      %v4723 = vadd.f32 %v4562, %v4722
      %v4724 = vpop.f32.mrf.mxu0
      %4725 = vmatprep.mubr.bf16.mxu0 0
      %4726 = vmatmul.mubr.bf16.gmra.mxu0 %v3181
      %v4727 = vpop.f32.mrf.mxu0
      %v4728 = vadd.f32 %v4567, %v4727
      %v4729 = vpop.f32.mrf.mxu0
      %v4730 = vpop.f32.mrf.mxu0
      %v4731 = vadd.f32 %v4570, %v4730
      %v4732 = vpop.f32.mrf.mxu0
      %4733 = vmatprep.mubr.bf16.mxu0 0
      %4734 = vmatmul.mubr.bf16.gmra.mxu0 %v3184
      %v4735 = vpop.f32.mrf.mxu0
      %v4736 = vadd.f32 %v4575, %v4735
      %v4737 = vpop.f32.mrf.mxu0
      %v4738 = vpop.f32.mrf.mxu0
      %v4739 = vadd.f32 %v4578, %v4738
      %v4740 = vpop.f32.mrf.mxu0
      %4741 = vmatprep.mubr.bf16.mxu0 0
      %4742 = vmatmul.mubr.bf16.gmra.mxu0 %v3187
      %v4743 = vpop.f32.mrf.mxu0
      %v4744 = vadd.f32 %v4583, %v4743
      %v4745 = vpop.f32.mrf.mxu0
      %v4746 = vpop.f32.mrf.mxu0
      %v4747 = vadd.f32 %v4586, %v4746
      %v4748 = vpop.f32.mrf.mxu0
      %4749 = vmatprep.mubr.bf16.mxu0 0
      %4750 = vmatmul.mubr.bf16.gmra.mxu0 %v3190
      %v4751 = vpop.f32.mrf.mxu0
      %v4752 = vadd.f32 %v4591, %v4751
      %v4753 = vpop.f32.mrf.mxu0
      %v4754 = vpop.f32.mrf.mxu0
      %v4755 = vadd.f32 %v4594, %v4754
      %v4756 = vpop.f32.mrf.mxu0
      %4757 = vmatprep.mubr.bf16.mxu0 0
      %4758 = vmatmul.mubr.bf16.gmra.mxu0 %v3193
      %v4759 = vpop.f32.mrf.mxu0
      %v4760 = vadd.f32 %v4599, %v4759
      %v4761 = vpop.f32.mrf.mxu0
      %v4762 = vpop.f32.mrf.mxu0
      %v4763 = vadd.f32 %v4602, %v4762
      %v4764 = vpop.f32.mrf.mxu0
      %4765 = vmatprep.mubr.bf16.mxu0 0
      %4766 = vmatmul.mubr.bf16.gmra.mxu0 %v3196
      %v4767 = vpop.f32.mrf.mxu0
      %v4768 = vadd.f32 %v4607, %v4767
      %v4769 = vpop.f32.mrf.mxu0
      %v4770 = vpop.f32.mrf.mxu0
      %v4771 = vadd.f32 %v4610, %v4770
      %v4772 = vpop.f32.mrf.mxu0
      %4773 = vmatprep.mubr.bf16.mxu0 0
      %4774 = vmatmul.mubr.bf16.gmra.mxu0 %v3199
      %v4775 = vpop.f32.mrf.mxu0
      %v4776 = vadd.f32 %v4615, %v4775
      %v4777 = vpop.f32.mrf.mxu0
      %v4778 = vpop.f32.mrf.mxu0
      %v4779 = vadd.f32 %v4618, %v4778
      %v4780 = vpop.f32.mrf.mxu0
      %4781 = vmatprep.mubr.bf16.mxu0 0
      %4782 = vmatmul.mubr.bf16.gmra.mxu0 %v3281
      %v4783 = vpop.f32.mrf.mxu0
      %v4784 = vadd.f32 %v4623, %v4783
      %v4785 = vpop.f32.mrf.mxu0
      %v4786 = vpop.f32.mrf.mxu0
      %v4787 = vadd.f32 %v4626, %v4786
      %v4788 = vpop.f32.mrf.mxu0
      %4789 = vmatprep.mubr.bf16.mxu0 0
      %4790 = vmatmul.mubr.bf16.gmra.mxu0 %v4281
      %v4791 = vpop.f32.mrf.mxu0
      %v4792 = vadd.f32 %v4631, %v4791
      %v4793 = vpop.f32.mrf.mxu0
      %v4794 = vpop.f32.mrf.mxu0
      %v4795 = vadd.f32 %v4634, %v4794
      %v4796 = vpop.f32.mrf.mxu0
      %4797 = vdwg.mxu0
      %v4798 = vadd.f32 %v4138, %v4672
      %v4799 = vadd.f32 %v4141, %v4675
      %v4800 = vadd.f32 %v4146, %v4680
      %v4801 = vadd.f32 %v4149, %v4683
      %v4802 = vadd.f32 %v4154, %v4688
      %v4803 = vadd.f32 %v4157, %v4691
      %v4804 = vadd.f32 %v4162, %v4696
      %v4805 = vadd.f32 %v4165, %v4699
      %v4806 = vadd.f32 %v4170, %v4704
      %v4807 = vadd.f32 %v4173, %v4707
      %v4808 = vadd.f32 %v4178, %v4712
      %v4809 = vadd.f32 %v4181, %v4715
      %v4810 = vadd.f32 %v4186, %v4720
      %v4811 = vadd.f32 %v4189, %v4723
      %v4812 = vadd.f32 %v4194, %v4728
      %v4813 = vadd.f32 %v4197, %v4731
      %v4814 = vadd.f32 %v4202, %v4736
      %v4815 = vadd.f32 %v4205, %v4739
      %v4816 = vadd.f32 %v4210, %v4744
      %v4817 = vadd.f32 %v4213, %v4747
      %v4818 = vadd.f32 %v4218, %v4752
      %v4819 = vadd.f32 %v4221, %v4755
      %v4820 = vadd.f32 %v4226, %v4760
      %v4821 = vadd.f32 %v4229, %v4763
      %v4822 = vadd.f32 %v4234, %v4768
      %v4823 = vadd.f32 %v4237, %v4771
      %v4824 = vadd.f32 %v4242, %v4776
      %v4825 = vadd.f32 %v4245, %v4779
      %v4826 = vadd.f32 %v4250, %v4784
      %v4827 = vadd.f32 %v4253, %v4787
      %v4828 = vadd.f32 %v4258, %v4792
      %v4829 = vadd.f32 %v4261, %v4795
      %vm4830 = vsmask.f32 3328
      %vm4831 = vsmask.f32 7440
      %vm4832 = vmor %vm4830, %vm4831
      %v4834 = vshrl.u32 %v408, 16
      %v4836 = vrot.slane %v4834, 4
      %v4837 = vshll.u32 %v408, 16
      %v4839 = vrot.slane %v4837, 5
      %v4840 = vor.u32 %v4836, %v4839
      %v4841 = vrot.slane %v4840, 4
      %v4843 = vshll.u32 %v409, 16
      %v4845 = vrot.slane %v4843, 5
      %v4846 = vsel %vm4832, %v4841, %v4845
      %v4847 = vshrl.u32 %v409, 16
      %v4849 = vrot.slane %v4847, 4
      %v4850 = vor.u32 %v4849, %v4845
      %v4851 = vrot.slane %v4850, 4
      %v4853 = vshll.u32 %v410, 16
      %v4855 = vrot.slane %v4853, 5
      %v4856 = vsel %vm4832, %v4851, %v4855
      %v4858 = vshrl.u32 %v411, 16
      %v4860 = vrot.slane %v4858, 4
      %v4861 = vshll.u32 %v411, 16
      %v4863 = vrot.slane %v4861, 5
      %v4864 = vor.u32 %v4860, %v4863
      %v4865 = vrot.slane %v4864, 4
      %v4867 = vshll.u32 %v412, 16
      %v4869 = vrot.slane %v4867, 5
      %v4870 = vsel %vm4832, %v4865, %v4869
      %v4871 = vshrl.u32 %v412, 16
      %v4873 = vrot.slane %v4871, 4
      %v4874 = vor.u32 %v4873, %v4869
      %v4875 = vrot.slane %v4874, 4
      %v4877 = vshll.u32 %v413, 16
      %v4879 = vrot.slane %v4877, 5
      %v4880 = vsel %vm4832, %v4875, %v4879
      %v4882 = vshrl.u32 %v414, 16
      %v4884 = vrot.slane %v4882, 4
      %v4885 = vshll.u32 %v414, 16
      %v4887 = vrot.slane %v4885, 5
      %v4888 = vor.u32 %v4884, %v4887
      %v4889 = vrot.slane %v4888, 4
      %v4891 = vshll.u32 %v415, 16
      %v4893 = vrot.slane %v4891, 5
      %v4894 = vsel %vm4832, %v4889, %v4893
      %v4895 = vshrl.u32 %v415, 16
      %v4897 = vrot.slane %v4895, 4
      %v4898 = vor.u32 %v4897, %v4893
      %v4899 = vrot.slane %v4898, 4
      %v4901 = vshll.u32 %v416, 16
      %v4903 = vrot.slane %v4901, 5
      %v4904 = vsel %vm4832, %v4899, %v4903
      %v4906 = vshrl.u32 %v417, 16
      %v4908 = vrot.slane %v4906, 4
      %v4909 = vshll.u32 %v417, 16
      %v4911 = vrot.slane %v4909, 5
      %v4912 = vor.u32 %v4908, %v4911
      %v4913 = vrot.slane %v4912, 4
      %v4915 = vshll.u32 %v418, 16
      %v4917 = vrot.slane %v4915, 5
      %v4918 = vsel %vm4832, %v4913, %v4917
      %v4919 = vshrl.u32 %v418, 16
      %v4921 = vrot.slane %v4919, 4
      %v4922 = vor.u32 %v4921, %v4917
      %v4923 = vrot.slane %v4922, 4
      %v4925 = vshll.u32 %v419, 16
      %v4927 = vrot.slane %v4925, 5
      %v4928 = vsel %vm4832, %v4923, %v4927
      %v4930 = vshrl.u32 %v420, 16
      %v4932 = vrot.slane %v4930, 4
      %v4933 = vshll.u32 %v420, 16
      %v4935 = vrot.slane %v4933, 5
      %v4936 = vor.u32 %v4932, %v4935
      %v4937 = vrot.slane %v4936, 4
      %v4939 = vshll.u32 %v421, 16
      %v4941 = vrot.slane %v4939, 5
      %v4942 = vsel %vm4832, %v4937, %v4941
      %v4943 = vshrl.u32 %v421, 16
      %v4945 = vrot.slane %v4943, 4
      %v4946 = vor.u32 %v4945, %v4941
      %v4947 = vrot.slane %v4946, 4
      %v4949 = vshll.u32 %v422, 16
      %v4951 = vrot.slane %v4949, 5
      %v4952 = vsel %vm4832, %v4947, %v4951
      %v4954 = vshrl.u32 %v423, 16
      %v4956 = vrot.slane %v4954, 4
      %v4957 = vshll.u32 %v423, 16
      %v4959 = vrot.slane %v4957, 5
      %v4960 = vor.u32 %v4956, %v4959
      %v4961 = vrot.slane %v4960, 4
      %v4963 = vshll.u32 %v424, 16
      %v4965 = vrot.slane %v4963, 5
      %v4966 = vsel %vm4832, %v4961, %v4965
      %v4967 = vshrl.u32 %v424, 16
      %v4969 = vrot.slane %v4967, 4
      %v4970 = vor.u32 %v4969, %v4965
      %v4971 = vrot.slane %v4970, 4
      %v4973 = vshll.u32 %v425, 16
      %v4975 = vrot.slane %v4973, 5
      %v4976 = vsel %vm4832, %v4971, %v4975
      %v4978 = vshrl.u32 %v426, 16
      %v4980 = vrot.slane %v4978, 4
      %v4981 = vshll.u32 %v426, 16
      %v4983 = vrot.slane %v4981, 5
      %v4984 = vor.u32 %v4980, %v4983
      %v4985 = vrot.slane %v4984, 4
      %v4987 = vshll.u32 %v427, 16
      %v4989 = vrot.slane %v4987, 5
      %v4990 = vsel %vm4832, %v4985, %v4989
      %v4991 = vshrl.u32 %v427, 16
      %v4993 = vrot.slane %v4991, 4
      %v4994 = vor.u32 %v4993, %v4989
      %v4995 = vrot.slane %v4994, 4
      %v4997 = vshll.u32 %v428, 16
      %v4999 = vrot.slane %v4997, 5
      %v5000 = vsel %vm4832, %v4995, %v4999
      %v5002 = vshrl.u32 %v429, 16
      %v5004 = vrot.slane %v5002, 4
      %v5005 = vshll.u32 %v429, 16
      %v5007 = vrot.slane %v5005, 5
      %v5008 = vor.u32 %v5004, %v5007
      %v5009 = vrot.slane %v5008, 4
      %v5011 = vshll.u32 %v430, 16
      %v5013 = vrot.slane %v5011, 5
      %v5014 = vsel %vm4832, %v5009, %v5013
      %v5015 = vshrl.u32 %v430, 16
      %v5017 = vrot.slane %v5015, 4
      %v5018 = vor.u32 %v5017, %v5013
      %v5019 = vrot.slane %v5018, 4
      %v5021 = vshll.u32 %v431, 16
      %v5023 = vrot.slane %v5021, 5
      %v5024 = vsel %vm4832, %v5019, %v5023
      %v5026 = vshrl.u32 %v432, 16
      %v5028 = vrot.slane %v5026, 4
      %v5029 = vshll.u32 %v432, 16
      %v5031 = vrot.slane %v5029, 5
      %v5032 = vor.u32 %v5028, %v5031
      %v5033 = vrot.slane %v5032, 4
      %v5035 = vshll.u32 %v433, 16
      %v5037 = vrot.slane %v5035, 5
      %v5038 = vsel %vm4832, %v5033, %v5037
      %v5039 = vshrl.u32 %v433, 16
      %v5041 = vrot.slane %v5039, 4
      %v5042 = vor.u32 %v5041, %v5037
      %v5043 = vrot.slane %v5042, 4
      %v5045 = vshll.u32 %v434, 16
      %v5047 = vrot.slane %v5045, 5
      %v5048 = vsel %vm4832, %v5043, %v5047
      %v5050 = vshrl.u32 %v435, 16
      %v5052 = vrot.slane %v5050, 4
      %v5053 = vshll.u32 %v435, 16
      %v5055 = vrot.slane %v5053, 5
      %v5056 = vor.u32 %v5052, %v5055
      %v5057 = vrot.slane %v5056, 4
      %v5059 = vshll.u32 %v436, 16
      %v5061 = vrot.slane %v5059, 5
      %v5062 = vsel %vm4832, %v5057, %v5061
      %v5063 = vshrl.u32 %v436, 16
      %v5065 = vrot.slane %v5063, 4
      %v5066 = vor.u32 %v5065, %v5061
      %v5067 = vrot.slane %v5066, 4
      %v5069 = vshll.u32 %v437, 16
      %v5071 = vrot.slane %v5069, 5
      %v5072 = vsel %vm4832, %v5067, %v5071
      %v5074 = vshrl.u32 %v438, 16
      %v5076 = vrot.slane %v5074, 4
      %v5077 = vshll.u32 %v438, 16
      %v5079 = vrot.slane %v5077, 5
      %v5080 = vor.u32 %v5076, %v5079
      %v5081 = vrot.slane %v5080, 4
      %v5083 = vshll.u32 %v439, 16
      %v5085 = vrot.slane %v5083, 5
      %v5086 = vsel %vm4832, %v5081, %v5085
      %v5087 = vshrl.u32 %v439, 16
      %v5089 = vrot.slane %v5087, 4
      %v5090 = vor.u32 %v5089, %v5085
      %v5091 = vrot.slane %v5090, 4
      %v5093 = vshll.u32 %v440, 16
      %v5095 = vrot.slane %v5093, 5
      %v5096 = vsel %vm4832, %v5091, %v5095
      %v5098 = vshrl.u32 %v441, 16
      %v5100 = vrot.slane %v5098, 4
      %v5101 = vshll.u32 %v441, 16
      %v5103 = vrot.slane %v5101, 5
      %v5104 = vor.u32 %v5100, %v5103
      %v5105 = vrot.slane %v5104, 4
      %v5107 = vshll.u32 %v442, 16
      %v5109 = vrot.slane %v5107, 5
      %v5110 = vsel %vm4832, %v5105, %v5109
      %v5111 = vshrl.u32 %v442, 16
      %v5113 = vrot.slane %v5111, 4
      %v5114 = vor.u32 %v5113, %v5109
      %v5115 = vrot.slane %v5114, 4
      %v5117 = vshll.u32 %v443, 16
      %v5119 = vrot.slane %v5117, 5
      %v5120 = vsel %vm4832, %v5115, %v5119
      %v5122 = vshrl.u32 %v444, 16
      %v5124 = vrot.slane %v5122, 4
      %v5125 = vshll.u32 %v444, 16
      %v5127 = vrot.slane %v5125, 5
      %v5128 = vor.u32 %v5124, %v5127
      %v5129 = vrot.slane %v5128, 4
      %v5131 = vshll.u32 %v445, 16
      %v5133 = vrot.slane %v5131, 5
      %v5134 = vsel %vm4832, %v5129, %v5133
      %v5135 = vshrl.u32 %v445, 16
      %v5137 = vrot.slane %v5135, 4
      %v5138 = vor.u32 %v5137, %v5133
      %v5139 = vrot.slane %v5138, 4
      %v5141 = vshll.u32 %v446, 16
      %v5143 = vrot.slane %v5141, 5
      %v5144 = vsel %vm4832, %v5139, %v5143
      %v5146 = vshrl.u32 %v447, 16
      %v5148 = vrot.slane %v5146, 4
      %v5149 = vshll.u32 %v447, 16
      %v5151 = vrot.slane %v5149, 5
      %v5152 = vor.u32 %v5148, %v5151
      %v5153 = vrot.slane %v5152, 4
      %v5155 = vshll.u32 %v448, 16
      %v5157 = vrot.slane %v5155, 5
      %v5158 = vsel %vm4832, %v5153, %v5157
      %v5159 = vshrl.u32 %v448, 16
      %v5161 = vrot.slane %v5159, 4
      %v5162 = vor.u32 %v5161, %v5157
      %v5163 = vrot.slane %v5162, 4
      %v5165 = vshll.u32 %v449, 16
      %v5167 = vrot.slane %v5165, 5
      %v5168 = vsel %vm4832, %v5163, %v5167
      %v5170 = vshrl.u32 %v450, 16
      %v5172 = vrot.slane %v5170, 4
      %v5173 = vshll.u32 %v450, 16
      %v5175 = vrot.slane %v5173, 5
      %v5176 = vor.u32 %v5172, %v5175
      %v5177 = vrot.slane %v5176, 4
      %v5179 = vshll.u32 %v451, 16
      %v5181 = vrot.slane %v5179, 5
      %v5182 = vsel %vm4832, %v5177, %v5181
      %v5183 = vshrl.u32 %v451, 16
      %v5185 = vrot.slane %v5183, 4
      %v5186 = vor.u32 %v5185, %v5181
      %v5187 = vrot.slane %v5186, 4
      %v5189 = vshll.u32 %v452, 16
      %v5191 = vrot.slane %v5189, 5
      %v5192 = vsel %vm4832, %v5187, %v5191
      %v5194 = vshrl.u32 %v453, 16
      %v5196 = vrot.slane %v5194, 4
      %v5197 = vshll.u32 %v453, 16
      %v5199 = vrot.slane %v5197, 5
      %v5200 = vor.u32 %v5196, %v5199
      %v5201 = vrot.slane %v5200, 4
      %v5203 = vshll.u32 %v454, 16
      %v5205 = vrot.slane %v5203, 5
      %v5206 = vsel %vm4832, %v5201, %v5205
      %v5207 = vshrl.u32 %v454, 16
      %v5209 = vrot.slane %v5207, 4
      %v5210 = vor.u32 %v5209, %v5205
      %v5211 = vrot.slane %v5210, 4
      %v5213 = vshll.u32 %v455, 16
      %v5215 = vrot.slane %v5213, 5
      %v5216 = vsel %vm4832, %v5211, %v5215
      %v5217 = vld [vmem:[%s4] sm:$0xf]
      %v5218 = vld [vmem:[%s4 + $0x4] sm:$0xf]
      %v5219 = vld [vmem:[%s4 + $0x8] sm:$0xf]
      %v5220 = vld [vmem:[%s4 + $0xc] sm:$0xf]
      %v5221 = vld [vmem:[%s4 + $0x10] sm:$0xf]
      %v5222 = vld [vmem:[%s4 + $0x14] sm:$0xf]
      %v5223 = vld [vmem:[%s4 + $0x18] sm:$0xf]
      %v5224 = vld [vmem:[%s4 + $0x1c] sm:$0xf]
      %v5225 = vld [vmem:[%s4 + $0x20] sm:$0xf]
      %v5226 = vld [vmem:[%s4 + $0x24] sm:$0xf]
      %v5227 = vld [vmem:[%s4 + $0x28] sm:$0xf]
      %v5228 = vld [vmem:[%s4 + $0x2c] sm:$0xf]
      %v5229 = vld [vmem:[%s4 + $0x30] sm:$0xf]
      %v5230 = vld [vmem:[%s4 + $0x34] sm:$0xf]
      %v5231 = vld [vmem:[%s4 + $0x38] sm:$0xf]
      %v5232 = vld [vmem:[%s4 + $0x3c] sm:$0xf]
      %v5233 = vunpack.c.l.b16 %v4846
      %v5234 = vunpack.c.l.b16 %v4856
      %v5235 = vunpack.c.l.b16 %v4870
      %v5236 = vunpack.c.l.b16 %v4880
      %v5237 = vunpack.c.l.b16 %v4894
      %v5238 = vunpack.c.l.b16 %v4904
      %v5239 = vunpack.c.l.b16 %v4918
      %v5240 = vunpack.c.l.b16 %v4928
      %v5241 = vunpack.c.l.b16 %v4942
      %v5242 = vunpack.c.l.b16 %v4952
      %v5243 = vunpack.c.l.b16 %v4966
      %v5244 = vunpack.c.l.b16 %v4976
      %v5245 = vunpack.c.l.b16 %v4990
      %v5246 = vunpack.c.l.b16 %v5000
      %v5247 = vunpack.c.l.b16 %v5014
      %v5248 = vunpack.c.l.b16 %v5024
      %v5249 = vunpack.c.l.b16 %v5038
      %v5250 = vunpack.c.l.b16 %v5048
      %v5251 = vunpack.c.l.b16 %v5062
      %v5252 = vunpack.c.l.b16 %v5072
      %v5253 = vunpack.c.l.b16 %v5086
      %v5254 = vunpack.c.l.b16 %v5096
      %v5255 = vunpack.c.l.b16 %v5110
      %v5256 = vunpack.c.l.b16 %v5120
      %v5257 = vunpack.c.l.b16 %v5134
      %v5258 = vunpack.c.l.b16 %v5144
      %v5259 = vunpack.c.l.b16 %v5158
      %v5260 = vunpack.c.l.b16 %v5168
      %v5261 = vunpack.c.l.b16 %v5182
      %v5262 = vunpack.c.l.b16 %v5192
      %v5263 = vunpack.c.l.b16 %v5206
      %v5264 = vunpack.c.l.b16 %v5216
      %v5265 = vpack.c.b16 %v5234, %v5233
      %v5266 = vpack.c.b16 %v5236, %v5235
      %v5267 = vpack.c.b16 %v5238, %v5237
      %v5268 = vpack.c.b16 %v5240, %v5239
      %v5269 = vpack.c.b16 %v5242, %v5241
      %v5270 = vpack.c.b16 %v5244, %v5243
      %v5271 = vpack.c.b16 %v5246, %v5245
      %v5272 = vpack.c.b16 %v5248, %v5247
      %v5273 = vpack.c.b16 %v5250, %v5249
      %v5274 = vpack.c.b16 %v5252, %v5251
      %v5275 = vpack.c.b16 %v5254, %v5253
      %v5276 = vpack.c.b16 %v5256, %v5255
      %v5277 = vpack.c.b16 %v5258, %v5257
      %v5278 = vpack.c.b16 %v5260, %v5259
      %v5279 = vpack.c.b16 %v5262, %v5261
      %v5280 = vpack.c.b16 %v5264, %v5263
      %v5313 = vunpack.c.l.b16 %v5217
      %v5314 = vunpack.c.l.b16 %v5218
      %v5315 = vunpack.c.l.b16 %v5219
      %v5316 = vunpack.c.l.b16 %v5220
      %v5317 = vunpack.c.l.b16 %v5221
      %v5318 = vunpack.c.l.b16 %v5222
      %v5319 = vunpack.c.l.b16 %v5223
      %v5320 = vunpack.c.l.b16 %v5224
      %v5321 = vunpack.c.l.b16 %v5225
      %v5322 = vunpack.c.l.b16 %v5226
      %v5323 = vunpack.c.l.b16 %v5227
      %v5324 = vunpack.c.l.b16 %v5228
      %v5325 = vunpack.c.l.b16 %v5229
      %v5326 = vunpack.c.l.b16 %v5230
      %v5327 = vunpack.c.l.b16 %v5231
      %v5328 = vunpack.c.l.b16 %v5232
      %v5329 = vpack.c.b16 %v5314, %v5313
      %v5330 = vpack.c.b16 %v5316, %v5315
      %v5331 = vpack.c.b16 %v5318, %v5317
      %v5332 = vpack.c.b16 %v5320, %v5319
      %v5333 = vpack.c.b16 %v5322, %v5321
      %v5334 = vpack.c.b16 %v5324, %v5323
      %v5335 = vpack.c.b16 %v5326, %v5325
      %v5336 = vpack.c.b16 %v5328, %v5327
      %5345 = vmatprep.subr.bf16.mxu0 0
      %5346 = vmatpush1.bf16.msra.mxu0 %v5336
      %5347 = vmatprep.subr.bf16.mxu0 0
      %5348 = vmatpush1.bf16.msra.mxu0 %v5335
      %5349 = vmatprep.subr.bf16.mxu0 0
      %5350 = vmatpush1.bf16.msra.mxu0 %v5334
      %5351 = vmatprep.subr.bf16.mxu0 0
      %5352 = vmatpush1.bf16.msra.mxu0 %v5333
      %5353 = vmatprep.subr.bf16.mxu0 0
      %5354 = vmatpush1.bf16.msra.mxu0 %v5332
      %5355 = vmatprep.subr.bf16.mxu0 0
      %5356 = vmatpush1.bf16.msra.mxu0 %v5331
      %5357 = vmatprep.subr.bf16.mxu0 0
      %5358 = vmatpush1.bf16.msra.mxu0 %v5330
      %5359 = vmatprep.subr.bf16.mxu0 0
      %5360 = vmatpush1.bf16.msra.mxu0 %v5329
      %5361 = vmatprep.subr.bf16.mxu0 0
      %5362 = vmatpush2.bf16.msra.mxu0 0
      %5363 = vmatprep.subr.bf16.mxu0 0
      %5364 = vmatpush2.bf16.msra.mxu0 0
      %5365 = vmatprep.subr.bf16.mxu0 0
      %5366 = vmatpush2.bf16.msra.mxu0 0
      %5367 = vmatprep.subr.bf16.mxu0 0
      %5368 = vmatpush2.bf16.msra.mxu0 0
      %5369 = vmatprep.subr.bf16.mxu0 0
      %5370 = vmatpush2.bf16.msra.mxu0 0
      %5371 = vmatprep.subr.bf16.mxu0 0
      %5372 = vmatpush2.bf16.msra.mxu0 0
      %5373 = vmatprep.subr.bf16.mxu0 0
      %5374 = vmatpush2.bf16.msra.mxu0 0
      %5375 = vmatprep.subr.bf16.mxu0 0
      %5376 = vmatpush2.bf16.msra.mxu0 0
      %5377 = vmatprep.mubr.bf16.mxu0 0
      %5378 = vmatmul.mubr.bf16.gmra.mxu0 %v5265
      %v5379 = vpop.f32.mrf.mxu0
      %v5380 = vadd.f32 0.0, %v5379
      %v5381 = vpop.f32.mrf.mxu0
      %v5382 = vpop.f32.mrf.mxu0
      %v5383 = vadd.f32 0.0, %v5382
      %v5384 = vpop.f32.mrf.mxu0
      %5385 = vmatprep.mubr.bf16.mxu0 0
      %5386 = vmatmul.mubr.bf16.gmra.mxu0 %v5266
      %v5387 = vpop.f32.mrf.mxu0
      %v5388 = vadd.f32 0.0, %v5387
      %v5389 = vpop.f32.mrf.mxu0
      %v5390 = vpop.f32.mrf.mxu0
      %v5391 = vadd.f32 0.0, %v5390
      %v5392 = vpop.f32.mrf.mxu0
      %5393 = vmatprep.mubr.bf16.mxu0 0
      %5394 = vmatmul.mubr.bf16.gmra.mxu0 %v5267
      %v5395 = vpop.f32.mrf.mxu0
      %v5396 = vadd.f32 0.0, %v5395
      %v5397 = vpop.f32.mrf.mxu0
      %v5398 = vpop.f32.mrf.mxu0
      %v5399 = vadd.f32 0.0, %v5398
      %v5400 = vpop.f32.mrf.mxu0
      %5401 = vmatprep.mubr.bf16.mxu0 0
      %5402 = vmatmul.mubr.bf16.gmra.mxu0 %v5268
      %v5403 = vpop.f32.mrf.mxu0
      %v5404 = vadd.f32 0.0, %v5403
      %v5405 = vpop.f32.mrf.mxu0
      %v5406 = vpop.f32.mrf.mxu0
      %v5407 = vadd.f32 0.0, %v5406
      %v5408 = vpop.f32.mrf.mxu0
      %5409 = vmatprep.mubr.bf16.mxu0 0
      %5410 = vmatmul.mubr.bf16.gmra.mxu0 %v5269
      %v5411 = vpop.f32.mrf.mxu0
      %v5412 = vadd.f32 0.0, %v5411
      %v5413 = vpop.f32.mrf.mxu0
      %v5414 = vpop.f32.mrf.mxu0
      %v5415 = vadd.f32 0.0, %v5414
      %v5416 = vpop.f32.mrf.mxu0
      %5417 = vmatprep.mubr.bf16.mxu0 0
      %5418 = vmatmul.mubr.bf16.gmra.mxu0 %v5270
      %v5419 = vpop.f32.mrf.mxu0
      %v5420 = vadd.f32 0.0, %v5419
      %v5421 = vpop.f32.mrf.mxu0
      %v5422 = vpop.f32.mrf.mxu0
      %v5423 = vadd.f32 0.0, %v5422
      %v5424 = vpop.f32.mrf.mxu0
      %5425 = vmatprep.mubr.bf16.mxu0 0
      %5426 = vmatmul.mubr.bf16.gmra.mxu0 %v5271
      %v5427 = vpop.f32.mrf.mxu0
      %v5428 = vadd.f32 0.0, %v5427
      %v5429 = vpop.f32.mrf.mxu0
      %v5430 = vpop.f32.mrf.mxu0
      %v5431 = vadd.f32 0.0, %v5430
      %v5432 = vpop.f32.mrf.mxu0
      %5433 = vmatprep.mubr.bf16.mxu0 0
      %5434 = vmatmul.mubr.bf16.gmra.mxu0 %v5272
      %v5435 = vpop.f32.mrf.mxu0
      %v5436 = vadd.f32 0.0, %v5435
      %v5437 = vpop.f32.mrf.mxu0
      %v5438 = vpop.f32.mrf.mxu0
      %v5439 = vadd.f32 0.0, %v5438
      %v5440 = vpop.f32.mrf.mxu0
      %5441 = vmatprep.mubr.bf16.mxu0 0
      %5442 = vmatmul.mubr.bf16.gmra.mxu0 %v5273
      %v5443 = vpop.f32.mrf.mxu0
      %v5444 = vadd.f32 0.0, %v5443
      %v5445 = vpop.f32.mrf.mxu0
      %v5446 = vpop.f32.mrf.mxu0
      %v5447 = vadd.f32 0.0, %v5446
      %v5448 = vpop.f32.mrf.mxu0
      %5449 = vmatprep.mubr.bf16.mxu0 0
      %5450 = vmatmul.mubr.bf16.gmra.mxu0 %v5274
      %v5451 = vpop.f32.mrf.mxu0
      %v5452 = vadd.f32 0.0, %v5451
      %v5453 = vpop.f32.mrf.mxu0
      %v5454 = vpop.f32.mrf.mxu0
      %v5455 = vadd.f32 0.0, %v5454
      %v5456 = vpop.f32.mrf.mxu0
      %5457 = vmatprep.mubr.bf16.mxu0 0
      %5458 = vmatmul.mubr.bf16.gmra.mxu0 %v5275
      %v5459 = vpop.f32.mrf.mxu0
      %v5460 = vadd.f32 0.0, %v5459
      %v5461 = vpop.f32.mrf.mxu0
      %v5462 = vpop.f32.mrf.mxu0
      %v5463 = vadd.f32 0.0, %v5462
      %v5464 = vpop.f32.mrf.mxu0
      %5465 = vmatprep.mubr.bf16.mxu0 0
      %5466 = vmatmul.mubr.bf16.gmra.mxu0 %v5276
      %v5467 = vpop.f32.mrf.mxu0
      %v5468 = vadd.f32 0.0, %v5467
      %v5469 = vpop.f32.mrf.mxu0
      %v5470 = vpop.f32.mrf.mxu0
      %v5471 = vadd.f32 0.0, %v5470
      %v5472 = vpop.f32.mrf.mxu0
      %5473 = vmatprep.mubr.bf16.mxu0 0
      %5474 = vmatmul.mubr.bf16.gmra.mxu0 %v5277
      %v5475 = vpop.f32.mrf.mxu0
      %v5476 = vadd.f32 0.0, %v5475
      %v5477 = vpop.f32.mrf.mxu0
      %v5478 = vpop.f32.mrf.mxu0
      %v5479 = vadd.f32 0.0, %v5478
      %v5480 = vpop.f32.mrf.mxu0
      %5481 = vmatprep.mubr.bf16.mxu0 0
      %5482 = vmatmul.mubr.bf16.gmra.mxu0 %v5278
      %v5483 = vpop.f32.mrf.mxu0
      %v5484 = vadd.f32 0.0, %v5483
      %v5485 = vpop.f32.mrf.mxu0
      %v5486 = vpop.f32.mrf.mxu0
      %v5487 = vadd.f32 0.0, %v5486
      %v5488 = vpop.f32.mrf.mxu0
      %5489 = vmatprep.mubr.bf16.mxu0 0
      %5490 = vmatmul.mubr.bf16.gmra.mxu0 %v5279
      %v5491 = vpop.f32.mrf.mxu0
      %v5492 = vadd.f32 0.0, %v5491
      %v5493 = vpop.f32.mrf.mxu0
      %v5494 = vpop.f32.mrf.mxu0
      %v5495 = vadd.f32 0.0, %v5494
      %v5496 = vpop.f32.mrf.mxu0
      %5497 = vmatprep.mubr.bf16.mxu0 0
      %5498 = vmatmul.mubr.bf16.gmra.mxu0 %v5280
      %v5499 = vpop.f32.mrf.mxu0
      %v5500 = vadd.f32 0.0, %v5499
      %v5501 = vpop.f32.mrf.mxu0
      %v5502 = vpop.f32.mrf.mxu0
      %v5503 = vadd.f32 0.0, %v5502
      %v5504 = vpop.f32.mrf.mxu0
      %5505 = vdwg.mxu0
      %v5506 = vadd.f32 %v4798, %v5380
      %v5507 = vadd.f32 %v4799, %v5383
      %v5508 = vadd.f32 %v4800, %v5388
      %v5509 = vadd.f32 %v4801, %v5391
      %v5510 = vadd.f32 %v4802, %v5396
      %v5511 = vadd.f32 %v4803, %v5399
      %v5512 = vadd.f32 %v4804, %v5404
      %v5513 = vadd.f32 %v4805, %v5407
      %v5514 = vadd.f32 %v4806, %v5412
      %v5515 = vadd.f32 %v4807, %v5415
      %v5516 = vadd.f32 %v4808, %v5420
      %v5517 = vadd.f32 %v4809, %v5423
      %v5518 = vadd.f32 %v4810, %v5428
      %v5519 = vadd.f32 %v4811, %v5431
      %v5520 = vadd.f32 %v4812, %v5436
      %v5521 = vadd.f32 %v4813, %v5439
      %v5522 = vadd.f32 %v4814, %v5444
      %v5523 = vadd.f32 %v4815, %v5447
      %v5524 = vadd.f32 %v4816, %v5452
      %v5525 = vadd.f32 %v4817, %v5455
      %v5526 = vadd.f32 %v4818, %v5460
      %v5527 = vadd.f32 %v4819, %v5463
      %v5528 = vadd.f32 %v4820, %v5468
      %v5529 = vadd.f32 %v4821, %v5471
      %v5530 = vadd.f32 %v4822, %v5476
      %v5531 = vadd.f32 %v4823, %v5479
      %v5532 = vadd.f32 %v4824, %v5484
      %v5533 = vadd.f32 %v4825, %v5487
      %v5534 = vadd.f32 %v4826, %v5492
      %v5535 = vadd.f32 %v4827, %v5495
      %v5536 = vadd.f32 %v4828, %v5500
      %v5537 = vadd.f32 %v4829, %v5503
      %v5538 = vld [vmem:[%s6] sm:$0x1]
      %v5540 = vlaneseq
      %v5541 = vshrl.u32 %v5540, 7
      %v5542 = vsub.s32 0, %v5541
      %v5543 = vrot.slane %v5538, %v5542
      %v5545 = vadd.f32 %v5506, %v5543
      %v5546 = vadd.f32 %v5507, %v5543
      %v5547 = vadd.f32 %v5508, %v5543
      %v5548 = vadd.f32 %v5509, %v5543
      %v5549 = vadd.f32 %v5510, %v5543
      %v5550 = vadd.f32 %v5511, %v5543
      %v5551 = vadd.f32 %v5512, %v5543
      %v5552 = vadd.f32 %v5513, %v5543
      %v5553 = vadd.f32 %v5514, %v5543
      %v5554 = vadd.f32 %v5515, %v5543
      %v5555 = vadd.f32 %v5516, %v5543
      %v5556 = vadd.f32 %v5517, %v5543
      %v5557 = vadd.f32 %v5518, %v5543
      %v5558 = vadd.f32 %v5519, %v5543
      %v5559 = vadd.f32 %v5520, %v5543
      %v5560 = vadd.f32 %v5521, %v5543
      %v5561 = vadd.f32 %v5522, %v5543
      %v5562 = vadd.f32 %v5523, %v5543
      %v5563 = vadd.f32 %v5524, %v5543
      %v5564 = vadd.f32 %v5525, %v5543
      %v5565 = vadd.f32 %v5526, %v5543
      %v5566 = vadd.f32 %v5527, %v5543
      %v5567 = vadd.f32 %v5528, %v5543
      %v5568 = vadd.f32 %v5529, %v5543
      %v5569 = vadd.f32 %v5530, %v5543
      %v5570 = vadd.f32 %v5531, %v5543
      %v5571 = vadd.f32 %v5532, %v5543
      %v5572 = vadd.f32 %v5533, %v5543
      %v5573 = vadd.f32 %v5534, %v5543
      %v5574 = vadd.f32 %v5535, %v5543
      %v5575 = vadd.f32 %v5536, %v5543
      %v5576 = vadd.f32 %v5537, %v5543
      %v5577 = vmax.f32 %v5545, 0.0
      %v5578 = vmax.f32 %v5546, 0.0
      %v5579 = vmax.f32 %v5547, 0.0
      %v5580 = vmax.f32 %v5548, 0.0
      %v5581 = vmax.f32 %v5549, 0.0
      %v5582 = vmax.f32 %v5550, 0.0
      %v5583 = vmax.f32 %v5551, 0.0
      %v5584 = vmax.f32 %v5552, 0.0
      %v5585 = vmax.f32 %v5553, 0.0
      %v5586 = vmax.f32 %v5554, 0.0
      %v5587 = vmax.f32 %v5555, 0.0
      %v5588 = vmax.f32 %v5556, 0.0
      %v5589 = vmax.f32 %v5557, 0.0
      %v5590 = vmax.f32 %v5558, 0.0
      %v5591 = vmax.f32 %v5559, 0.0
      %v5592 = vmax.f32 %v5560, 0.0
      %v5593 = vmax.f32 %v5561, 0.0
      %v5594 = vmax.f32 %v5562, 0.0
      %v5595 = vmax.f32 %v5563, 0.0
      %v5596 = vmax.f32 %v5564, 0.0
      %v5597 = vmax.f32 %v5565, 0.0
      %v5598 = vmax.f32 %v5566, 0.0
      %v5599 = vmax.f32 %v5567, 0.0
      %v5600 = vmax.f32 %v5568, 0.0
      %v5601 = vmax.f32 %v5569, 0.0
      %v5602 = vmax.f32 %v5570, 0.0
      %v5603 = vmax.f32 %v5571, 0.0
      %v5604 = vmax.f32 %v5572, 0.0
      %v5605 = vmax.f32 %v5573, 0.0
      %v5606 = vmax.f32 %v5574, 0.0
      %v5607 = vmax.f32 %v5575, 0.0
      %v5608 = vmax.f32 %v5576, 0.0
      %5609 = vst [vmem:[%s399] sm:$0xff] %v5577
      %5610 = vst [vmem:[%s399 + $0x8] sm:$0xff] %v5578
      %5611 = vst [vmem:[%s399 + $0x10] sm:$0xff] %v5579
      %5612 = vst [vmem:[%s399 + $0x18] sm:$0xff] %v5580
      %5613 = vst [vmem:[%s399 + $0x20] sm:$0xff] %v5581
      %5614 = vst [vmem:[%s399 + $0x28] sm:$0xff] %v5582
      %5615 = vst [vmem:[%s399 + $0x30] sm:$0xff] %v5583
      %5616 = vst [vmem:[%s399 + $0x38] sm:$0xff] %v5584
      %5617 = vst [vmem:[%s399 + $0x40] sm:$0xff] %v5585
      %5618 = vst [vmem:[%s399 + $0x48] sm:$0xff] %v5586
      %5619 = vst [vmem:[%s399 + $0x50] sm:$0xff] %v5587
      %5620 = vst [vmem:[%s399 + $0x58] sm:$0xff] %v5588
      %5621 = vst [vmem:[%s399 + $0x60] sm:$0xff] %v5589
      %5622 = vst [vmem:[%s399 + $0x68] sm:$0xff] %v5590
      %5623 = vst [vmem:[%s399 + $0x70] sm:$0xff] %v5591
      %5624 = vst [vmem:[%s399 + $0x78] sm:$0xff] %v5592
      %5625 = vst [vmem:[%s399 + $0x80] sm:$0xff] %v5593
      %5626 = vst [vmem:[%s399 + $0x88] sm:$0xff] %v5594
      %5627 = vst [vmem:[%s399 + $0x90] sm:$0xff] %v5595
      %5628 = vst [vmem:[%s399 + $0x98] sm:$0xff] %v5596
      %5629 = vst [vmem:[%s399 + $0xa0] sm:$0xff] %v5597
      %5630 = vst [vmem:[%s399 + $0xa8] sm:$0xff] %v5598
      %5631 = vst [vmem:[%s399 + $0xb0] sm:$0xff] %v5599
      %5632 = vst [vmem:[%s399 + $0xb8] sm:$0xff] %v5600
      %5633 = vst [vmem:[%s399 + $0xc0] sm:$0xff] %v5601
      %5634 = vst [vmem:[%s399 + $0xc8] sm:$0xff] %v5602
      %5635 = vst [vmem:[%s399 + $0xd0] sm:$0xff] %v5603
      %5636 = vst [vmem:[%s399 + $0xd8] sm:$0xff] %v5604
      %5637 = vst [vmem:[%s399 + $0xe0] sm:$0xff] %v5605
      %5638 = vst [vmem:[%s399 + $0xe8] sm:$0xff] %v5606
      %5639 = vst [vmem:[%s399 + $0xf0] sm:$0xff] %v5607
      %5640 = vst [vmem:[%s399 + $0xf8] sm:$0xff] %v5608
      %s5641 = smul.u32 16, %s23
      %p5642 = scmp.lt.s32.totalorder %s22, 1
      %s5643 = scalar_select %p5642, %s22, 1
      %p5644 = scmp.lt.s32.totalorder %s5641, 15
      %s5645 = scalar_select %p5644, %s5641, 15
      %s5646 = smul.addr %s5645, 2
      %s5647 = smul.addr %s5643, 32
      %s5648 = sadd.s32 %s5646, %s5647
      %s5649 = smul.addr %s5648, 8
      %s5650 = scalar_lea.vmem %s7, %s5649
      // Predicated region
      $region53: #{basic_block_pallas.1} parent=47 // pred_check
        %p5651 = pneg %p215
      $region54: #{basic_block_pallas.1} parent=47 // pred_check_branch
        %5653 = sbr.rel (%p5651) target = $region56
      $region55: #{basic_block_pallas.1} parent=47 // pred_region
        %s5654 = smul.u32 16, %s23
      $region56: #{basic_block_pallas.1} parent=47 // pred_fallthru
        _
    $region48: #{basic_block_pallas.1} parent=5 // pred_fallthru
      _
    %p5655 = scmp.le.s32.totalorder 2, %s13
    // Predicated region
    $region57: #{basic_block_pallas.1} parent=5 // pred_check
      %p5656 = pneg %p5655
    $region58: #{basic_block_pallas.1} parent=5 // pred_check_branch
      %5658 = sbr.rel (%p5656) target = $region60
    $region59: #{basic_block_pallas.1} parent=5 // pred_region
      %s5659 = ssub.s32 %s13, 2
      // Predicated region
      $region61: #{basic_block_pallas.1} parent=59 // pred_check
        %p5660 = pneg %p221
      $region62: #{basic_block_pallas.1} parent=59 // pred_check_branch
        %5662 = sbr.rel (%p5660) target = $region64
      $region63: #{basic_block_pallas.1} parent=59 // pred_region
        %s5663 = smul.u32 16, %s25
        %p5664 = scmp.lt.s32.totalorder %s24, 1
        %s5665 = scalar_select %p5664, %s24, 1
        %p5666 = scmp.lt.s32.totalorder %s5663, 15
        %s5667 = scalar_select %p5666, %s5663, 15
        %s5668 = smul.addr %s5667, 2
        %s5669 = smul.addr %s5665, 32
        %s5670 = sadd.s32 %s5668, %s5669
        %s5671 = smul.addr %s5670, 8
        %s5672 = scalar_lea.vmem %s7, %s5671
      $region64: #{basic_block_pallas.1} parent=59 // pred_fallthru
        _
    $region60: #{basic_block_pallas.1} parent=5 // pred_fallthru
      _
  $region6: #{basic_block_pallas.1} parent=0 // loop_footer
    %s17 = sadd.s32 1, %s13
  $region7: #{basic_block_pallas.1} parent=0 // loop_footer_branch
    %12 = sbr.rel target = $region3
  $region8: #{basic_block_pallas.1} parent=0 // loop_exit
    _

</llo_original>
